<compile_context>
chip_gen: v7x
topology: tpu7x:2x2x1
jax: 0.10.0
libtpu: 0.0.40
codegen_flags: <defaults>
</compile_context>

<pallas_src>
import jax
import jax.numpy as jnp
from jax.experimental import pallas as pl
from jax.experimental.pallas import tpu as pltpu

EPS = 1e-5
C = 64            # channel width inside the kernel (real channels padded to 64)
KTAPS = 9         # 3x3 conv taps
N_LAYERS = 26     # 1 + 3 + 7*3 + 1 conv layers


def _layer_flags():
    """Per-layer [has_bn, has_relu, block_start, block_end] (int32)."""
    flags = [[0, 1, 0, 0]]            # conv_1[0]: Conv(3->64) + ReLU
    flags += [[1, 1, 0, 0]] * 3       # conv_1[1..3]: Conv + BN + ReLU
    for _ in range(7):                # 7 residual blocks
        flags += [[1, 1, 1, 0],       # conv1 (capture residual)
                  [1, 1, 0, 0],       # conv2
                  [1, 1, 0, 1]]       # conv3 (+residual before relu3)
    flags += [[0, 0, 0, 0]]           # final Conv(64->3)
    assert len(flags) == N_LAYERS
    return flags


# ------------------------------ fused kernel --------------------------------

def _make_kernel(H, W, NHW):
    inv_n = 1.0 / NHW

    def kernel(flags_ref,                       # SMEM (26, 4) int32 (prefetch)
               x_ref, mask_ref, w_ref, b_ref, g_ref, bt_ref,   # inputs
               out_ref,                                         # output
               act_ref, res_ref, col_ref):                      # VMEM scratch
        li = pl.program_id(0)

        @pl.when(li == 0)
        def _init():
            act_ref[...] = x_ref[...]
            res_ref[...] = jnp.zeros(res_ref.shape, res_ref.dtype)

        has_bn = flags_ref[li, 0] == 1
        has_relu = flags_ref[li, 1] == 1
        block_start = flags_ref[li, 2] == 1
        block_end = flags_ref[li, 3] == 1

        @pl.when(block_start)
        def _capture_residual():
            res_ref[...] = act_ref[...]

        # --- im2col in the transposed layout ------------------------------
        # Each 3x3 tap is a lane-roll of the activation along the flattened
        # pixel axis plus a border mask; stores into col_ref are full-lane
        # (NHW-wide), unmasked, at 64-row (16-aligned for bf16) offsets.
        for t in range(KTAPS):
            ky, kx = divmod(t, 3)
            s = (ky - 1) * W + (kx - 1)          # flat source offset
            shift = (-s) % NHW                   # jnp.roll semantics: out[i]=in[i+s]
            tap = act_ref[...]                   # (C, NHW) f32
            if shift:
                tap = pltpu.roll(tap, shift, axis=1)
            tap = tap * mask_ref[t]              # zero out-of-image pixels
            col_ref[t * C:(t + 1) * C, :] = tap.astype(jnp.bfloat16)

        # --- conv as one MXU matmul: (64, 576) @ (576, NHW), bf16 ops ------
        acc = jnp.dot(w_ref[0], col_ref[...],
                      preferred_element_type=jnp.float32)       # (C, NHW) f32
        act_ref[...] = acc + b_ref[0]                           # bias (C,1)

        # --- train-mode BatchNorm (batch stats, two-pass moments) ----------
        a = act_ref[...]
        mean = jnp.sum(a, axis=1, keepdims=True) * inv_n        # (C, 1)
        xc = act_ref[...] - mean
        var = jnp.sum(xc * xc, axis=1, keepdims=True) * inv_n
        scale_bn = g_ref[0] * jax.lax.rsqrt(var + EPS)
        shift_bn = bt_ref[0] - mean * scale_bn
        bnf = has_bn.astype(jnp.float32)                        # exact 0/1 blend
        scale = scale_bn * bnf + (1.0 - bnf)
        shift = shift_bn * bnf

        y = act_ref[...] * scale + shift
        y = y + block_end.astype(jnp.float32) * res_ref[...]    # +residual
        rf = has_relu.astype(jnp.float32)
        act_ref[...] = jnp.maximum(y, 0.0) * rf + y * (1.0 - rf)

        @pl.when(li == N_LAYERS - 1)
        def _final():
            # Model.forward returns x - out; padded channels are 0 on both sides.
            out_ref[...] = x_ref[...] - act_ref[...]

    return kernel


def _fused_forward(xt, masks, w, b, g, bt, flags, *, H, W):
    NHW = xt.shape[1]
    kernel = _make_kernel(H, W, NHW)

    grid_spec = pltpu.PrefetchScalarGridSpec(
        num_scalar_prefetch=1,                       # layer flags -> SMEM
        grid=(N_LAYERS,),
        in_specs=[
            pl.BlockSpec((C, NHW), lambda l, fl: (0, 0)),              # x (resident)
            pl.BlockSpec((KTAPS, 1, NHW), lambda l, fl: (0, 0, 0)),    # border masks
            pl.BlockSpec((1, C, KTAPS * C), lambda l, fl: (l, 0, 0)),  # weights (bf16)
            pl.BlockSpec((1, C, 1), lambda l, fl: (l, 0, 0)),          # bias
            pl.BlockSpec((1, C, 1), lambda l, fl: (l, 0, 0)),          # gamma
            pl.BlockSpec((1, C, 1), lambda l, fl: (l, 0, 0)),          # beta
        ],
        out_specs=pl.BlockSpec((C, NHW), lambda l, fl: (0, 0)),
        scratch_shapes=[
            pltpu.VMEM((C, NHW), jnp.float32),            # activation (persists)
            pltpu.VMEM((C, NHW), jnp.float32),            # residual buffer
            pltpu.VMEM((KTAPS * C, NHW), jnp.bfloat16),   # im2col matrix
        ],
    )

    flops = 2 * N_LAYERS * C * (KTAPS * C) * NHW
    bytes_accessed = (4 * (xt.size + b.size + g.size + bt.size + masks.size
                           + C * NHW) + 2 * w.size)

    return pl.pallas_call(
        kernel,
        out_shape=jax.ShapeDtypeStruct((C, NHW), jnp.float32),
        grid_spec=grid_spec,
        compiler_params=pltpu.CompilerParams(
            dimension_semantics=("arbitrary",),
            vmem_limit_bytes=32 * 1024 * 1024),
        cost_estimate=pl.CostEstimate(
            flops=flops,
            transcendentals=N_LAYERS * C,         # one rsqrt per channel per layer
            bytes_accessed=bytes_accessed),
    )(flags, xt, masks, w, b, g, bt)


# ---------------- parameter initialization (deterministic, synthetic) -------

def _pack_weight(w):
    """(Cout, Cin, 3, 3) PyTorch layout -> (C, 9*C) matmul LHS, zero-padded."""
    cout, cin = w.shape[0], w.shape[1]
    wt = jnp.transpose(w, (0, 2, 3, 1)).reshape(cout, KTAPS, cin)  # (co, tap, ci)
    wt = jnp.pad(wt, ((0, C - cout), (0, 0), (0, C - cin)))
    return wt.reshape(C, KTAPS * C)


def init_params(key):
    keys = jax.random.split(key, 4 * N_LAYERS).reshape(N_LAYERS, 4, 2)
    ws, bs, gs, bts = [], [], [], []
    for li in range(N_LAYERS):
        if li == 0:
            cin, cout = 3, 64
        elif li == N_LAYERS - 1:
            cin, cout = 64, 3
        else:
            cin, cout = 64, 64
        kw, kb, kg, kbt = keys[li]

        w = 0.1 * jax.random.normal(kw, (cout, cin, 3, 3), jnp.float32)
        b = 0.01 * jax.random.normal(kb, (cout,), jnp.float32)
        ws.append(_pack_weight(w))
        bs.append(jnp.pad(b, (0, C - cout)).reshape(C, 1))

        if 1 <= li <= N_LAYERS - 2:                         # layers with BN
            g = 1.0 + 0.1 * jax.random.normal(kg, (cout,), jnp.float32)
            bt = 0.1 * jax.random.normal(kbt, (cout,), jnp.float32)
        else:                                               # unused placeholders
            g = jnp.ones((cout,), jnp.float32)
            bt = jnp.zeros((cout,), jnp.float32)
        gs.append(jnp.pad(g, (0, C - cout)).reshape(C, 1))
        bts.append(jnp.pad(bt, (0, C - cout)).reshape(C, 1))

    return (jnp.stack(ws).astype(jnp.bfloat16),   # (26, 64, 576) bf16 MXU operand
            jnp.stack(bs),                        # (26, 64, 1) f32
            jnp.stack(gs),                        # (26, 64, 1) f32
            jnp.stack(bts))                       # (26, 64, 1) f32


def _border_masks(N, H, W):
    """(9, 1, NHW) f32 masks: 1 where the tap's source pixel is inside the image."""
    i = jnp.arange(N * H * W, dtype=jnp.int32)
    y = (i // W) % H
    x = i % W
    masks = []
    for t in range(KTAPS):
        ky, kx = divmod(t, 3)
        yy = y + (ky - 1)
        xx = x + (kx - 1)
        masks.append((yy >= 0) & (yy < H) & (xx >= 0) & (xx < W))
    return jnp.stack(masks).astype(jnp.float32).reshape(KTAPS, 1, N * H * W)


# ---------------------------- model forward ---------------------------------

@jax.jit
def model_forward(x_nchw, params):
    w, b, g, bt = params
    N, Cin, H, W = x_nchw.shape
    NHW = N * H * W
    # TODO(synk): pad/tile the pixel axis for NHW not a multiple of 128.
    assert NHW % 128 == 0

    flags = jnp.array(_layer_flags(), dtype=jnp.int32)      # (26, 4)
    masks = _border_masks(N, H, W)                           # (9, 1, NHW)

    # NCHW (PyTorch) -> transposed "pixels on lanes" layout: (C, N*H*W),
    # channels zero-padded 3 -> 64.
    x = jnp.pad(x_nchw.astype(jnp.float32),
                ((0, 0), (0, C - Cin), (0, 0), (0, 0)))
    xt = jnp.transpose(x, (1, 0, 2, 3)).reshape(C, NHW)

    out_t = _fused_forward(xt, masks, w, b, g, bt, flags, H=H, W=W)

    y = out_t.reshape(C, N, H, W)[:Cin]
    return jnp.transpose(y, (1, 0, 2, 3))                    # back to NCHW


if __name__ == "__main__":
    key = jax.random.PRNGKey(0)
    kx, kp = jax.random.split(key)

    # small NCHW input consistent with the module: (batch=2, C=3, H=16, W=16)
    x = jax.random.normal(kx, (2, 3, 16, 16), jnp.float32)
    params = init_params(kp)

    y = model_forward(x, params)
    jax.block_until_ready(y)
    assert y.shape == (2, 3, 16, 16)
    print("KERNEL_OK")
</pallas_src>

<mosaic_0001>
module attributes {stable_mosaic.version = 11 : i64} {
  func.func @kernel(%arg0: i32, %arg1: memref<26x4xi32, #tpu.memory_space<smem>>, %arg2: memref<64x512xf32, #tpu.memory_space<vmem>>, %arg3: memref<9x1x512xf32, #tpu.memory_space<vmem>>, %arg4: memref<1x64x576xbf16, #tpu.memory_space<vmem>>, %arg5: memref<1x64x1xf32, #tpu.memory_space<vmem>>, %arg6: memref<1x64x1xf32, #tpu.memory_space<vmem>>, %arg7: memref<1x64x1xf32, #tpu.memory_space<vmem>>, %arg8: memref<64x512xf32, #tpu.memory_space<vmem>>, %arg9: memref<64x512xf32, #tpu.memory_space<vmem>>, %arg10: memref<64x512xf32, #tpu.memory_space<vmem>>, %arg11: memref<576x512xbf16, #tpu.memory_space<vmem>>) attributes {dimension_semantics = [#tpu.dimension_semantics<arbitrary>], iteration_bounds = array<i64: 26>, scalar_prefetch = 1 : i64, scratch_operands = 3 : i64, tpu.core_type = #tpu.core_type<tc>, window_params = [{pipeline_mode = #tpu.pipeline_mode<synchronous>, transform_indices = @transform_0, window_bounds = array<i64: 64, 512>}, {pipeline_mode = #tpu.pipeline_mode<synchronous>, transform_indices = @transform_1, window_bounds = array<i64: 9, 1, 512>}, {transform_indices = @transform_2, window_bounds = array<i64: 1, 64, 576>}, {transform_indices = @transform_3, window_bounds = array<i64: 1, 64, 1>}, {transform_indices = @transform_4, window_bounds = array<i64: 1, 64, 1>}, {transform_indices = @transform_5, window_bounds = array<i64: 1, 64, 1>}, {pipeline_mode = #tpu.pipeline_mode<synchronous>, transform_indices = @transform_6, window_bounds = array<i64: 64, 512>}]} {
    %c0_i32 = arith.constant 0 : i32
    %0 = arith.cmpi eq, %arg0, %c0_i32 : i32
    %1 = arith.extui %0 : i1 to i32
    %c0_i32_0 = arith.constant 0 : i32
    %2 = arith.cmpi ne, %1, %c0_i32_0 : i32
    scf.if %2 {
      %c0_91 = arith.constant 0 : index
      %c0_92 = arith.constant 0 : index
      %154 = vector.load %arg2[%c0_91, %c0_92] : memref<64x512xf32, #tpu.memory_space<vmem>>, vector<64x512xf32>
      %c0_93 = arith.constant 0 : index
      %c0_94 = arith.constant 0 : index
      %155 = vector.load %arg9[%c0_93, %c0_94] : memref<64x512xf32, #tpu.memory_space<vmem>>, vector<64x512xf32>
      tpu.vector_store %arg9[%c0_93, %c0_94], %154 {strides = array<i32>} : memref<64x512xf32, #tpu.memory_space<vmem>>, vector<64x512xf32>,
      %cst_95 = arith.constant 0.000000e+00 : f32
      %156 = vector.broadcast %cst_95 : f32 to vector<64x512xf32>
      %c0_96 = arith.constant 0 : index
      %c0_97 = arith.constant 0 : index
      %157 = vector.load %arg10[%c0_96, %c0_97] : memref<64x512xf32, #tpu.memory_space<vmem>>, vector<64x512xf32>
      tpu.vector_store %arg10[%c0_96, %c0_97], %156 {strides = array<i32>} : memref<64x512xf32, #tpu.memory_space<vmem>>, vector<64x512xf32>,
    } else {
    }
    %3 = arith.index_cast %arg0 : i32 to index
    %c0 = arith.constant 0 : index
    %4 = memref.load %arg1[%3, %c0] : memref<26x4xi32, #tpu.memory_space<smem>>
    %c1_i32 = arith.constant 1 : i32
    %5 = arith.cmpi eq, %4, %c1_i32 : i32
    %6 = arith.index_cast %arg0 : i32 to index
    %c1 = arith.constant 1 : index
    %7 = memref.load %arg1[%6, %c1] : memref<26x4xi32, #tpu.memory_space<smem>>
    %c1_i32_1 = arith.constant 1 : i32
    %8 = arith.cmpi eq, %7, %c1_i32_1 : i32
    %9 = arith.index_cast %arg0 : i32 to index
    %c2 = arith.constant 2 : index
    %10 = memref.load %arg1[%9, %c2] : memref<26x4xi32, #tpu.memory_space<smem>>
    %c1_i32_2 = arith.constant 1 : i32
    %11 = arith.cmpi eq, %10, %c1_i32_2 : i32
    %12 = arith.index_cast %arg0 : i32 to index
    %c3 = arith.constant 3 : index
    %13 = memref.load %arg1[%12, %c3] : memref<26x4xi32, #tpu.memory_space<smem>>
    %c1_i32_3 = arith.constant 1 : i32
    %14 = arith.cmpi eq, %13, %c1_i32_3 : i32
    %15 = arith.extui %11 : i1 to i32
    %c0_i32_4 = arith.constant 0 : i32
    %16 = arith.cmpi ne, %15, %c0_i32_4 : i32
    scf.if %16 {
      %c0_91 = arith.constant 0 : index
      %c0_92 = arith.constant 0 : index
      %154 = vector.load %arg9[%c0_91, %c0_92] : memref<64x512xf32, #tpu.memory_space<vmem>>, vector<64x512xf32>
      %c0_93 = arith.constant 0 : index
      %c0_94 = arith.constant 0 : index
      %155 = vector.load %arg10[%c0_93, %c0_94] : memref<64x512xf32, #tpu.memory_space<vmem>>, vector<64x512xf32>
      tpu.vector_store %arg10[%c0_93, %c0_94], %154 {strides = array<i32>} : memref<64x512xf32, #tpu.memory_space<vmem>>, vector<64x512xf32>,
    } else {
    }
    %c0_5 = arith.constant 0 : index
    %c0_6 = arith.constant 0 : index
    %17 = vector.load %arg9[%c0_5, %c0_6] : memref<64x512xf32, #tpu.memory_space<vmem>>, vector<64x512xf32>
    %c17_i32 = arith.constant 17 : i32
    %18 = tpu.dynamic_rotate %17 by %c17_i32 dim 1 : vector<64x512xf32>, i32 -> vector<64x512xf32>
    %c0_7 = arith.constant 0 : index
    %c0_8 = arith.constant 0 : index
    %c0_9 = arith.constant 0 : index
    %19 = vector.load %arg3[%c0_7, %c0_8, %c0_9] : memref<9x1x512xf32, #tpu.memory_space<vmem>>, vector<1x1x512xf32>
    %20 = vector.shape_cast %19 : vector<1x1x512xf32> to vector<1x512xf32>
    %21 = vector.broadcast %20 : vector<1x512xf32> to vector<64x512xf32>
    %22 = arith.mulf %18, %21 : vector<64x512xf32>
    %23 = arith.truncf %22 : vector<64x512xf32> to vector<64x512xbf16>
    %c0_10 = arith.constant 0 : index
    %c0_11 = arith.constant 0 : index
    %24 = vector.load %arg11[%c0_10, %c0_11] : memref<576x512xbf16, #tpu.memory_space<vmem>>, vector<64x512xbf16>
    tpu.vector_store %arg11[%c0_10, %c0_11], %23 {strides = array<i32>} : memref<576x512xbf16, #tpu.memory_space<vmem>>, vector<64x512xbf16>,
    %c0_12 = arith.constant 0 : index
    %c0_13 = arith.constant 0 : index
    %25 = vector.load %arg9[%c0_12, %c0_13] : memref<64x512xf32, #tpu.memory_space<vmem>>, vector<64x512xf32>
    %c16_i32 = arith.constant 16 : i32
    %26 = tpu.dynamic_rotate %25 by %c16_i32 dim 1 : vector<64x512xf32>, i32 -> vector<64x512xf32>
    %c1_14 = arith.constant 1 : index
    %c0_15 = arith.constant 0 : index
    %c0_16 = arith.constant 0 : index
    %27 = vector.load %arg3[%c1_14, %c0_15, %c0_16] : memref<9x1x512xf32, #tpu.memory_space<vmem>>, vector<1x1x512xf32>
    %28 = vector.shape_cast %27 : vector<1x1x512xf32> to vector<1x512xf32>
    %29 = vector.broadcast %28 : vector<1x512xf32> to vector<64x512xf32>
    %30 = arith.mulf %26, %29 : vector<64x512xf32>
    %31 = arith.truncf %30 : vector<64x512xf32> to vector<64x512xbf16>
    %c64 = arith.constant 64 : index
    %c0_17 = arith.constant 0 : index
    %32 = vector.load %arg11[%c64, %c0_17] : memref<576x512xbf16, #tpu.memory_space<vmem>>, vector<64x512xbf16>
    tpu.vector_store %arg11[%c64, %c0_17], %31 {strides = array<i32>} : memref<576x512xbf16, #tpu.memory_space<vmem>>, vector<64x512xbf16>,
    %c0_18 = arith.constant 0 : index
    %c0_19 = arith.constant 0 : index
    %33 = vector.load %arg9[%c0_18, %c0_19] : memref<64x512xf32, #tpu.memory_space<vmem>>, vector<64x512xf32>
    %c15_i32 = arith.constant 15 : i32
    %34 = tpu.dynamic_rotate %33 by %c15_i32 dim 1 : vector<64x512xf32>, i32 -> vector<64x512xf32>
    %c2_20 = arith.constant 2 : index
    %c0_21 = arith.constant 0 : index
    %c0_22 = arith.constant 0 : index
    %35 = vector.load %arg3[%c2_20, %c0_21, %c0_22] : memref<9x1x512xf32, #tpu.memory_space<vmem>>, vector<1x1x512xf32>
    %36 = vector.shape_cast %35 : vector<1x1x512xf32> to vector<1x512xf32>
    %37 = vector.broadcast %36 : vector<1x512xf32> to vector<64x512xf32>
    %38 = arith.mulf %34, %37 : vector<64x512xf32>
    %39 = arith.truncf %38 : vector<64x512xf32> to vector<64x512xbf16>
    %c128 = arith.constant 128 : index
    %c0_23 = arith.constant 0 : index
    %40 = vector.load %arg11[%c128, %c0_23] : memref<576x512xbf16, #tpu.memory_space<vmem>>, vector<64x512xbf16>
    tpu.vector_store %arg11[%c128, %c0_23], %39 {strides = array<i32>} : memref<576x512xbf16, #tpu.memory_space<vmem>>, vector<64x512xbf16>,
    %c0_24 = arith.constant 0 : index
    %c0_25 = arith.constant 0 : index
    %41 = vector.load %arg9[%c0_24, %c0_25] : memref<64x512xf32, #tpu.memory_space<vmem>>, vector<64x512xf32>
    %c1_i32_26 = arith.constant 1 : i32
    %42 = tpu.dynamic_rotate %41 by %c1_i32_26 dim 1 : vector<64x512xf32>, i32 -> vector<64x512xf32>
    %c3_27 = arith.constant 3 : index
    %c0_28 = arith.constant 0 : index
    %c0_29 = arith.constant 0 : index
    %43 = vector.load %arg3[%c3_27, %c0_28, %c0_29] : memref<9x1x512xf32, #tpu.memory_space<vmem>>, vector<1x1x512xf32>
    %44 = vector.shape_cast %43 : vector<1x1x512xf32> to vector<1x512xf32>
    %45 = vector.broadcast %44 : vector<1x512xf32> to vector<64x512xf32>
    %46 = arith.mulf %42, %45 : vector<64x512xf32>
    %47 = arith.truncf %46 : vector<64x512xf32> to vector<64x512xbf16>
    %c192 = arith.constant 192 : index
    %c0_30 = arith.constant 0 : index
    %48 = vector.load %arg11[%c192, %c0_30] : memref<576x512xbf16, #tpu.memory_space<vmem>>, vector<64x512xbf16>
    tpu.vector_store %arg11[%c192, %c0_30], %47 {strides = array<i32>} : memref<576x512xbf16, #tpu.memory_space<vmem>>, vector<64x512xbf16>,
    %c0_31 = arith.constant 0 : index
    %c0_32 = arith.constant 0 : index
    %49 = vector.load %arg9[%c0_31, %c0_32] : memref<64x512xf32, #tpu.memory_space<vmem>>, vector<64x512xf32>
    %c4 = arith.constant 4 : index
    %c0_33 = arith.constant 0 : index
    %c0_34 = arith.constant 0 : index
    %50 = vector.load %arg3[%c4, %c0_33, %c0_34] : memref<9x1x512xf32, #tpu.memory_space<vmem>>, vector<1x1x512xf32>
    %51 = vector.shape_cast %50 : vector<1x1x512xf32> to vector<1x512xf32>
    %52 = vector.broadcast %51 : vector<1x512xf32> to vector<64x512xf32>
    %53 = arith.mulf %49, %52 : vector<64x512xf32>
    %54 = arith.truncf %53 : vector<64x512xf32> to vector<64x512xbf16>
    %c256 = arith.constant 256 : index
    %c0_35 = arith.constant 0 : index
    %55 = vector.load %arg11[%c256, %c0_35] : memref<576x512xbf16, #tpu.memory_space<vmem>>, vector<64x512xbf16>
    tpu.vector_store %arg11[%c256, %c0_35], %54 {strides = array<i32>} : memref<576x512xbf16, #tpu.memory_space<vmem>>, vector<64x512xbf16>,
    %c0_36 = arith.constant 0 : index
    %c0_37 = arith.constant 0 : index
    %56 = vector.load %arg9[%c0_36, %c0_37] : memref<64x512xf32, #tpu.memory_space<vmem>>, vector<64x512xf32>
    %c511_i32 = arith.constant 511 : i32
    %57 = tpu.dynamic_rotate %56 by %c511_i32 dim 1 : vector<64x512xf32>, i32 -> vector<64x512xf32>
    %c5 = arith.constant 5 : index
    %c0_38 = arith.constant 0 : index
    %c0_39 = arith.constant 0 : index
    %58 = vector.load %arg3[%c5, %c0_38, %c0_39] : memref<9x1x512xf32, #tpu.memory_space<vmem>>, vector<1x1x512xf32>
    %59 = vector.shape_cast %58 : vector<1x1x512xf32> to vector<1x512xf32>
    %60 = vector.broadcast %59 : vector<1x512xf32> to vector<64x512xf32>
    %61 = arith.mulf %57, %60 : vector<64x512xf32>
    %62 = arith.truncf %61 : vector<64x512xf32> to vector<64x512xbf16>
    %c320 = arith.constant 320 : index
    %c0_40 = arith.constant 0 : index
    %63 = vector.load %arg11[%c320, %c0_40] : memref<576x512xbf16, #tpu.memory_space<vmem>>, vector<64x512xbf16>
    tpu.vector_store %arg11[%c320, %c0_40], %62 {strides = array<i32>} : memref<576x512xbf16, #tpu.memory_space<vmem>>, vector<64x512xbf16>,
    %c0_41 = arith.constant 0 : index
    %c0_42 = arith.constant 0 : index
    %64 = vector.load %arg9[%c0_41, %c0_42] : memref<64x512xf32, #tpu.memory_space<vmem>>, vector<64x512xf32>
    %c497_i32 = arith.constant 497 : i32
    %65 = tpu.dynamic_rotate %64 by %c497_i32 dim 1 : vector<64x512xf32>, i32 -> vector<64x512xf32>
    %c6 = arith.constant 6 : index
    %c0_43 = arith.constant 0 : index
    %c0_44 = arith.constant 0 : index
    %66 = vector.load %arg3[%c6, %c0_43, %c0_44] : memref<9x1x512xf32, #tpu.memory_space<vmem>>, vector<1x1x512xf32>
    %67 = vector.shape_cast %66 : vector<1x1x512xf32> to vector<1x512xf32>
    %68 = vector.broadcast %67 : vector<1x512xf32> to vector<64x512xf32>
    %69 = arith.mulf %65, %68 : vector<64x512xf32>
    %70 = arith.truncf %69 : vector<64x512xf32> to vector<64x512xbf16>
    %c384 = arith.constant 384 : index
    %c0_45 = arith.constant 0 : index
    %71 = vector.load %arg11[%c384, %c0_45] : memref<576x512xbf16, #tpu.memory_space<vmem>>, vector<64x512xbf16>
    tpu.vector_store %arg11[%c384, %c0_45], %70 {strides = array<i32>} : memref<576x512xbf16, #tpu.memory_space<vmem>>, vector<64x512xbf16>,
    %c0_46 = arith.constant 0 : index
    %c0_47 = arith.constant 0 : index
    %72 = vector.load %arg9[%c0_46, %c0_47] : memref<64x512xf32, #tpu.memory_space<vmem>>, vector<64x512xf32>
    %c496_i32 = arith.constant 496 : i32
    %73 = tpu.dynamic_rotate %72 by %c496_i32 dim 1 : vector<64x512xf32>, i32 -> vector<64x512xf32>
    %c7 = arith.constant 7 : index
    %c0_48 = arith.constant 0 : index
    %c0_49 = arith.constant 0 : index
    %74 = vector.load %arg3[%c7, %c0_48, %c0_49] : memref<9x1x512xf32, #tpu.memory_space<vmem>>, vector<1x1x512xf32>
    %75 = vector.shape_cast %74 : vector<1x1x512xf32> to vector<1x512xf32>
    %76 = vector.broadcast %75 : vector<1x512xf32> to vector<64x512xf32>
    %77 = arith.mulf %73, %76 : vector<64x512xf32>
    %78 = arith.truncf %77 : vector<64x512xf32> to vector<64x512xbf16>
    %c448 = arith.constant 448 : index
    %c0_50 = arith.constant 0 : index
    %79 = vector.load %arg11[%c448, %c0_50] : memref<576x512xbf16, #tpu.memory_space<vmem>>, vector<64x512xbf16>
    tpu.vector_store %arg11[%c448, %c0_50], %78 {strides = array<i32>} : memref<576x512xbf16, #tpu.memory_space<vmem>>, vector<64x512xbf16>,
    %c0_51 = arith.constant 0 : index
    %c0_52 = arith.constant 0 : index
    %80 = vector.load %arg9[%c0_51, %c0_52] : memref<64x512xf32, #tpu.memory_space<vmem>>, vector<64x512xf32>
    %c495_i32 = arith.constant 495 : i32
    %81 = tpu.dynamic_rotate %80 by %c495_i32 dim 1 : vector<64x512xf32>, i32 -> vector<64x512xf32>
    %c8 = arith.constant 8 : index
    %c0_53 = arith.constant 0 : index
    %c0_54 = arith.constant 0 : index
    %82 = vector.load %arg3[%c8, %c0_53, %c0_54] : memref<9x1x512xf32, #tpu.memory_space<vmem>>, vector<1x1x512xf32>
    %83 = vector.shape_cast %82 : vector<1x1x512xf32> to vector<1x512xf32>
    %84 = vector.broadcast %83 : vector<1x512xf32> to vector<64x512xf32>
    %85 = arith.mulf %81, %84 : vector<64x512xf32>
    %86 = arith.truncf %85 : vector<64x512xf32> to vector<64x512xbf16>
    %c512 = arith.constant 512 : index
    %c0_55 = arith.constant 0 : index
    %87 = vector.load %arg11[%c512, %c0_55] : memref<576x512xbf16, #tpu.memory_space<vmem>>, vector<64x512xbf16>
    tpu.vector_store %arg11[%c512, %c0_55], %86 {strides = array<i32>} : memref<576x512xbf16, #tpu.memory_space<vmem>>, vector<64x512xbf16>,
    %c0_56 = arith.constant 0 : index
    %c0_57 = arith.constant 0 : index
    %c0_58 = arith.constant 0 : index
    %88 = vector.load %arg4[%c0_56, %c0_57, %c0_58] : memref<1x64x576xbf16, #tpu.memory_space<vmem>>, vector<1x64x576xbf16>
    %89 = vector.shape_cast %88 : vector<1x64x576xbf16> to vector<64x576xbf16>
    %c0_59 = arith.constant 0 : index
    %c0_60 = arith.constant 0 : index
    %90 = vector.load %arg11[%c0_59, %c0_60] : memref<576x512xbf16, #tpu.memory_space<vmem>>, vector<576x512xbf16>
    %cst = arith.constant dense<0.000000e+00> : vector<64x512xf32>
    %91 = tpu.matmul %89, %90, %cst {dimension_numbers = #tpu.dot_dimension_numbers<[1], [0], [0], [1], [0, 0, 1, 1], [], []>} : vector<64x576xbf16>, vector<576x512xbf16>, vector<64x512xf32> -> vector<64x512xf32>
    %c0_61 = arith.constant 0 : index
    %c0_62 = arith.constant 0 : index
    %c0_63 = arith.constant 0 : index
    %92 = vector.load %arg5[%c0_61, %c0_62, %c0_63] : memref<1x64x1xf32, #tpu.memory_space<vmem>>, vector<1x64x1xf32>
    %93 = vector.shape_cast %92 : vector<1x64x1xf32> to vector<64x1xf32>
    %94 = vector.broadcast %93 : vector<64x1xf32> to vector<64x512xf32>
    %95 = arith.addf %91, %94 : vector<64x512xf32>
    %c0_64 = arith.constant 0 : index
    %c0_65 = arith.constant 0 : index
    %96 = vector.load %arg9[%c0_64, %c0_65] : memref<64x512xf32, #tpu.memory_space<vmem>>, vector<64x512xf32>
    tpu.vector_store %arg9[%c0_64, %c0_65], %95 {strides = array<i32>} : memref<64x512xf32, #tpu.memory_space<vmem>>, vector<64x512xf32>,
    %c0_66 = arith.constant 0 : index
    %c0_67 = arith.constant 0 : index
    %97 = vector.load %arg9[%c0_66, %c0_67] : memref<64x512xf32, #tpu.memory_space<vmem>>, vector<64x512xf32>
    %cst_68 = arith.constant dense<0.000000e+00> : vector<64xf32>
    %98 = vector.multi_reduction <add>, %97, %cst_68 [1] : vector<64x512xf32> to vector<64xf32>
    %99 = vector.shape_cast %98 : vector<64xf32> to vector<64x1xf32>
    %cst_69 = arith.constant 0.001953125 : f32
    %100 = vector.broadcast %cst_69 : f32 to vector<64x1xf32>
    %101 = arith.mulf %99, %100 : vector<64x1xf32>
    %c0_70 = arith.constant 0 : index
    %c0_71 = arith.constant 0 : index
    %102 = vector.load %arg9[%c0_70, %c0_71] : memref<64x512xf32, #tpu.memory_space<vmem>>, vector<64x512xf32>
    %103 = vector.broadcast %101 : vector<64x1xf32> to vector<64x512xf32>
    %104 = arith.subf %102, %103 : vector<64x512xf32>
    %105 = arith.mulf %104, %104 : vector<64x512xf32>
    %cst_72 = arith.constant dense<0.000000e+00> : vector<64xf32>
    %106 = vector.multi_reduction <add>, %105, %cst_72 [1] : vector<64x512xf32> to vector<64xf32>
    %107 = vector.shape_cast %106 : vector<64xf32> to vector<64x1xf32>
    %cst_73 = arith.constant 0.001953125 : f32
    %108 = vector.broadcast %cst_73 : f32 to vector<64x1xf32>
    %109 = arith.mulf %107, %108 : vector<64x1xf32>
    %c0_74 = arith.constant 0 : index
    %c0_75 = arith.constant 0 : index
    %c0_76 = arith.constant 0 : index
    %110 = vector.load %arg6[%c0_74, %c0_75, %c0_76] : memref<1x64x1xf32, #tpu.memory_space<vmem>>, vector<1x64x1xf32>
    %111 = vector.shape_cast %110 : vector<1x64x1xf32> to vector<64x1xf32>
    %cst_77 = arith.constant 9.99999974E-6 : f32
    %112 = vector.broadcast %cst_77 : f32 to vector<64x1xf32>
    %113 = arith.addf %109, %112 : vector<64x1xf32>
    %114 = math.rsqrt %113 : vector<64x1xf32>
    %115 = arith.mulf %111, %114 : vector<64x1xf32>
    %c0_78 = arith.constant 0 : index
    %c0_79 = arith.constant 0 : index
    %c0_80 = arith.constant 0 : index
    %116 = vector.load %arg7[%c0_78, %c0_79, %c0_80] : memref<1x64x1xf32, #tpu.memory_space<vmem>>, vector<1x64x1xf32>
    %117 = vector.shape_cast %116 : vector<1x64x1xf32> to vector<64x1xf32>
    %118 = arith.mulf %101, %115 : vector<64x1xf32>
    %119 = arith.subf %117, %118 : vector<64x1xf32>
    %120 = arith.extui %5 : i1 to i32
    %121 = arith.sitofp %120 : i32 to f32
    %122 = vector.broadcast %121 : f32 to vector<64x1xf32>
    %123 = arith.mulf %115, %122 : vector<64x1xf32>
    %cst_81 = arith.constant 1.000000e+00 : f32
    %124 = arith.subf %cst_81, %121 : f32
    %125 = vector.broadcast %124 : f32 to vector<64x1xf32>
    %126 = arith.addf %123, %125 : vector<64x1xf32>
    %127 = vector.broadcast %121 : f32 to vector<64x1xf32>
    %128 = arith.mulf %119, %127 : vector<64x1xf32>
    %c0_82 = arith.constant 0 : index
    %c0_83 = arith.constant 0 : index
    %129 = vector.load %arg9[%c0_82, %c0_83] : memref<64x512xf32, #tpu.memory_space<vmem>>, vector<64x512xf32>
    %130 = vector.broadcast %126 : vector<64x1xf32> to vector<64x512xf32>
    %131 = arith.mulf %129, %130 : vector<64x512xf32>
    %132 = vector.broadcast %128 : vector<64x1xf32> to vector<64x512xf32>
    %133 = arith.addf %131, %132 : vector<64x512xf32>
    %134 = arith.extui %14 : i1 to i32
    %135 = arith.sitofp %134 : i32 to f32
    %c0_84 = arith.constant 0 : index
    %c0_85 = arith.constant 0 : index
    %136 = vector.load %arg10[%c0_84, %c0_85] : memref<64x512xf32, #tpu.memory_space<vmem>>, vector<64x512xf32>
    %137 = vector.broadcast %135 : f32 to vector<64x512xf32>
    %138 = arith.mulf %137, %136 : vector<64x512xf32>
    %139 = arith.addf %133, %138 : vector<64x512xf32>
    %140 = arith.extui %8 : i1 to i32
    %141 = arith.sitofp %140 : i32 to f32
    %cst_86 = arith.constant 0.000000e+00 : f32
    %142 = vector.broadcast %cst_86 : f32 to vector<64x512xf32>
    %143 = arith.maximumf %139, %142 : vector<64x512xf32>
    %144 = vector.broadcast %141 : f32 to vector<64x512xf32>
    %145 = arith.mulf %143, %144 : vector<64x512xf32>
    %cst_87 = arith.constant 1.000000e+00 : f32
    %146 = arith.subf %cst_87, %141 : f32
    %147 = vector.broadcast %146 : f32 to vector<64x512xf32>
    %148 = arith.mulf %139, %147 : vector<64x512xf32>
    %149 = arith.addf %145, %148 : vector<64x512xf32>
    %c0_88 = arith.constant 0 : index
    %c0_89 = arith.constant 0 : index
    %150 = vector.load %arg9[%c0_88, %c0_89] : memref<64x512xf32, #tpu.memory_space<vmem>>, vector<64x512xf32>
    tpu.vector_store %arg9[%c0_88, %c0_89], %149 {strides = array<i32>} : memref<64x512xf32, #tpu.memory_space<vmem>>, vector<64x512xf32>,
    %c25_i32 = arith.constant 25 : i32
    %151 = arith.cmpi eq, %arg0, %c25_i32 : i32
    %152 = arith.extui %151 : i1 to i32
    %c0_i32_90 = arith.constant 0 : i32
    %153 = arith.cmpi ne, %152, %c0_i32_90 : i32
    scf.if %153 {
      %c0_91 = arith.constant 0 : index
      %c0_92 = arith.constant 0 : index
      %154 = vector.load %arg2[%c0_91, %c0_92] : memref<64x512xf32, #tpu.memory_space<vmem>>, vector<64x512xf32>
      %c0_93 = arith.constant 0 : index
      %c0_94 = arith.constant 0 : index
      %155 = vector.load %arg9[%c0_93, %c0_94] : memref<64x512xf32, #tpu.memory_space<vmem>>, vector<64x512xf32>
      %156 = arith.subf %154, %155 : vector<64x512xf32>
      %c0_95 = arith.constant 0 : index
      %c0_96 = arith.constant 0 : index
      %157 = vector.load %arg8[%c0_95, %c0_96] : memref<64x512xf32, #tpu.memory_space<vmem>>, vector<64x512xf32>
      tpu.vector_store %arg8[%c0_95, %c0_96], %156 {strides = array<i32>} : memref<64x512xf32, #tpu.memory_space<vmem>>, vector<64x512xf32>,
    } else {
    }
    return
  }
  func.func @transform_0(%arg0: i32, %arg1: memref<26x4xi32, #tpu.memory_space<smem>>) -> (i32, i32) {
    %c0_i32 = arith.constant 0 : i32
    %c0_i32_0 = arith.constant 0 : i32
    %c0_i32_1 = arith.constant 0 : i32
    return %c0_i32, %c0_i32_0 : i32, i32
  }
  func.func @transform_1(%arg0: i32, %arg1: memref<26x4xi32, #tpu.memory_space<smem>>) -> (i32, i32, i32) {
    %c0_i32 = arith.constant 0 : i32
    %c0_i32_0 = arith.constant 0 : i32
    %c0_i32_1 = arith.constant 0 : i32
    %c0_i32_2 = arith.constant 0 : i32
    return %c0_i32, %c0_i32_0, %c0_i32_1 : i32, i32, i32
  }
  func.func @transform_2(%arg0: i32, %arg1: memref<26x4xi32, #tpu.memory_space<smem>>) -> (i32, i32, i32) {
    %c0_i32 = arith.constant 0 : i32
    %c0_i32_0 = arith.constant 0 : i32
    %c0_i32_1 = arith.constant 0 : i32
    return %arg0, %c0_i32, %c0_i32_0 : i32, i32, i32
  }
  func.func @transform_3(%arg0: i32, %arg1: memref<26x4xi32, #tpu.memory_space<smem>>) -> (i32, i32, i32) {
    %c0_i32 = arith.constant 0 : i32
    %c0_i32_0 = arith.constant 0 : i32
    %c0_i32_1 = arith.constant 0 : i32
    return %arg0, %c0_i32, %c0_i32_0 : i32, i32, i32
  }
  func.func @transform_4(%arg0: i32, %arg1: memref<26x4xi32, #tpu.memory_space<smem>>) -> (i32, i32, i32) {
    %c0_i32 = arith.constant 0 : i32
    %c0_i32_0 = arith.constant 0 : i32
    %c0_i32_1 = arith.constant 0 : i32
    return %arg0, %c0_i32, %c0_i32_0 : i32, i32, i32
  }
  func.func @transform_5(%arg0: i32, %arg1: memref<26x4xi32, #tpu.memory_space<smem>>) -> (i32, i32, i32) {
    %c0_i32 = arith.constant 0 : i32
    %c0_i32_0 = arith.constant 0 : i32
    %c0_i32_1 = arith.constant 0 : i32
    return %arg0, %c0_i32, %c0_i32_0 : i32, i32, i32
  }
  func.func @transform_6(%arg0: i32, %arg1: memref<26x4xi32, #tpu.memory_space<smem>>) -> (i32, i32) {
    %c0_i32 = arith.constant 0 : i32
    %c0_i32_0 = arith.constant 0 : i32
    %c0_i32_1 = arith.constant 0 : i32
    return %c0_i32, %c0_i32_0 : i32, i32
  }
}

</mosaic_0001>

<llo_original>
// kernel: model_forward.1
$region0: #{model_forward.1}
  #allocation0 [shape = 'u32[]', space=smem, size = 0x4, offset = 0x4, fixed_abs, tag = 'smem constant byte address 0x4 - core index']
  #allocation1 [shape = 'u32[144,128]{1,0:T(1,128)}', space=vmem, size = 0x12000, scoped, tag = 'internal scratch']
  #allocation2 [shape = 'f32[64,512]{1,0:T(8,128)}', space=vmem, size = 0x20000, scoped, tag = 'scratch operand']
  #allocation3 [shape = 'f32[64,512]{1,0:T(8,128)}', space=vmem, size = 0x20000, scoped, tag = 'scratch operand']
  #allocation4 [shape = 'bf16[576,512]{1,0:T(16,128)(2,1)}', space=vmem, size = 0x90000, scoped, tag = 'scratch operand']
  #allocation5 [shape = 's32[1]{0}', space=sflag, size = 0x4, scoped, tag = 'scoped memory for model_forward.1']
  #allocation6 [shape = 'u8[16384]{0}', space=smem, size = 0x4000, scoped, tag = 'prefetched SMEM operand 0']
  %s0 = inlined_call_operand.vmem [shape: s32[26,4], index: 0, kind: input, shape index: {}]
  %s1 = inlined_call_operand.vmem [shape: f32[64,512], index: 1, kind: input, shape index: {}]
  %s2 = inlined_call_operand.vmem [shape: f32[9,1,512], index: 2, kind: input, shape index: {}]
  %s3 = inlined_call_operand.vmem [shape: bf16[26,64,576], index: 3, kind: input, shape index: {}]
  %s4 = inlined_call_operand.vmem [shape: f32[26,64,1], index: 4, kind: input, shape index: {}]
  %s5 = inlined_call_operand.vmem [shape: f32[26,64,1], index: 5, kind: input, shape index: {}]
  %s6 = inlined_call_operand.vmem [shape: f32[26,64,1], index: 6, kind: input, shape index: {}]
  %s7 = inlined_call_operand.vmem [shape: f32[64,512], index: 7, kind: output, shape index: {}]
  %s8 = sld [smem:[#allocation0]]
  $region69: #{model_forward.1} parent=0
    _
  %s10 = ssub.s32 1, %s8
  %s11 = scalar_select 0, %s10, %s8
  %s12 = sshll.u32 %s0, 4
  %s13 = int_to_ptr.vmem [resolvable:$true] %s12
  %15 = dma.vmem_to_smem %s13, 512, [#allocation6], [#allocation5]
  %16 = dma.done [#allocation5], 512
  %17 = sfence
  loop: start=0, step=1, limit=28
  $region2: #{model_forward.1} parent=0 // loop_pre_header
    _
  $region3: #{model_forward.1} parent=0 // loop_header
    %s19 = sphi 0, %s23
    %p20 = scmp.ge.s32.totalorder %s19, 28
    %s27 = sphi 0, %s27
    %s29 = sphi 0, %s27
    %s30 = sphi 0, %s29
    %s44 = sphi 0, %s30
    %s48 = sphi 0, %s48
    %s50 = sphi 0, %s48
    %s51 = sphi 0, %s50
    %s65 = sphi 0, %s51
    %s71 = sphi 0, %s73
    %s74 = sphi 0, %s71
    %s75 = sphi 0, %s74
    %s91 = sphi 0, %s75
    %s97 = sphi 0, %s99
    %s100 = sphi 0, %s97
    %s101 = sphi 0, %s100
    %s117 = sphi 0, %s101
    %s123 = sphi 0, %s125
    %s126 = sphi 0, %s123
    %s127 = sphi 0, %s126
    %s143 = sphi 0, %s127
    %s149 = sphi 0, %s151
    %s152 = sphi 0, %s149
    %s153 = sphi 0, %s152
    %s169 = sphi 0, %s153
    %s173 = sphi 0, %s173
    %s175 = sphi 0, %s173
    %s176 = sphi 0, %s175
    %s190 = sphi 0, %s176
  $region4: #{model_forward.1} parent=0 // loop_header_branch
    %22 = sbr.rel (%p20) target = $region8
  $region5: #{model_forward.1} parent=0 // loop_body
    %s24 = ssub.s32 %s19, 1
    %s25 = ssub.s32 %s19, 2
    %s26 = sadd.s32 %s19, 1
    %s28 = sadd.s32 %s27, 1
    %p31 = scmp.eq.s32.totalorder %s19, 25
    %p32 = scmp.ne.s32.totalorder %s27, %s29
    %p33 = scmp.eq.s32.totalorder %s19, 0
    %p34 = por %p32, %p33
    %p35 = scmp.ne.s32.totalorder %s27, %s29
    %p36 = scmp.eq.s32.totalorder %s24, 25
    %p37 = por %p35, %p36
    %p38 = scmp.ne.s32.totalorder %s29, %s30
    %p39 = scmp.eq.s32.totalorder %s24, 0
    %p40 = por %p38, %p39
    %p41 = scmp.ne.s32.totalorder %s29, %s30
    %p42 = scmp.eq.s32.totalorder %s25, 25
    %p43 = por %p41, %p42
    %p45 = scmp.ne.s32.totalorder %s30, %s44
    %p46 = scmp.eq.s32.totalorder %s25, 0
    %p47 = por %p45, %p46
    %s49 = sadd.s32 %s48, 1
    %p52 = scmp.eq.s32.totalorder %s19, 25
    %p53 = scmp.ne.s32.totalorder %s48, %s50
    %p54 = scmp.eq.s32.totalorder %s19, 0
    %p55 = por %p53, %p54
    %p56 = scmp.ne.s32.totalorder %s48, %s50
    %p57 = scmp.eq.s32.totalorder %s24, 25
    %p58 = por %p56, %p57
    %p59 = scmp.ne.s32.totalorder %s50, %s51
    %p60 = scmp.eq.s32.totalorder %s24, 0
    %p61 = por %p59, %p60
    %p62 = scmp.ne.s32.totalorder %s50, %s51
    %p63 = scmp.eq.s32.totalorder %s25, 25
    %p64 = por %p62, %p63
    %p66 = scmp.ne.s32.totalorder %s51, %s65
    %p67 = scmp.eq.s32.totalorder %s25, 0
    %p68 = por %p66, %p67
    %s69 = ssub.s32 %s19, %s26
    %p70 = scmp.eq.s32.totalorder %s69, 0
    %s72 = sadd.s32 %s71, 1
    %s73 = scalar_select %p70, %s71, %s72
    %p76 = pneg %p70
    %p77 = scmp.eq.s32.totalorder %s19, 25
    %p78 = por %p76, %p77
    %p79 = scmp.ne.s32.totalorder %s71, %s74
    %p80 = scmp.eq.s32.totalorder %s19, 0
    %p81 = por %p79, %p80
    %p82 = scmp.ne.s32.totalorder %s71, %s74
    %p83 = scmp.eq.s32.totalorder %s24, 25
    %p84 = por %p82, %p83
    %p85 = scmp.ne.s32.totalorder %s74, %s75
    %p86 = scmp.eq.s32.totalorder %s24, 0
    %p87 = por %p85, %p86
    %p88 = scmp.ne.s32.totalorder %s74, %s75
    %p89 = scmp.eq.s32.totalorder %s25, 25
    %p90 = por %p88, %p89
    %p92 = scmp.ne.s32.totalorder %s75, %s91
    %p93 = scmp.eq.s32.totalorder %s25, 0
    %p94 = por %p92, %p93
    %s95 = ssub.s32 %s19, %s26
    %p96 = scmp.eq.s32.totalorder %s95, 0
    %s98 = sadd.s32 %s97, 1
    %s99 = scalar_select %p96, %s97, %s98
    %p102 = pneg %p96
    %p103 = scmp.eq.s32.totalorder %s19, 25
    %p104 = por %p102, %p103
    %p105 = scmp.ne.s32.totalorder %s97, %s100
    %p106 = scmp.eq.s32.totalorder %s19, 0
    %p107 = por %p105, %p106
    %p108 = scmp.ne.s32.totalorder %s97, %s100
    %p109 = scmp.eq.s32.totalorder %s24, 25
    %p110 = por %p108, %p109
    %p111 = scmp.ne.s32.totalorder %s100, %s101
    %p112 = scmp.eq.s32.totalorder %s24, 0
    %p113 = por %p111, %p112
    %p114 = scmp.ne.s32.totalorder %s100, %s101
    %p115 = scmp.eq.s32.totalorder %s25, 25
    %p116 = por %p114, %p115
    %p118 = scmp.ne.s32.totalorder %s101, %s117
    %p119 = scmp.eq.s32.totalorder %s25, 0
    %p120 = por %p118, %p119
    %s121 = ssub.s32 %s19, %s26
    %p122 = scmp.eq.s32.totalorder %s121, 0
    %s124 = sadd.s32 %s123, 1
    %s125 = scalar_select %p122, %s123, %s124
    %p128 = pneg %p122
    %p129 = scmp.eq.s32.totalorder %s19, 25
    %p130 = por %p128, %p129
    %p131 = scmp.ne.s32.totalorder %s123, %s126
    %p132 = scmp.eq.s32.totalorder %s19, 0
    %p133 = por %p131, %p132
    %p134 = scmp.ne.s32.totalorder %s123, %s126
    %p135 = scmp.eq.s32.totalorder %s24, 25
    %p136 = por %p134, %p135
    %p137 = scmp.ne.s32.totalorder %s126, %s127
    %p138 = scmp.eq.s32.totalorder %s24, 0
    %p139 = por %p137, %p138
    %p140 = scmp.ne.s32.totalorder %s126, %s127
    %p141 = scmp.eq.s32.totalorder %s25, 25
    %p142 = por %p140, %p141
    %p144 = scmp.ne.s32.totalorder %s127, %s143
    %p145 = scmp.eq.s32.totalorder %s25, 0
    %p146 = por %p144, %p145
    %s147 = ssub.s32 %s19, %s26
    %p148 = scmp.eq.s32.totalorder %s147, 0
    %s150 = sadd.s32 %s149, 1
    %s151 = scalar_select %p148, %s149, %s150
    %p154 = pneg %p148
    %p155 = scmp.eq.s32.totalorder %s19, 25
    %p156 = por %p154, %p155
    %p157 = scmp.ne.s32.totalorder %s149, %s152
    %p158 = scmp.eq.s32.totalorder %s19, 0
    %p159 = por %p157, %p158
    %p160 = scmp.ne.s32.totalorder %s149, %s152
    %p161 = scmp.eq.s32.totalorder %s24, 25
    %p162 = por %p160, %p161
    %p163 = scmp.ne.s32.totalorder %s152, %s153
    %p164 = scmp.eq.s32.totalorder %s24, 0
    %p165 = por %p163, %p164
    %p166 = scmp.ne.s32.totalorder %s152, %s153
    %p167 = scmp.eq.s32.totalorder %s25, 25
    %p168 = por %p166, %p167
    %p170 = scmp.ne.s32.totalorder %s153, %s169
    %p171 = scmp.eq.s32.totalorder %s25, 0
    %p172 = por %p170, %p171
    %s174 = sadd.s32 %s173, 1
    %p177 = scmp.eq.s32.totalorder %s19, 25
    %p178 = scmp.ne.s32.totalorder %s173, %s175
    %p179 = scmp.eq.s32.totalorder %s19, 0
    %p180 = por %p178, %p179
    %p181 = scmp.ne.s32.totalorder %s173, %s175
    %p182 = scmp.eq.s32.totalorder %s24, 25
    %p183 = por %p181, %p182
    %p184 = scmp.ne.s32.totalorder %s175, %s176
    %p185 = scmp.eq.s32.totalorder %s24, 0
    %p186 = por %p184, %p185
    %p187 = scmp.ne.s32.totalorder %s175, %s176
    %p188 = scmp.eq.s32.totalorder %s25, 25
    %p189 = por %p187, %p188
    %p191 = scmp.ne.s32.totalorder %s176, %s190
    %p192 = scmp.eq.s32.totalorder %s25, 0
    %p193 = por %p191, %p192
    %p194 = scmp.le.s32.totalorder 1, %s19
    %p195 = scmp.lt.s32.totalorder %s19, 27
    %p196 = pnand %p194, %p195
    %p197 = pneg %p196
    // Predicated region
    $region9: #{model_forward.1} parent=5 // pred_check
      _
    $region10: #{model_forward.1} parent=5 // pred_check_branch
      %199 = sbr.rel (%p196) target = $region12
    $region11: #{model_forward.1} parent=5 // pred_region
      %s200 = ssub.s32 %s19, 1
      // Predicated region
      $region13: #{model_forward.1} parent=11 // pred_check
        %p201 = pneg %p40
      $region14: #{model_forward.1} parent=11 // pred_check_branch
        %203 = sbr.rel (%p201) target = $region16
      $region15: #{model_forward.1} parent=11 // pred_region
        _
      $region16: #{model_forward.1} parent=11 // pred_fallthru
        _
      // Predicated region
      $region17: #{model_forward.1} parent=11 // pred_check
        %p204 = pneg %p61
      $region18: #{model_forward.1} parent=11 // pred_check_branch
        %206 = sbr.rel (%p204) target = $region20
      $region19: #{model_forward.1} parent=11 // pred_region
        _
      $region20: #{model_forward.1} parent=11 // pred_fallthru
        _
    $region12: #{model_forward.1} parent=5 // pred_fallthru
      _
    %p207 = scmp.lt.s32.totalorder %s19, 26
    // Predicated region
    $region21: #{model_forward.1} parent=5 // pred_check
      %p208 = pneg %p207
    $region22: #{model_forward.1} parent=5 // pred_check_branch
      %210 = sbr.rel (%p208) target = $region24
    $region23: #{model_forward.1} parent=5 // pred_region
      // Predicated region
      $region25: #{model_forward.1} parent=23 // pred_check
        %p211 = pneg %p81
      $region26: #{model_forward.1} parent=23 // pred_check_branch
        %213 = sbr.rel (%p211) target = $region28
      $region27: #{model_forward.1} parent=23 // pred_region
        %p214 = scmp.lt.s32.totalorder %s19, 25
        %s215 = scalar_select %p214, %s19, 25
        %s216 = smul.addr %s215, 40
        %s217 = smul.addr %s216, 4
        %s218 = scalar_lea.vmem %s3, %s217
      $region28: #{model_forward.1} parent=23 // pred_fallthru
        _
      // Predicated region
      $region29: #{model_forward.1} parent=23 // pred_check
        %p219 = pneg %p107
      $region30: #{model_forward.1} parent=23 // pred_check_branch
        %221 = sbr.rel (%p219) target = $region32
      $region31: #{model_forward.1} parent=23 // pred_region
        %p222 = scmp.lt.s32.totalorder %s19, 25
        %s223 = scalar_select %p222, %s19, 25
        %s224 = smul.addr %s223, 8
        %s225 = smul.addr %s224, 8
        %s226 = scalar_lea.vmem %s4, %s225
      $region32: #{model_forward.1} parent=23 // pred_fallthru
        _
      // Predicated region
      $region33: #{model_forward.1} parent=23 // pred_check
        %p227 = pneg %p133
      $region34: #{model_forward.1} parent=23 // pred_check_branch
        %229 = sbr.rel (%p227) target = $region36
      $region35: #{model_forward.1} parent=23 // pred_region
        %p230 = scmp.lt.s32.totalorder %s19, 25
        %s231 = scalar_select %p230, %s19, 25
        %s232 = smul.addr %s231, 8
        %s233 = smul.addr %s232, 8
        %s234 = scalar_lea.vmem %s5, %s233
      $region36: #{model_forward.1} parent=23 // pred_fallthru
        _
      // Predicated region
      $region37: #{model_forward.1} parent=23 // pred_check
        %p235 = pneg %p159
      $region38: #{model_forward.1} parent=23 // pred_check_branch
        %237 = sbr.rel (%p235) target = $region40
      $region39: #{model_forward.1} parent=23 // pred_region
        %p238 = scmp.lt.s32.totalorder %s19, 25
        %s239 = scalar_select %p238, %s19, 25
        %s240 = smul.addr %s239, 8
        %s241 = smul.addr %s240, 8
        %s242 = scalar_lea.vmem %s6, %s241
      $region40: #{model_forward.1} parent=23 // pred_fallthru
        _
    $region24: #{model_forward.1} parent=5 // pred_fallthru
      _
    %p243 = scmp.le.s32.totalorder 1, %s19
    %p244 = scmp.lt.s32.totalorder %s19, 27
    %p245 = pnand %p243, %p244
    %p246 = pneg %p245
    // Predicated region
    $region41: #{model_forward.1} parent=5 // pred_check
      _
    $region42: #{model_forward.1} parent=5 // pred_check_branch
      %248 = sbr.rel (%p245) target = $region44
    $region43: #{model_forward.1} parent=5 // pred_region
      %s249 = ssub.s32 %s19, 1
      %p250 = pneg %p40
      %p251 = pneg %p37
      %p252 = pneg %p61
      %p253 = pneg %p58
      %p254 = scmp.lt.s32.totalorder %s24, 25
      %s255 = scalar_select %p254, %s24, 25
      %s256 = smul.addr %s255, 40
      %s257 = smul.addr %s256, 4
      %s258 = scalar_lea.vmem %s3, %s257
      %p259 = pneg %p87
      %p260 = pneg %p84
      %p261 = scmp.lt.s32.totalorder %s24, 25
      %s262 = scalar_select %p261, %s24, 25
      %s263 = smul.addr %s262, 8
      %s264 = smul.addr %s263, 8
      %s265 = scalar_lea.vmem %s4, %s264
      %p266 = pneg %p113
      %p267 = pneg %p110
      %p268 = scmp.lt.s32.totalorder %s24, 25
      %s269 = scalar_select %p268, %s24, 25
      %s270 = smul.addr %s269, 8
      %s271 = smul.addr %s270, 8
      %s272 = scalar_lea.vmem %s5, %s271
      %p273 = pneg %p139
      %p274 = pneg %p136
      %p275 = scmp.lt.s32.totalorder %s24, 25
      %s276 = scalar_select %p275, %s24, 25
      %s277 = smul.addr %s276, 8
      %s278 = smul.addr %s277, 8
      %s279 = scalar_lea.vmem %s6, %s278
      %p280 = pneg %p165
      %p281 = pneg %p162
      %p282 = pneg %p186
      %p283 = pneg %p183
      %p284 = scmp.lt.s32.totalorder %s24, 25
      %s285 = scalar_select %p284, %s24, 25
      %s286 = smul.addr %s285, 40
      %s287 = smul.addr %s286, 4
      %s288 = scalar_lea.vmem %s3, %s287
      %p289 = scmp.lt.s32.totalorder %s24, 25
      %s290 = scalar_select %p289, %s24, 25
      %s291 = smul.addr %s290, 8
      %s292 = smul.addr %s291, 8
      %s293 = scalar_lea.vmem %s4, %s292
      %p294 = scmp.lt.s32.totalorder %s24, 25
      %s295 = scalar_select %p294, %s24, 25
      %s296 = smul.addr %s295, 8
      %s297 = smul.addr %s296, 8
      %s298 = scalar_lea.vmem %s5, %s297
      %p299 = scmp.lt.s32.totalorder %s24, 25
      %s300 = scalar_select %p299, %s24, 25
      %s301 = smul.addr %s300, 8
      %s302 = smul.addr %s301, 8
      %s303 = scalar_lea.vmem %s6, %s302
      %p305 = scmp.eq.s32.totalorder %s24, 0
      // Predicated region
      $region45: #{model_forward.1} parent=43 // pred_check
        %p306 = pneg %p305
      $region46: #{model_forward.1} parent=43 // pred_check_branch
        %308 = sbr.rel (%p306) target = $region48
      $region47: #{model_forward.1} parent=43 // pred_region
        %v309 = vld [vmem:[%s1] sm:$0xff]
        %v310 = vld [vmem:[%s1 + $0x8] sm:$0xff]
        %v311 = vld [vmem:[%s1 + $0x10] sm:$0xff]
        %v312 = vld [vmem:[%s1 + $0x18] sm:$0xff]
        %v313 = vld [vmem:[%s1 + $0x20] sm:$0xff]
        %v314 = vld [vmem:[%s1 + $0x28] sm:$0xff]
        %v315 = vld [vmem:[%s1 + $0x30] sm:$0xff]
        %v316 = vld [vmem:[%s1 + $0x38] sm:$0xff]
        %v317 = vld [vmem:[%s1 + $0x40] sm:$0xff]
        %v318 = vld [vmem:[%s1 + $0x48] sm:$0xff]
        %v319 = vld [vmem:[%s1 + $0x50] sm:$0xff]
        %v320 = vld [vmem:[%s1 + $0x58] sm:$0xff]
        %v321 = vld [vmem:[%s1 + $0x60] sm:$0xff]
        %v322 = vld [vmem:[%s1 + $0x68] sm:$0xff]
        %v323 = vld [vmem:[%s1 + $0x70] sm:$0xff]
        %v324 = vld [vmem:[%s1 + $0x78] sm:$0xff]
        %v325 = vld [vmem:[%s1 + $0x80] sm:$0xff]
        %v326 = vld [vmem:[%s1 + $0x88] sm:$0xff]
        %v327 = vld [vmem:[%s1 + $0x90] sm:$0xff]
        %v328 = vld [vmem:[%s1 + $0x98] sm:$0xff]
        %v329 = vld [vmem:[%s1 + $0xa0] sm:$0xff]
        %v330 = vld [vmem:[%s1 + $0xa8] sm:$0xff]
        %v331 = vld [vmem:[%s1 + $0xb0] sm:$0xff]
        %v332 = vld [vmem:[%s1 + $0xb8] sm:$0xff]
        %v333 = vld [vmem:[%s1 + $0xc0] sm:$0xff]
        %v334 = vld [vmem:[%s1 + $0xc8] sm:$0xff]
        %v335 = vld [vmem:[%s1 + $0xd0] sm:$0xff]
        %v336 = vld [vmem:[%s1 + $0xd8] sm:$0xff]
        %v337 = vld [vmem:[%s1 + $0xe0] sm:$0xff]
        %v338 = vld [vmem:[%s1 + $0xe8] sm:$0xff]
        %v339 = vld [vmem:[%s1 + $0xf0] sm:$0xff]
        %v340 = vld [vmem:[%s1 + $0xf8] sm:$0xff]
        %341 = vst [vmem:[#allocation2] sm:$0xff] %v309
        %342 = vst [vmem:[#allocation2 + $0x8] sm:$0xff] %v310
        %343 = vst [vmem:[#allocation2 + $0x10] sm:$0xff] %v311
        %344 = vst [vmem:[#allocation2 + $0x18] sm:$0xff] %v312
        %345 = vst [vmem:[#allocation2 + $0x20] sm:$0xff] %v313
        %346 = vst [vmem:[#allocation2 + $0x28] sm:$0xff] %v314
        %347 = vst [vmem:[#allocation2 + $0x30] sm:$0xff] %v315
        %348 = vst [vmem:[#allocation2 + $0x38] sm:$0xff] %v316
        %349 = vst [vmem:[#allocation2 + $0x40] sm:$0xff] %v317
        %350 = vst [vmem:[#allocation2 + $0x48] sm:$0xff] %v318
        %351 = vst [vmem:[#allocation2 + $0x50] sm:$0xff] %v319
        %352 = vst [vmem:[#allocation2 + $0x58] sm:$0xff] %v320
        %353 = vst [vmem:[#allocation2 + $0x60] sm:$0xff] %v321
        %354 = vst [vmem:[#allocation2 + $0x68] sm:$0xff] %v322
        %355 = vst [vmem:[#allocation2 + $0x70] sm:$0xff] %v323
        %356 = vst [vmem:[#allocation2 + $0x78] sm:$0xff] %v324
        %357 = vst [vmem:[#allocation2 + $0x80] sm:$0xff] %v325
        %358 = vst [vmem:[#allocation2 + $0x88] sm:$0xff] %v326
        %359 = vst [vmem:[#allocation2 + $0x90] sm:$0xff] %v327
        %360 = vst [vmem:[#allocation2 + $0x98] sm:$0xff] %v328
        %361 = vst [vmem:[#allocation2 + $0xa0] sm:$0xff] %v329
        %362 = vst [vmem:[#allocation2 + $0xa8] sm:$0xff] %v330
        %363 = vst [vmem:[#allocation2 + $0xb0] sm:$0xff] %v331
        %364 = vst [vmem:[#allocation2 + $0xb8] sm:$0xff] %v332
        %365 = vst [vmem:[#allocation2 + $0xc0] sm:$0xff] %v333
        %366 = vst [vmem:[#allocation2 + $0xc8] sm:$0xff] %v334
        %367 = vst [vmem:[#allocation2 + $0xd0] sm:$0xff] %v335
        %368 = vst [vmem:[#allocation2 + $0xd8] sm:$0xff] %v336
        %369 = vst [vmem:[#allocation2 + $0xe0] sm:$0xff] %v337
        %370 = vst [vmem:[#allocation2 + $0xe8] sm:$0xff] %v338
        %371 = vst [vmem:[#allocation2 + $0xf0] sm:$0xff] %v339
        %372 = vst [vmem:[#allocation2 + $0xf8] sm:$0xff] %v340
        %373 = vst [vmem:[#allocation3] sm:$0xff] 0.0
        %374 = vst [vmem:[#allocation3 + $0x8] sm:$0xff] 0.0
        %375 = vst [vmem:[#allocation3 + $0x10] sm:$0xff] 0.0
        %376 = vst [vmem:[#allocation3 + $0x18] sm:$0xff] 0.0
        %377 = vst [vmem:[#allocation3 + $0x20] sm:$0xff] 0.0
        %378 = vst [vmem:[#allocation3 + $0x28] sm:$0xff] 0.0
        %379 = vst [vmem:[#allocation3 + $0x30] sm:$0xff] 0.0
        %380 = vst [vmem:[#allocation3 + $0x38] sm:$0xff] 0.0
        %381 = vst [vmem:[#allocation3 + $0x40] sm:$0xff] 0.0
        %382 = vst [vmem:[#allocation3 + $0x48] sm:$0xff] 0.0
        %383 = vst [vmem:[#allocation3 + $0x50] sm:$0xff] 0.0
        %384 = vst [vmem:[#allocation3 + $0x58] sm:$0xff] 0.0
        %385 = vst [vmem:[#allocation3 + $0x60] sm:$0xff] 0.0
        %386 = vst [vmem:[#allocation3 + $0x68] sm:$0xff] 0.0
        %387 = vst [vmem:[#allocation3 + $0x70] sm:$0xff] 0.0
        %388 = vst [vmem:[#allocation3 + $0x78] sm:$0xff] 0.0
        %389 = vst [vmem:[#allocation3 + $0x80] sm:$0xff] 0.0
        %390 = vst [vmem:[#allocation3 + $0x88] sm:$0xff] 0.0
        %391 = vst [vmem:[#allocation3 + $0x90] sm:$0xff] 0.0
        %392 = vst [vmem:[#allocation3 + $0x98] sm:$0xff] 0.0
        %393 = vst [vmem:[#allocation3 + $0xa0] sm:$0xff] 0.0
        %394 = vst [vmem:[#allocation3 + $0xa8] sm:$0xff] 0.0
        %395 = vst [vmem:[#allocation3 + $0xb0] sm:$0xff] 0.0
        %396 = vst [vmem:[#allocation3 + $0xb8] sm:$0xff] 0.0
        %397 = vst [vmem:[#allocation3 + $0xc0] sm:$0xff] 0.0
        %398 = vst [vmem:[#allocation3 + $0xc8] sm:$0xff] 0.0
        %399 = vst [vmem:[#allocation3 + $0xd0] sm:$0xff] 0.0
        %400 = vst [vmem:[#allocation3 + $0xd8] sm:$0xff] 0.0
        %401 = vst [vmem:[#allocation3 + $0xe0] sm:$0xff] 0.0
        %402 = vst [vmem:[#allocation3 + $0xe8] sm:$0xff] 0.0
        %403 = vst [vmem:[#allocation3 + $0xf0] sm:$0xff] 0.0
        %404 = vst [vmem:[#allocation3 + $0xf8] sm:$0xff] 0.0
      $region48: #{model_forward.1} parent=43 // pred_fallthru
        _
      %s405 = smul.u32 %s24, 128
      %s406 = sld [smem:[#allocation6 + %s405]]
      %p407 = scmp.eq.s32.totalorder %s406, 1
      %s408 = sadd.s32 %s405, 1
      %s409 = sld [smem:[#allocation6 + %s408]]
      %p410 = scmp.eq.s32.totalorder %s409, 1
      %s411 = sadd.s32 %s405, 2
      %s412 = sld [smem:[#allocation6 + %s411]]
      %p413 = scmp.eq.s32.totalorder %s412, 1
      %s414 = sadd.s32 %s405, 3
      %s415 = sld [smem:[#allocation6 + %s414]]
      %p416 = scmp.eq.s32.totalorder %s415, 1
      // Predicated region
      $region49: #{model_forward.1} parent=43 // pred_check
        %p417 = pneg %p413
      $region50: #{model_forward.1} parent=43 // pred_check_branch
        %419 = sbr.rel (%p417) target = $region52
      $region51: #{model_forward.1} parent=43 // pred_region
        %v420 = vld [vmem:[#allocation2] sm:$0xff]
        %v421 = vld [vmem:[#allocation2 + $0x8] sm:$0xff]
        %v422 = vld [vmem:[#allocation2 + $0x10] sm:$0xff]
        %v423 = vld [vmem:[#allocation2 + $0x18] sm:$0xff]
        %v424 = vld [vmem:[#allocation2 + $0x20] sm:$0xff]
        %v425 = vld [vmem:[#allocation2 + $0x28] sm:$0xff]
        %v426 = vld [vmem:[#allocation2 + $0x30] sm:$0xff]
        %v427 = vld [vmem:[#allocation2 + $0x38] sm:$0xff]
        %v428 = vld [vmem:[#allocation2 + $0x40] sm:$0xff]
        %v429 = vld [vmem:[#allocation2 + $0x48] sm:$0xff]
        %v430 = vld [vmem:[#allocation2 + $0x50] sm:$0xff]
        %v431 = vld [vmem:[#allocation2 + $0x58] sm:$0xff]
        %v432 = vld [vmem:[#allocation2 + $0x60] sm:$0xff]
        %v433 = vld [vmem:[#allocation2 + $0x68] sm:$0xff]
        %v434 = vld [vmem:[#allocation2 + $0x70] sm:$0xff]
        %v435 = vld [vmem:[#allocation2 + $0x78] sm:$0xff]
        %v436 = vld [vmem:[#allocation2 + $0x80] sm:$0xff]
        %v437 = vld [vmem:[#allocation2 + $0x88] sm:$0xff]
        %v438 = vld [vmem:[#allocation2 + $0x90] sm:$0xff]
        %v439 = vld [vmem:[#allocation2 + $0x98] sm:$0xff]
        %v440 = vld [vmem:[#allocation2 + $0xa0] sm:$0xff]
        %v441 = vld [vmem:[#allocation2 + $0xa8] sm:$0xff]
        %v442 = vld [vmem:[#allocation2 + $0xb0] sm:$0xff]
        %v443 = vld [vmem:[#allocation2 + $0xb8] sm:$0xff]
        %v444 = vld [vmem:[#allocation2 + $0xc0] sm:$0xff]
        %v445 = vld [vmem:[#allocation2 + $0xc8] sm:$0xff]
        %v446 = vld [vmem:[#allocation2 + $0xd0] sm:$0xff]
        %v447 = vld [vmem:[#allocation2 + $0xd8] sm:$0xff]
        %v448 = vld [vmem:[#allocation2 + $0xe0] sm:$0xff]
        %v449 = vld [vmem:[#allocation2 + $0xe8] sm:$0xff]
        %v450 = vld [vmem:[#allocation2 + $0xf0] sm:$0xff]
        %v451 = vld [vmem:[#allocation2 + $0xf8] sm:$0xff]
        %452 = vst [vmem:[#allocation3] sm:$0xff] %v420
        %453 = vst [vmem:[#allocation3 + $0x8] sm:$0xff] %v421
        %454 = vst [vmem:[#allocation3 + $0x10] sm:$0xff] %v422
        %455 = vst [vmem:[#allocation3 + $0x18] sm:$0xff] %v423
        %456 = vst [vmem:[#allocation3 + $0x20] sm:$0xff] %v424
        %457 = vst [vmem:[#allocation3 + $0x28] sm:$0xff] %v425
        %458 = vst [vmem:[#allocation3 + $0x30] sm:$0xff] %v426
        %459 = vst [vmem:[#allocation3 + $0x38] sm:$0xff] %v427
        %460 = vst [vmem:[#allocation3 + $0x40] sm:$0xff] %v428
        %461 = vst [vmem:[#allocation3 + $0x48] sm:$0xff] %v429
        %462 = vst [vmem:[#allocation3 + $0x50] sm:$0xff] %v430
        %463 = vst [vmem:[#allocation3 + $0x58] sm:$0xff] %v431
        %464 = vst [vmem:[#allocation3 + $0x60] sm:$0xff] %v432
        %465 = vst [vmem:[#allocation3 + $0x68] sm:$0xff] %v433
        %466 = vst [vmem:[#allocation3 + $0x70] sm:$0xff] %v434
        %467 = vst [vmem:[#allocation3 + $0x78] sm:$0xff] %v435
        %468 = vst [vmem:[#allocation3 + $0x80] sm:$0xff] %v436
        %469 = vst [vmem:[#allocation3 + $0x88] sm:$0xff] %v437
        %470 = vst [vmem:[#allocation3 + $0x90] sm:$0xff] %v438
        %471 = vst [vmem:[#allocation3 + $0x98] sm:$0xff] %v439
        %472 = vst [vmem:[#allocation3 + $0xa0] sm:$0xff] %v440
        %473 = vst [vmem:[#allocation3 + $0xa8] sm:$0xff] %v441
        %474 = vst [vmem:[#allocation3 + $0xb0] sm:$0xff] %v442
        %475 = vst [vmem:[#allocation3 + $0xb8] sm:$0xff] %v443
        %476 = vst [vmem:[#allocation3 + $0xc0] sm:$0xff] %v444
        %477 = vst [vmem:[#allocation3 + $0xc8] sm:$0xff] %v445
        %478 = vst [vmem:[#allocation3 + $0xd0] sm:$0xff] %v446
        %479 = vst [vmem:[#allocation3 + $0xd8] sm:$0xff] %v447
        %480 = vst [vmem:[#allocation3 + $0xe0] sm:$0xff] %v448
        %481 = vst [vmem:[#allocation3 + $0xe8] sm:$0xff] %v449
        %482 = vst [vmem:[#allocation3 + $0xf0] sm:$0xff] %v450
        %483 = vst [vmem:[#allocation3 + $0xf8] sm:$0xff] %v451
      $region52: #{model_forward.1} parent=43 // pred_fallthru
        _
      %v484 = vld [vmem:[#allocation2] sm:$0xff]
      %v485 = vld [vmem:[#allocation2 + $0x8] sm:$0xff]
      %v486 = vld [vmem:[#allocation2 + $0x10] sm:$0xff]
      %v487 = vld [vmem:[#allocation2 + $0x18] sm:$0xff]
      %v488 = vld [vmem:[#allocation2 + $0x20] sm:$0xff]
      %v489 = vld [vmem:[#allocation2 + $0x28] sm:$0xff]
      %v490 = vld [vmem:[#allocation2 + $0x30] sm:$0xff]
      %v491 = vld [vmem:[#allocation2 + $0x38] sm:$0xff]
      %v492 = vld [vmem:[#allocation2 + $0x40] sm:$0xff]
      %v493 = vld [vmem:[#allocation2 + $0x48] sm:$0xff]
      %v494 = vld [vmem:[#allocation2 + $0x50] sm:$0xff]
      %v495 = vld [vmem:[#allocation2 + $0x58] sm:$0xff]
      %v496 = vld [vmem:[#allocation2 + $0x60] sm:$0xff]
      %v497 = vld [vmem:[#allocation2 + $0x68] sm:$0xff]
      %v498 = vld [vmem:[#allocation2 + $0x70] sm:$0xff]
      %v499 = vld [vmem:[#allocation2 + $0x78] sm:$0xff]
      %v500 = vld [vmem:[#allocation2 + $0x80] sm:$0xff]
      %v501 = vld [vmem:[#allocation2 + $0x88] sm:$0xff]
      %v502 = vld [vmem:[#allocation2 + $0x90] sm:$0xff]
      %v503 = vld [vmem:[#allocation2 + $0x98] sm:$0xff]
      %v504 = vld [vmem:[#allocation2 + $0xa0] sm:$0xff]
      %v505 = vld [vmem:[#allocation2 + $0xa8] sm:$0xff]
      %v506 = vld [vmem:[#allocation2 + $0xb0] sm:$0xff]
      %v507 = vld [vmem:[#allocation2 + $0xb8] sm:$0xff]
      %v508 = vld [vmem:[#allocation2 + $0xc0] sm:$0xff]
      %v509 = vld [vmem:[#allocation2 + $0xc8] sm:$0xff]
      %v510 = vld [vmem:[#allocation2 + $0xd0] sm:$0xff]
      %v511 = vld [vmem:[#allocation2 + $0xd8] sm:$0xff]
      %v512 = vld [vmem:[#allocation2 + $0xe0] sm:$0xff]
      %v513 = vld [vmem:[#allocation2 + $0xe8] sm:$0xff]
      %v514 = vld [vmem:[#allocation2 + $0xf0] sm:$0xff]
      %v515 = vld [vmem:[#allocation2 + $0xf8] sm:$0xff]
      %516 = vrot.lane.b32.xlu0 %v484, 17
      %v517 = vpop.permute.xlu0 %516
      %518 = vrot.lane.b32.xlu0 %v488, 17
      %v519 = vpop.permute.xlu0 %518
      %520 = vrot.lane.b32.xlu0 %v492, 17
      %v521 = vpop.permute.xlu0 %520
      %522 = vrot.lane.b32.xlu0 %v496, 17
      %v523 = vpop.permute.xlu0 %522
      %524 = vrot.lane.b32.xlu0 %v500, 17
      %v525 = vpop.permute.xlu0 %524
      %526 = vrot.lane.b32.xlu0 %v504, 17
      %v527 = vpop.permute.xlu0 %526
      %528 = vrot.lane.b32.xlu0 %v508, 17
      %v529 = vpop.permute.xlu0 %528
      %530 = vrot.lane.b32.xlu0 %v512, 17
      %v531 = vpop.permute.xlu0 %530
      %532 = vrot.lane.b32.xlu0 %v485, 17
      %v533 = vpop.permute.xlu0 %532
      %534 = vrot.lane.b32.xlu0 %v489, 17
      %v535 = vpop.permute.xlu0 %534
      %536 = vrot.lane.b32.xlu0 %v493, 17
      %v537 = vpop.permute.xlu0 %536
      %538 = vrot.lane.b32.xlu0 %v497, 17
      %v539 = vpop.permute.xlu0 %538
      %540 = vrot.lane.b32.xlu0 %v501, 17
      %v541 = vpop.permute.xlu0 %540
      %542 = vrot.lane.b32.xlu0 %v505, 17
      %v543 = vpop.permute.xlu0 %542
      %544 = vrot.lane.b32.xlu0 %v509, 17
      %v545 = vpop.permute.xlu0 %544
      %546 = vrot.lane.b32.xlu0 %v513, 17
      %v547 = vpop.permute.xlu0 %546
      %548 = vrot.lane.b32.xlu0 %v486, 17
      %v549 = vpop.permute.xlu0 %548
      %550 = vrot.lane.b32.xlu0 %v490, 17
      %v551 = vpop.permute.xlu0 %550
      %552 = vrot.lane.b32.xlu0 %v494, 17
      %v553 = vpop.permute.xlu0 %552
      %554 = vrot.lane.b32.xlu0 %v498, 17
      %v555 = vpop.permute.xlu0 %554
      %556 = vrot.lane.b32.xlu0 %v502, 17
      %v557 = vpop.permute.xlu0 %556
      %558 = vrot.lane.b32.xlu0 %v506, 17
      %v559 = vpop.permute.xlu0 %558
      %560 = vrot.lane.b32.xlu0 %v510, 17
      %v561 = vpop.permute.xlu0 %560
      %562 = vrot.lane.b32.xlu0 %v514, 17
      %v563 = vpop.permute.xlu0 %562
      %564 = vrot.lane.b32.xlu0 %v487, 17
      %v565 = vpop.permute.xlu0 %564
      %566 = vrot.lane.b32.xlu0 %v491, 17
      %v567 = vpop.permute.xlu0 %566
      %568 = vrot.lane.b32.xlu0 %v495, 17
      %v569 = vpop.permute.xlu0 %568
      %570 = vrot.lane.b32.xlu0 %v499, 17
      %v571 = vpop.permute.xlu0 %570
      %572 = vrot.lane.b32.xlu0 %v503, 17
      %v573 = vpop.permute.xlu0 %572
      %574 = vrot.lane.b32.xlu0 %v507, 17
      %v575 = vpop.permute.xlu0 %574
      %576 = vrot.lane.b32.xlu0 %v511, 17
      %v577 = vpop.permute.xlu0 %576
      %578 = vrot.lane.b32.xlu0 %v515, 17
      %v579 = vpop.permute.xlu0 %578
      %v580 = vlaneseq
      %v581 = vand.u32 %v580, 127
      %vm582 = vcmp.lt.s32.totalorder %v581, 17
      %v583 = vsel %vm582, %v549, %v565
      %v584 = vsel %vm582, %v551, %v567
      %v585 = vsel %vm582, %v553, %v569
      %v586 = vsel %vm582, %v555, %v571
      %v587 = vsel %vm582, %v557, %v573
      %v588 = vsel %vm582, %v559, %v575
      %v589 = vsel %vm582, %v561, %v577
      %v590 = vsel %vm582, %v563, %v579
      %v591 = vsel %vm582, %v533, %v549
      %v592 = vsel %vm582, %v535, %v551
      %v593 = vsel %vm582, %v537, %v553
      %v594 = vsel %vm582, %v539, %v555
      %v595 = vsel %vm582, %v541, %v557
      %v596 = vsel %vm582, %v543, %v559
      %v597 = vsel %vm582, %v545, %v561
      %v598 = vsel %vm582, %v547, %v563
      %v599 = vsel %vm582, %v517, %v533
      %v600 = vsel %vm582, %v519, %v535
      %v601 = vsel %vm582, %v521, %v537
      %v602 = vsel %vm582, %v523, %v539
      %v603 = vsel %vm582, %v525, %v541
      %v604 = vsel %vm582, %v527, %v543
      %v605 = vsel %vm582, %v529, %v545
      %v606 = vsel %vm582, %v531, %v547
      %v607 = vsel %vm582, %v565, %v517
      %v608 = vsel %vm582, %v567, %v519
      %v609 = vsel %vm582, %v569, %v521
      %v610 = vsel %vm582, %v571, %v523
      %v611 = vsel %vm582, %v573, %v525
      %v612 = vsel %vm582, %v575, %v527
      %v613 = vsel %vm582, %v577, %v529
      %v614 = vsel %vm582, %v579, %v531
      %v615 = vld [vmem:[%s2] sm:$0xf]
      %v617 = vlaneseq
      %v618 = vshrl.u32 %v617, 7
      %v619 = vsub.s32 0, %v618
      %v620 = vrot.slane %v615, %v619
      %v621 = vlaneseq
      %v622 = vshrl.u32 %v621, 7
      %v623 = vsub.s32 1, %v622
      %v624 = vrot.slane %v615, %v623
      %v625 = vlaneseq
      %v626 = vshrl.u32 %v625, 7
      %v627 = vsub.s32 2, %v626
      %v628 = vrot.slane %v615, %v627
      %v629 = vlaneseq
      %v630 = vshrl.u32 %v629, 7
      %v631 = vsub.s32 3, %v630
      %v632 = vrot.slane %v615, %v631
      %v637 = vmul.f32 %v607, %v620
      %v638 = vmul.f32 %v599, %v624
      %v639 = vmul.f32 %v591, %v628
      %v640 = vmul.f32 %v583, %v632
      %v641 = vmul.f32 %v608, %v620
      %v642 = vmul.f32 %v600, %v624
      %v643 = vmul.f32 %v592, %v628
      %v644 = vmul.f32 %v584, %v632
      %v645 = vmul.f32 %v609, %v620
      %v646 = vmul.f32 %v601, %v624
      %v647 = vmul.f32 %v593, %v628
      %v648 = vmul.f32 %v585, %v632
      %v649 = vmul.f32 %v610, %v620
      %v650 = vmul.f32 %v602, %v624
      %v651 = vmul.f32 %v594, %v628
      %v652 = vmul.f32 %v586, %v632
      %v653 = vmul.f32 %v611, %v620
      %v654 = vmul.f32 %v603, %v624
      %v655 = vmul.f32 %v595, %v628
      %v656 = vmul.f32 %v587, %v632
      %v657 = vmul.f32 %v612, %v620
      %v658 = vmul.f32 %v604, %v624
      %v659 = vmul.f32 %v596, %v628
      %v660 = vmul.f32 %v588, %v632
      %v661 = vmul.f32 %v613, %v620
      %v662 = vmul.f32 %v605, %v624
      %v663 = vmul.f32 %v597, %v628
      %v664 = vmul.f32 %v589, %v632
      %v665 = vmul.f32 %v614, %v620
      %v666 = vmul.f32 %v606, %v624
      %v667 = vmul.f32 %v598, %v628
      %v668 = vmul.f32 %v590, %v632
      %v669 = vpack.c.bf16 %v641, %v637
      %v670 = vpack.c.bf16 %v642, %v638
      %v671 = vpack.c.bf16 %v643, %v639
      %v672 = vpack.c.bf16 %v644, %v640
      %v673 = vpack.c.bf16 %v649, %v645
      %v674 = vpack.c.bf16 %v650, %v646
      %v675 = vpack.c.bf16 %v651, %v647
      %v676 = vpack.c.bf16 %v652, %v648
      %v677 = vpack.c.bf16 %v657, %v653
      %v678 = vpack.c.bf16 %v658, %v654
      %v679 = vpack.c.bf16 %v659, %v655
      %v680 = vpack.c.bf16 %v660, %v656
      %v681 = vpack.c.bf16 %v665, %v661
      %v682 = vpack.c.bf16 %v666, %v662
      %v683 = vpack.c.bf16 %v667, %v663
      %v684 = vpack.c.bf16 %v668, %v664
      %685 = vst [vmem:[#allocation4] sm:$0xff] %v669
      %686 = vst [vmem:[#allocation4 + $0x8] sm:$0xff] %v670
      %687 = vst [vmem:[#allocation4 + $0x10] sm:$0xff] %v671
      %688 = vst [vmem:[#allocation4 + $0x18] sm:$0xff] %v672
      %689 = vst [vmem:[#allocation4 + $0x20] sm:$0xff] %v673
      %690 = vst [vmem:[#allocation4 + $0x28] sm:$0xff] %v674
      %691 = vst [vmem:[#allocation4 + $0x30] sm:$0xff] %v675
      %692 = vst [vmem:[#allocation4 + $0x38] sm:$0xff] %v676
      %693 = vst [vmem:[#allocation4 + $0x40] sm:$0xff] %v677
      %694 = vst [vmem:[#allocation4 + $0x48] sm:$0xff] %v678
      %695 = vst [vmem:[#allocation4 + $0x50] sm:$0xff] %v679
      %696 = vst [vmem:[#allocation4 + $0x58] sm:$0xff] %v680
      %697 = vst [vmem:[#allocation4 + $0x60] sm:$0xff] %v681
      %698 = vst [vmem:[#allocation4 + $0x68] sm:$0xff] %v682
      %699 = vst [vmem:[#allocation4 + $0x70] sm:$0xff] %v683
      %700 = vst [vmem:[#allocation4 + $0x78] sm:$0xff] %v684
      %v701 = vld [vmem:[#allocation2] sm:$0xff]
      %v702 = vld [vmem:[#allocation2 + $0x8] sm:$0xff]
      %v703 = vld [vmem:[#allocation2 + $0x10] sm:$0xff]
      %v704 = vld [vmem:[#allocation2 + $0x18] sm:$0xff]
      %v705 = vld [vmem:[#allocation2 + $0x20] sm:$0xff]
      %v706 = vld [vmem:[#allocation2 + $0x28] sm:$0xff]
      %v707 = vld [vmem:[#allocation2 + $0x30] sm:$0xff]
      %v708 = vld [vmem:[#allocation2 + $0x38] sm:$0xff]
      %v709 = vld [vmem:[#allocation2 + $0x40] sm:$0xff]
      %v710 = vld [vmem:[#allocation2 + $0x48] sm:$0xff]
      %v711 = vld [vmem:[#allocation2 + $0x50] sm:$0xff]
      %v712 = vld [vmem:[#allocation2 + $0x58] sm:$0xff]
      %v713 = vld [vmem:[#allocation2 + $0x60] sm:$0xff]
      %v714 = vld [vmem:[#allocation2 + $0x68] sm:$0xff]
      %v715 = vld [vmem:[#allocation2 + $0x70] sm:$0xff]
      %v716 = vld [vmem:[#allocation2 + $0x78] sm:$0xff]
      %v717 = vld [vmem:[#allocation2 + $0x80] sm:$0xff]
      %v718 = vld [vmem:[#allocation2 + $0x88] sm:$0xff]
      %v719 = vld [vmem:[#allocation2 + $0x90] sm:$0xff]
      %v720 = vld [vmem:[#allocation2 + $0x98] sm:$0xff]
      %v721 = vld [vmem:[#allocation2 + $0xa0] sm:$0xff]
      %v722 = vld [vmem:[#allocation2 + $0xa8] sm:$0xff]
      %v723 = vld [vmem:[#allocation2 + $0xb0] sm:$0xff]
      %v724 = vld [vmem:[#allocation2 + $0xb8] sm:$0xff]
      %v725 = vld [vmem:[#allocation2 + $0xc0] sm:$0xff]
      %v726 = vld [vmem:[#allocation2 + $0xc8] sm:$0xff]
      %v727 = vld [vmem:[#allocation2 + $0xd0] sm:$0xff]
      %v728 = vld [vmem:[#allocation2 + $0xd8] sm:$0xff]
      %v729 = vld [vmem:[#allocation2 + $0xe0] sm:$0xff]
      %v730 = vld [vmem:[#allocation2 + $0xe8] sm:$0xff]
      %v731 = vld [vmem:[#allocation2 + $0xf0] sm:$0xff]
      %v732 = vld [vmem:[#allocation2 + $0xf8] sm:$0xff]
      %733 = vrot.lane.b32.xlu0 %v701, 16
      %v734 = vpop.permute.xlu0 %733
      %735 = vrot.lane.b32.xlu0 %v705, 16
      %v736 = vpop.permute.xlu0 %735
      %737 = vrot.lane.b32.xlu0 %v709, 16
      %v738 = vpop.permute.xlu0 %737
      %739 = vrot.lane.b32.xlu0 %v713, 16
      %v740 = vpop.permute.xlu0 %739
      %741 = vrot.lane.b32.xlu0 %v717, 16
      %v742 = vpop.permute.xlu0 %741
      %743 = vrot.lane.b32.xlu0 %v721, 16
      %v744 = vpop.permute.xlu0 %743
      %745 = vrot.lane.b32.xlu0 %v725, 16
      %v746 = vpop.permute.xlu0 %745
      %747 = vrot.lane.b32.xlu0 %v729, 16
      %v748 = vpop.permute.xlu0 %747
      %749 = vrot.lane.b32.xlu0 %v702, 16
      %v750 = vpop.permute.xlu0 %749
      %751 = vrot.lane.b32.xlu0 %v706, 16
      %v752 = vpop.permute.xlu0 %751
      %753 = vrot.lane.b32.xlu0 %v710, 16
      %v754 = vpop.permute.xlu0 %753
      %755 = vrot.lane.b32.xlu0 %v714, 16
      %v756 = vpop.permute.xlu0 %755
      %757 = vrot.lane.b32.xlu0 %v718, 16
      %v758 = vpop.permute.xlu0 %757
      %759 = vrot.lane.b32.xlu0 %v722, 16
      %v760 = vpop.permute.xlu0 %759
      %761 = vrot.lane.b32.xlu0 %v726, 16
      %v762 = vpop.permute.xlu0 %761
      %763 = vrot.lane.b32.xlu0 %v730, 16
      %v764 = vpop.permute.xlu0 %763
      %765 = vrot.lane.b32.xlu0 %v703, 16
      %v766 = vpop.permute.xlu0 %765
      %767 = vrot.lane.b32.xlu0 %v707, 16
      %v768 = vpop.permute.xlu0 %767
      %769 = vrot.lane.b32.xlu0 %v711, 16
      %v770 = vpop.permute.xlu0 %769
      %771 = vrot.lane.b32.xlu0 %v715, 16
      %v772 = vpop.permute.xlu0 %771
      %773 = vrot.lane.b32.xlu0 %v719, 16
      %v774 = vpop.permute.xlu0 %773
      %775 = vrot.lane.b32.xlu0 %v723, 16
      %v776 = vpop.permute.xlu0 %775
      %777 = vrot.lane.b32.xlu0 %v727, 16
      %v778 = vpop.permute.xlu0 %777
      %779 = vrot.lane.b32.xlu0 %v731, 16
      %v780 = vpop.permute.xlu0 %779
      %781 = vrot.lane.b32.xlu0 %v704, 16
      %v782 = vpop.permute.xlu0 %781
      %783 = vrot.lane.b32.xlu0 %v708, 16
      %v784 = vpop.permute.xlu0 %783
      %785 = vrot.lane.b32.xlu0 %v712, 16
      %v786 = vpop.permute.xlu0 %785
      %787 = vrot.lane.b32.xlu0 %v716, 16
      %v788 = vpop.permute.xlu0 %787
      %789 = vrot.lane.b32.xlu0 %v720, 16
      %v790 = vpop.permute.xlu0 %789
      %791 = vrot.lane.b32.xlu0 %v724, 16
      %v792 = vpop.permute.xlu0 %791
      %793 = vrot.lane.b32.xlu0 %v728, 16
      %v794 = vpop.permute.xlu0 %793
      %795 = vrot.lane.b32.xlu0 %v732, 16
      %v796 = vpop.permute.xlu0 %795
      %vm797 = vcmp.lt.s32.totalorder %v581, 16
      %v798 = vsel %vm797, %v766, %v782
      %v799 = vsel %vm797, %v768, %v784
      %v800 = vsel %vm797, %v770, %v786
      %v801 = vsel %vm797, %v772, %v788
      %v802 = vsel %vm797, %v774, %v790
      %v803 = vsel %vm797, %v776, %v792
      %v804 = vsel %vm797, %v778, %v794
      %v805 = vsel %vm797, %v780, %v796
      %v806 = vsel %vm797, %v750, %v766
      %v807 = vsel %vm797, %v752, %v768
      %v808 = vsel %vm797, %v754, %v770
      %v809 = vsel %vm797, %v756, %v772
      %v810 = vsel %vm797, %v758, %v774
      %v811 = vsel %vm797, %v760, %v776
      %v812 = vsel %vm797, %v762, %v778
      %v813 = vsel %vm797, %v764, %v780
      %v814 = vsel %vm797, %v734, %v750
      %v815 = vsel %vm797, %v736, %v752
      %v816 = vsel %vm797, %v738, %v754
      %v817 = vsel %vm797, %v740, %v756
      %v818 = vsel %vm797, %v742, %v758
      %v819 = vsel %vm797, %v744, %v760
      %v820 = vsel %vm797, %v746, %v762
      %v821 = vsel %vm797, %v748, %v764
      %v822 = vsel %vm797, %v782, %v734
      %v823 = vsel %vm797, %v784, %v736
      %v824 = vsel %vm797, %v786, %v738
      %v825 = vsel %vm797, %v788, %v740
      %v826 = vsel %vm797, %v790, %v742
      %v827 = vsel %vm797, %v792, %v744
      %v828 = vsel %vm797, %v794, %v746
      %v829 = vsel %vm797, %v796, %v748
      %s830 = scalar_lea.vmem %s2, 4
      %v831 = vld [vmem:[%s830] sm:$0xf]
      %v833 = vlaneseq
      %v834 = vshrl.u32 %v833, 7
      %v835 = vsub.s32 0, %v834
      %v836 = vrot.slane %v831, %v835
      %v837 = vlaneseq
      %v838 = vshrl.u32 %v837, 7
      %v839 = vsub.s32 1, %v838
      %v840 = vrot.slane %v831, %v839
      %v841 = vlaneseq
      %v842 = vshrl.u32 %v841, 7
      %v843 = vsub.s32 2, %v842
      %v844 = vrot.slane %v831, %v843
      %v845 = vlaneseq
      %v846 = vshrl.u32 %v845, 7
      %v847 = vsub.s32 3, %v846
      %v848 = vrot.slane %v831, %v847
      %v853 = vmul.f32 %v822, %v836
      %v854 = vmul.f32 %v814, %v840
      %v855 = vmul.f32 %v806, %v844
      %v856 = vmul.f32 %v798, %v848
      %v857 = vmul.f32 %v823, %v836
      %v858 = vmul.f32 %v815, %v840
      %v859 = vmul.f32 %v807, %v844
      %v860 = vmul.f32 %v799, %v848
      %v861 = vmul.f32 %v824, %v836
      %v862 = vmul.f32 %v816, %v840
      %v863 = vmul.f32 %v808, %v844
      %v864 = vmul.f32 %v800, %v848
      %v865 = vmul.f32 %v825, %v836
      %v866 = vmul.f32 %v817, %v840
      %v867 = vmul.f32 %v809, %v844
      %v868 = vmul.f32 %v801, %v848
      %v869 = vmul.f32 %v826, %v836
      %v870 = vmul.f32 %v818, %v840
      %v871 = vmul.f32 %v810, %v844
      %v872 = vmul.f32 %v802, %v848
      %v873 = vmul.f32 %v827, %v836
      %v874 = vmul.f32 %v819, %v840
      %v875 = vmul.f32 %v811, %v844
      %v876 = vmul.f32 %v803, %v848
      %v877 = vmul.f32 %v828, %v836
      %v878 = vmul.f32 %v820, %v840
      %v879 = vmul.f32 %v812, %v844
      %v880 = vmul.f32 %v804, %v848
      %v881 = vmul.f32 %v829, %v836
      %v882 = vmul.f32 %v821, %v840
      %v883 = vmul.f32 %v813, %v844
      %v884 = vmul.f32 %v805, %v848
      %v885 = vpack.c.bf16 %v857, %v853
      %v886 = vpack.c.bf16 %v858, %v854
      %v887 = vpack.c.bf16 %v859, %v855
      %v888 = vpack.c.bf16 %v860, %v856
      %v889 = vpack.c.bf16 %v865, %v861
      %v890 = vpack.c.bf16 %v866, %v862
      %v891 = vpack.c.bf16 %v867, %v863
      %v892 = vpack.c.bf16 %v868, %v864
      %v893 = vpack.c.bf16 %v873, %v869
      %v894 = vpack.c.bf16 %v874, %v870
      %v895 = vpack.c.bf16 %v875, %v871
      %v896 = vpack.c.bf16 %v876, %v872
      %v897 = vpack.c.bf16 %v881, %v877
      %v898 = vpack.c.bf16 %v882, %v878
      %v899 = vpack.c.bf16 %v883, %v879
      %v900 = vpack.c.bf16 %v884, %v880
      %901 = vst [vmem:[#allocation4 + $0x80] sm:$0xff] %v885
      %902 = vst [vmem:[#allocation4 + $0x88] sm:$0xff] %v886
      %903 = vst [vmem:[#allocation4 + $0x90] sm:$0xff] %v887
      %904 = vst [vmem:[#allocation4 + $0x98] sm:$0xff] %v888
      %905 = vst [vmem:[#allocation4 + $0xa0] sm:$0xff] %v889
      %906 = vst [vmem:[#allocation4 + $0xa8] sm:$0xff] %v890
      %907 = vst [vmem:[#allocation4 + $0xb0] sm:$0xff] %v891
      %908 = vst [vmem:[#allocation4 + $0xb8] sm:$0xff] %v892
      %909 = vst [vmem:[#allocation4 + $0xc0] sm:$0xff] %v893
      %910 = vst [vmem:[#allocation4 + $0xc8] sm:$0xff] %v894
      %911 = vst [vmem:[#allocation4 + $0xd0] sm:$0xff] %v895
      %912 = vst [vmem:[#allocation4 + $0xd8] sm:$0xff] %v896
      %913 = vst [vmem:[#allocation4 + $0xe0] sm:$0xff] %v897
      %914 = vst [vmem:[#allocation4 + $0xe8] sm:$0xff] %v898
      %915 = vst [vmem:[#allocation4 + $0xf0] sm:$0xff] %v899
      %916 = vst [vmem:[#allocation4 + $0xf8] sm:$0xff] %v900
      %v917 = vld [vmem:[#allocation2] sm:$0xff]
      %v918 = vld [vmem:[#allocation2 + $0x8] sm:$0xff]
      %v919 = vld [vmem:[#allocation2 + $0x10] sm:$0xff]
      %v920 = vld [vmem:[#allocation2 + $0x18] sm:$0xff]
      %v921 = vld [vmem:[#allocation2 + $0x20] sm:$0xff]
      %v922 = vld [vmem:[#allocation2 + $0x28] sm:$0xff]
      %v923 = vld [vmem:[#allocation2 + $0x30] sm:$0xff]
      %v924 = vld [vmem:[#allocation2 + $0x38] sm:$0xff]
      %v925 = vld [vmem:[#allocation2 + $0x40] sm:$0xff]
      %v926 = vld [vmem:[#allocation2 + $0x48] sm:$0xff]
      %v927 = vld [vmem:[#allocation2 + $0x50] sm:$0xff]
      %v928 = vld [vmem:[#allocation2 + $0x58] sm:$0xff]
      %v929 = vld [vmem:[#allocation2 + $0x60] sm:$0xff]
      %v930 = vld [vmem:[#allocation2 + $0x68] sm:$0xff]
      %v931 = vld [vmem:[#allocation2 + $0x70] sm:$0xff]
      %v932 = vld [vmem:[#allocation2 + $0x78] sm:$0xff]
      %v933 = vld [vmem:[#allocation2 + $0x80] sm:$0xff]
      %v934 = vld [vmem:[#allocation2 + $0x88] sm:$0xff]
      %v935 = vld [vmem:[#allocation2 + $0x90] sm:$0xff]
      %v936 = vld [vmem:[#allocation2 + $0x98] sm:$0xff]
      %v937 = vld [vmem:[#allocation2 + $0xa0] sm:$0xff]
      %v938 = vld [vmem:[#allocation2 + $0xa8] sm:$0xff]
      %v939 = vld [vmem:[#allocation2 + $0xb0] sm:$0xff]
      %v940 = vld [vmem:[#allocation2 + $0xb8] sm:$0xff]
      %v941 = vld [vmem:[#allocation2 + $0xc0] sm:$0xff]
      %v942 = vld [vmem:[#allocation2 + $0xc8] sm:$0xff]
      %v943 = vld [vmem:[#allocation2 + $0xd0] sm:$0xff]
      %v944 = vld [vmem:[#allocation2 + $0xd8] sm:$0xff]
      %v945 = vld [vmem:[#allocation2 + $0xe0] sm:$0xff]
      %v946 = vld [vmem:[#allocation2 + $0xe8] sm:$0xff]
      %v947 = vld [vmem:[#allocation2 + $0xf0] sm:$0xff]
      %v948 = vld [vmem:[#allocation2 + $0xf8] sm:$0xff]
      %949 = vrot.lane.b32.xlu0 %v917, 15
      %v950 = vpop.permute.xlu0 %949
      %951 = vrot.lane.b32.xlu0 %v921, 15
      %v952 = vpop.permute.xlu0 %951
      %953 = vrot.lane.b32.xlu0 %v925, 15
      %v954 = vpop.permute.xlu0 %953
      %955 = vrot.lane.b32.xlu0 %v929, 15
      %v956 = vpop.permute.xlu0 %955
      %957 = vrot.lane.b32.xlu0 %v933, 15
      %v958 = vpop.permute.xlu0 %957
      %959 = vrot.lane.b32.xlu0 %v937, 15
      %v960 = vpop.permute.xlu0 %959
      %961 = vrot.lane.b32.xlu0 %v941, 15
      %v962 = vpop.permute.xlu0 %961
      %963 = vrot.lane.b32.xlu0 %v945, 15
      %v964 = vpop.permute.xlu0 %963
      %965 = vrot.lane.b32.xlu0 %v918, 15
      %v966 = vpop.permute.xlu0 %965
      %967 = vrot.lane.b32.xlu0 %v922, 15
      %v968 = vpop.permute.xlu0 %967
      %969 = vrot.lane.b32.xlu0 %v926, 15
      %v970 = vpop.permute.xlu0 %969
      %971 = vrot.lane.b32.xlu0 %v930, 15
      %v972 = vpop.permute.xlu0 %971
      %973 = vrot.lane.b32.xlu0 %v934, 15
      %v974 = vpop.permute.xlu0 %973
      %975 = vrot.lane.b32.xlu0 %v938, 15
      %v976 = vpop.permute.xlu0 %975
      %977 = vrot.lane.b32.xlu0 %v942, 15
      %v978 = vpop.permute.xlu0 %977
      %979 = vrot.lane.b32.xlu0 %v946, 15
      %v980 = vpop.permute.xlu0 %979
      %981 = vrot.lane.b32.xlu0 %v919, 15
      %v982 = vpop.permute.xlu0 %981
      %983 = vrot.lane.b32.xlu0 %v923, 15
      %v984 = vpop.permute.xlu0 %983
      %985 = vrot.lane.b32.xlu0 %v927, 15
      %v986 = vpop.permute.xlu0 %985
      %987 = vrot.lane.b32.xlu0 %v931, 15
      %v988 = vpop.permute.xlu0 %987
      %989 = vrot.lane.b32.xlu0 %v935, 15
      %v990 = vpop.permute.xlu0 %989
      %991 = vrot.lane.b32.xlu0 %v939, 15
      %v992 = vpop.permute.xlu0 %991
      %993 = vrot.lane.b32.xlu0 %v943, 15
      %v994 = vpop.permute.xlu0 %993
      %995 = vrot.lane.b32.xlu0 %v947, 15
      %v996 = vpop.permute.xlu0 %995
      %997 = vrot.lane.b32.xlu0 %v920, 15
      %v998 = vpop.permute.xlu0 %997
      %999 = vrot.lane.b32.xlu0 %v924, 15
      %v1000 = vpop.permute.xlu0 %999
      %1001 = vrot.lane.b32.xlu0 %v928, 15
      %v1002 = vpop.permute.xlu0 %1001
      %1003 = vrot.lane.b32.xlu0 %v932, 15
      %v1004 = vpop.permute.xlu0 %1003
      %1005 = vrot.lane.b32.xlu0 %v936, 15
      %v1006 = vpop.permute.xlu0 %1005
      %1007 = vrot.lane.b32.xlu0 %v940, 15
      %v1008 = vpop.permute.xlu0 %1007
      %1009 = vrot.lane.b32.xlu0 %v944, 15
      %v1010 = vpop.permute.xlu0 %1009
      %1011 = vrot.lane.b32.xlu0 %v948, 15
      %v1012 = vpop.permute.xlu0 %1011
      %vm1013 = vcmp.lt.s32.totalorder %v581, 15
      %v1014 = vsel %vm1013, %v982, %v998
      %v1015 = vsel %vm1013, %v984, %v1000
      %v1016 = vsel %vm1013, %v986, %v1002
      %v1017 = vsel %vm1013, %v988, %v1004
      %v1018 = vsel %vm1013, %v990, %v1006
      %v1019 = vsel %vm1013, %v992, %v1008
      %v1020 = vsel %vm1013, %v994, %v1010
      %v1021 = vsel %vm1013, %v996, %v1012
      %v1022 = vsel %vm1013, %v966, %v982
      %v1023 = vsel %vm1013, %v968, %v984
      %v1024 = vsel %vm1013, %v970, %v986
      %v1025 = vsel %vm1013, %v972, %v988
      %v1026 = vsel %vm1013, %v974, %v990
      %v1027 = vsel %vm1013, %v976, %v992
      %v1028 = vsel %vm1013, %v978, %v994
      %v1029 = vsel %vm1013, %v980, %v996
      %v1030 = vsel %vm1013, %v950, %v966
      %v1031 = vsel %vm1013, %v952, %v968
      %v1032 = vsel %vm1013, %v954, %v970
      %v1033 = vsel %vm1013, %v956, %v972
      %v1034 = vsel %vm1013, %v958, %v974
      %v1035 = vsel %vm1013, %v960, %v976
      %v1036 = vsel %vm1013, %v962, %v978
      %v1037 = vsel %vm1013, %v964, %v980
      %v1038 = vsel %vm1013, %v998, %v950
      %v1039 = vsel %vm1013, %v1000, %v952
      %v1040 = vsel %vm1013, %v1002, %v954
      %v1041 = vsel %vm1013, %v1004, %v956
      %v1042 = vsel %vm1013, %v1006, %v958
      %v1043 = vsel %vm1013, %v1008, %v960
      %v1044 = vsel %vm1013, %v1010, %v962
      %v1045 = vsel %vm1013, %v1012, %v964
      %s1046 = scalar_lea.vmem %s2, 8
      %v1047 = vld [vmem:[%s1046] sm:$0xf]
      %v1049 = vlaneseq
      %v1050 = vshrl.u32 %v1049, 7
      %v1051 = vsub.s32 0, %v1050
      %v1052 = vrot.slane %v1047, %v1051
      %v1053 = vlaneseq
      %v1054 = vshrl.u32 %v1053, 7
      %v1055 = vsub.s32 1, %v1054
      %v1056 = vrot.slane %v1047, %v1055
      %v1057 = vlaneseq
      %v1058 = vshrl.u32 %v1057, 7
      %v1059 = vsub.s32 2, %v1058
      %v1060 = vrot.slane %v1047, %v1059
      %v1061 = vlaneseq
      %v1062 = vshrl.u32 %v1061, 7
      %v1063 = vsub.s32 3, %v1062
      %v1064 = vrot.slane %v1047, %v1063
      %v1069 = vmul.f32 %v1038, %v1052
      %v1070 = vmul.f32 %v1030, %v1056
      %v1071 = vmul.f32 %v1022, %v1060
      %v1072 = vmul.f32 %v1014, %v1064
      %v1073 = vmul.f32 %v1039, %v1052
      %v1074 = vmul.f32 %v1031, %v1056
      %v1075 = vmul.f32 %v1023, %v1060
      %v1076 = vmul.f32 %v1015, %v1064
      %v1077 = vmul.f32 %v1040, %v1052
      %v1078 = vmul.f32 %v1032, %v1056
      %v1079 = vmul.f32 %v1024, %v1060
      %v1080 = vmul.f32 %v1016, %v1064
      %v1081 = vmul.f32 %v1041, %v1052
      %v1082 = vmul.f32 %v1033, %v1056
      %v1083 = vmul.f32 %v1025, %v1060
      %v1084 = vmul.f32 %v1017, %v1064
      %v1085 = vmul.f32 %v1042, %v1052
      %v1086 = vmul.f32 %v1034, %v1056
      %v1087 = vmul.f32 %v1026, %v1060
      %v1088 = vmul.f32 %v1018, %v1064
      %v1089 = vmul.f32 %v1043, %v1052
      %v1090 = vmul.f32 %v1035, %v1056
      %v1091 = vmul.f32 %v1027, %v1060
      %v1092 = vmul.f32 %v1019, %v1064
      %v1093 = vmul.f32 %v1044, %v1052
      %v1094 = vmul.f32 %v1036, %v1056
      %v1095 = vmul.f32 %v1028, %v1060
      %v1096 = vmul.f32 %v1020, %v1064
      %v1097 = vmul.f32 %v1045, %v1052
      %v1098 = vmul.f32 %v1037, %v1056
      %v1099 = vmul.f32 %v1029, %v1060
      %v1100 = vmul.f32 %v1021, %v1064
      %v1101 = vpack.c.bf16 %v1073, %v1069
      %v1102 = vpack.c.bf16 %v1074, %v1070
      %v1103 = vpack.c.bf16 %v1075, %v1071
      %v1104 = vpack.c.bf16 %v1076, %v1072
      %v1105 = vpack.c.bf16 %v1081, %v1077
      %v1106 = vpack.c.bf16 %v1082, %v1078
      %v1107 = vpack.c.bf16 %v1083, %v1079
      %v1108 = vpack.c.bf16 %v1084, %v1080
      %v1109 = vpack.c.bf16 %v1089, %v1085
      %v1110 = vpack.c.bf16 %v1090, %v1086
      %v1111 = vpack.c.bf16 %v1091, %v1087
      %v1112 = vpack.c.bf16 %v1092, %v1088
      %v1113 = vpack.c.bf16 %v1097, %v1093
      %v1114 = vpack.c.bf16 %v1098, %v1094
      %v1115 = vpack.c.bf16 %v1099, %v1095
      %v1116 = vpack.c.bf16 %v1100, %v1096
      %1117 = vst [vmem:[#allocation4 + $0x100] sm:$0xff] %v1101
      %1118 = vst [vmem:[#allocation4 + $0x108] sm:$0xff] %v1102
      %1119 = vst [vmem:[#allocation4 + $0x110] sm:$0xff] %v1103
      %1120 = vst [vmem:[#allocation4 + $0x118] sm:$0xff] %v1104
      %1121 = vst [vmem:[#allocation4 + $0x120] sm:$0xff] %v1105
      %1122 = vst [vmem:[#allocation4 + $0x128] sm:$0xff] %v1106
      %1123 = vst [vmem:[#allocation4 + $0x130] sm:$0xff] %v1107
      %1124 = vst [vmem:[#allocation4 + $0x138] sm:$0xff] %v1108
      %1125 = vst [vmem:[#allocation4 + $0x140] sm:$0xff] %v1109
      %1126 = vst [vmem:[#allocation4 + $0x148] sm:$0xff] %v1110
      %1127 = vst [vmem:[#allocation4 + $0x150] sm:$0xff] %v1111
      %1128 = vst [vmem:[#allocation4 + $0x158] sm:$0xff] %v1112
      %1129 = vst [vmem:[#allocation4 + $0x160] sm:$0xff] %v1113
      %1130 = vst [vmem:[#allocation4 + $0x168] sm:$0xff] %v1114
      %1131 = vst [vmem:[#allocation4 + $0x170] sm:$0xff] %v1115
      %1132 = vst [vmem:[#allocation4 + $0x178] sm:$0xff] %v1116
      %v1133 = vld [vmem:[#allocation2] sm:$0xff]
      %v1134 = vld [vmem:[#allocation2 + $0x8] sm:$0xff]
      %v1135 = vld [vmem:[#allocation2 + $0x10] sm:$0xff]
      %v1136 = vld [vmem:[#allocation2 + $0x18] sm:$0xff]
      %v1137 = vld [vmem:[#allocation2 + $0x20] sm:$0xff]
      %v1138 = vld [vmem:[#allocation2 + $0x28] sm:$0xff]
      %v1139 = vld [vmem:[#allocation2 + $0x30] sm:$0xff]
      %v1140 = vld [vmem:[#allocation2 + $0x38] sm:$0xff]
      %v1141 = vld [vmem:[#allocation2 + $0x40] sm:$0xff]
      %v1142 = vld [vmem:[#allocation2 + $0x48] sm:$0xff]
      %v1143 = vld [vmem:[#allocation2 + $0x50] sm:$0xff]
      %v1144 = vld [vmem:[#allocation2 + $0x58] sm:$0xff]
      %v1145 = vld [vmem:[#allocation2 + $0x60] sm:$0xff]
      %v1146 = vld [vmem:[#allocation2 + $0x68] sm:$0xff]
      %v1147 = vld [vmem:[#allocation2 + $0x70] sm:$0xff]
      %v1148 = vld [vmem:[#allocation2 + $0x78] sm:$0xff]
      %v1149 = vld [vmem:[#allocation2 + $0x80] sm:$0xff]
      %v1150 = vld [vmem:[#allocation2 + $0x88] sm:$0xff]
      %v1151 = vld [vmem:[#allocation2 + $0x90] sm:$0xff]
      %v1152 = vld [vmem:[#allocation2 + $0x98] sm:$0xff]
      %v1153 = vld [vmem:[#allocation2 + $0xa0] sm:$0xff]
      %v1154 = vld [vmem:[#allocation2 + $0xa8] sm:$0xff]
      %v1155 = vld [vmem:[#allocation2 + $0xb0] sm:$0xff]
      %v1156 = vld [vmem:[#allocation2 + $0xb8] sm:$0xff]
      %v1157 = vld [vmem:[#allocation2 + $0xc0] sm:$0xff]
      %v1158 = vld [vmem:[#allocation2 + $0xc8] sm:$0xff]
      %v1159 = vld [vmem:[#allocation2 + $0xd0] sm:$0xff]
      %v1160 = vld [vmem:[#allocation2 + $0xd8] sm:$0xff]
      %v1161 = vld [vmem:[#allocation2 + $0xe0] sm:$0xff]
      %v1162 = vld [vmem:[#allocation2 + $0xe8] sm:$0xff]
      %v1163 = vld [vmem:[#allocation2 + $0xf0] sm:$0xff]
      %v1164 = vld [vmem:[#allocation2 + $0xf8] sm:$0xff]
      %1165 = vrot.lane.b32.xlu0 %v1133, 1
      %v1166 = vpop.permute.xlu0 %1165
      %1167 = vrot.lane.b32.xlu0 %v1137, 1
      %v1168 = vpop.permute.xlu0 %1167
      %1169 = vrot.lane.b32.xlu0 %v1141, 1
      %v1170 = vpop.permute.xlu0 %1169
      %1171 = vrot.lane.b32.xlu0 %v1145, 1
      %v1172 = vpop.permute.xlu0 %1171
      %1173 = vrot.lane.b32.xlu0 %v1149, 1
      %v1174 = vpop.permute.xlu0 %1173
      %1175 = vrot.lane.b32.xlu0 %v1153, 1
      %v1176 = vpop.permute.xlu0 %1175
      %1177 = vrot.lane.b32.xlu0 %v1157, 1
      %v1178 = vpop.permute.xlu0 %1177
      %1179 = vrot.lane.b32.xlu0 %v1161, 1
      %v1180 = vpop.permute.xlu0 %1179
      %1181 = vrot.lane.b32.xlu0 %v1134, 1
      %v1182 = vpop.permute.xlu0 %1181
      %1183 = vrot.lane.b32.xlu0 %v1138, 1
      %v1184 = vpop.permute.xlu0 %1183
      %1185 = vrot.lane.b32.xlu0 %v1142, 1
      %v1186 = vpop.permute.xlu0 %1185
      %1187 = vrot.lane.b32.xlu0 %v1146, 1
      %v1188 = vpop.permute.xlu0 %1187
      %1189 = vrot.lane.b32.xlu0 %v1150, 1
      %v1190 = vpop.permute.xlu0 %1189
      %1191 = vrot.lane.b32.xlu0 %v1154, 1
      %v1192 = vpop.permute.xlu0 %1191
      %1193 = vrot.lane.b32.xlu0 %v1158, 1
      %v1194 = vpop.permute.xlu0 %1193
      %1195 = vrot.lane.b32.xlu0 %v1162, 1
      %v1196 = vpop.permute.xlu0 %1195
      %1197 = vrot.lane.b32.xlu0 %v1135, 1
      %v1198 = vpop.permute.xlu0 %1197
      %1199 = vrot.lane.b32.xlu0 %v1139, 1
      %v1200 = vpop.permute.xlu0 %1199
      %1201 = vrot.lane.b32.xlu0 %v1143, 1
      %v1202 = vpop.permute.xlu0 %1201
      %1203 = vrot.lane.b32.xlu0 %v1147, 1
      %v1204 = vpop.permute.xlu0 %1203
      %1205 = vrot.lane.b32.xlu0 %v1151, 1
      %v1206 = vpop.permute.xlu0 %1205
      %1207 = vrot.lane.b32.xlu0 %v1155, 1
      %v1208 = vpop.permute.xlu0 %1207
      %1209 = vrot.lane.b32.xlu0 %v1159, 1
      %v1210 = vpop.permute.xlu0 %1209
      %1211 = vrot.lane.b32.xlu0 %v1163, 1
      %v1212 = vpop.permute.xlu0 %1211
      %1213 = vrot.lane.b32.xlu0 %v1136, 1
      %v1214 = vpop.permute.xlu0 %1213
      %1215 = vrot.lane.b32.xlu0 %v1140, 1
      %v1216 = vpop.permute.xlu0 %1215
      %1217 = vrot.lane.b32.xlu0 %v1144, 1
      %v1218 = vpop.permute.xlu0 %1217
      %1219 = vrot.lane.b32.xlu0 %v1148, 1
      %v1220 = vpop.permute.xlu0 %1219
      %1221 = vrot.lane.b32.xlu0 %v1152, 1
      %v1222 = vpop.permute.xlu0 %1221
      %1223 = vrot.lane.b32.xlu0 %v1156, 1
      %v1224 = vpop.permute.xlu0 %1223
      %1225 = vrot.lane.b32.xlu0 %v1160, 1
      %v1226 = vpop.permute.xlu0 %1225
      %1227 = vrot.lane.b32.xlu0 %v1164, 1
      %v1228 = vpop.permute.xlu0 %1227
      %vm1229 = vcmp.lt.s32.totalorder %v581, 1
      %v1230 = vsel %vm1229, %v1198, %v1214
      %v1231 = vsel %vm1229, %v1200, %v1216
      %v1232 = vsel %vm1229, %v1202, %v1218
      %v1233 = vsel %vm1229, %v1204, %v1220
      %v1234 = vsel %vm1229, %v1206, %v1222
      %v1235 = vsel %vm1229, %v1208, %v1224
      %v1236 = vsel %vm1229, %v1210, %v1226
      %v1237 = vsel %vm1229, %v1212, %v1228
      %v1238 = vsel %vm1229, %v1182, %v1198
      %v1239 = vsel %vm1229, %v1184, %v1200
      %v1240 = vsel %vm1229, %v1186, %v1202
      %v1241 = vsel %vm1229, %v1188, %v1204
      %v1242 = vsel %vm1229, %v1190, %v1206
      %v1243 = vsel %vm1229, %v1192, %v1208
      %v1244 = vsel %vm1229, %v1194, %v1210
      %v1245 = vsel %vm1229, %v1196, %v1212
      %v1246 = vsel %vm1229, %v1166, %v1182
      %v1247 = vsel %vm1229, %v1168, %v1184
      %v1248 = vsel %vm1229, %v1170, %v1186
      %v1249 = vsel %vm1229, %v1172, %v1188
      %v1250 = vsel %vm1229, %v1174, %v1190
      %v1251 = vsel %vm1229, %v1176, %v1192
      %v1252 = vsel %vm1229, %v1178, %v1194
      %v1253 = vsel %vm1229, %v1180, %v1196
      %v1254 = vsel %vm1229, %v1214, %v1166
      %v1255 = vsel %vm1229, %v1216, %v1168
      %v1256 = vsel %vm1229, %v1218, %v1170
      %v1257 = vsel %vm1229, %v1220, %v1172
      %v1258 = vsel %vm1229, %v1222, %v1174
      %v1259 = vsel %vm1229, %v1224, %v1176
      %v1260 = vsel %vm1229, %v1226, %v1178
      %v1261 = vsel %vm1229, %v1228, %v1180
      %s1262 = scalar_lea.vmem %s2, 12
      %v1263 = vld [vmem:[%s1262] sm:$0xf]
      %v1265 = vlaneseq
      %v1266 = vshrl.u32 %v1265, 7
      %v1267 = vsub.s32 0, %v1266
      %v1268 = vrot.slane %v1263, %v1267
      %v1269 = vlaneseq
      %v1270 = vshrl.u32 %v1269, 7
      %v1271 = vsub.s32 1, %v1270
      %v1272 = vrot.slane %v1263, %v1271
      %v1273 = vlaneseq
      %v1274 = vshrl.u32 %v1273, 7
      %v1275 = vsub.s32 2, %v1274
      %v1276 = vrot.slane %v1263, %v1275
      %v1277 = vlaneseq
      %v1278 = vshrl.u32 %v1277, 7
      %v1279 = vsub.s32 3, %v1278
      %v1280 = vrot.slane %v1263, %v1279
      %v1285 = vmul.f32 %v1254, %v1268
      %v1286 = vmul.f32 %v1246, %v1272
      %v1287 = vmul.f32 %v1238, %v1276
      %v1288 = vmul.f32 %v1230, %v1280
      %v1289 = vmul.f32 %v1255, %v1268
      %v1290 = vmul.f32 %v1247, %v1272
      %v1291 = vmul.f32 %v1239, %v1276
      %v1292 = vmul.f32 %v1231, %v1280
      %v1293 = vmul.f32 %v1256, %v1268
      %v1294 = vmul.f32 %v1248, %v1272
      %v1295 = vmul.f32 %v1240, %v1276
      %v1296 = vmul.f32 %v1232, %v1280
      %v1297 = vmul.f32 %v1257, %v1268
      %v1298 = vmul.f32 %v1249, %v1272
      %v1299 = vmul.f32 %v1241, %v1276
      %v1300 = vmul.f32 %v1233, %v1280
      %v1301 = vmul.f32 %v1258, %v1268
      %v1302 = vmul.f32 %v1250, %v1272
      %v1303 = vmul.f32 %v1242, %v1276
      %v1304 = vmul.f32 %v1234, %v1280
      %v1305 = vmul.f32 %v1259, %v1268
      %v1306 = vmul.f32 %v1251, %v1272
      %v1307 = vmul.f32 %v1243, %v1276
      %v1308 = vmul.f32 %v1235, %v1280
      %v1309 = vmul.f32 %v1260, %v1268
      %v1310 = vmul.f32 %v1252, %v1272
      %v1311 = vmul.f32 %v1244, %v1276
      %v1312 = vmul.f32 %v1236, %v1280
      %v1313 = vmul.f32 %v1261, %v1268
      %v1314 = vmul.f32 %v1253, %v1272
      %v1315 = vmul.f32 %v1245, %v1276
      %v1316 = vmul.f32 %v1237, %v1280
      %v1317 = vpack.c.bf16 %v1289, %v1285
      %v1318 = vpack.c.bf16 %v1290, %v1286
      %v1319 = vpack.c.bf16 %v1291, %v1287
      %v1320 = vpack.c.bf16 %v1292, %v1288
      %v1321 = vpack.c.bf16 %v1297, %v1293
      %v1322 = vpack.c.bf16 %v1298, %v1294
      %v1323 = vpack.c.bf16 %v1299, %v1295
      %v1324 = vpack.c.bf16 %v1300, %v1296
      %v1325 = vpack.c.bf16 %v1305, %v1301
      %v1326 = vpack.c.bf16 %v1306, %v1302
      %v1327 = vpack.c.bf16 %v1307, %v1303
      %v1328 = vpack.c.bf16 %v1308, %v1304
      %v1329 = vpack.c.bf16 %v1313, %v1309
      %v1330 = vpack.c.bf16 %v1314, %v1310
      %v1331 = vpack.c.bf16 %v1315, %v1311
      %v1332 = vpack.c.bf16 %v1316, %v1312
      %1333 = vst [vmem:[#allocation4 + $0x180] sm:$0xff] %v1317
      %1334 = vst [vmem:[#allocation4 + $0x188] sm:$0xff] %v1318
      %1335 = vst [vmem:[#allocation4 + $0x190] sm:$0xff] %v1319
      %1336 = vst [vmem:[#allocation4 + $0x198] sm:$0xff] %v1320
      %1337 = vst [vmem:[#allocation4 + $0x1a0] sm:$0xff] %v1321
      %1338 = vst [vmem:[#allocation4 + $0x1a8] sm:$0xff] %v1322
      %1339 = vst [vmem:[#allocation4 + $0x1b0] sm:$0xff] %v1323
      %1340 = vst [vmem:[#allocation4 + $0x1b8] sm:$0xff] %v1324
      %1341 = vst [vmem:[#allocation4 + $0x1c0] sm:$0xff] %v1325
      %1342 = vst [vmem:[#allocation4 + $0x1c8] sm:$0xff] %v1326
      %1343 = vst [vmem:[#allocation4 + $0x1d0] sm:$0xff] %v1327
      %1344 = vst [vmem:[#allocation4 + $0x1d8] sm:$0xff] %v1328
      %1345 = vst [vmem:[#allocation4 + $0x1e0] sm:$0xff] %v1329
      %1346 = vst [vmem:[#allocation4 + $0x1e8] sm:$0xff] %v1330
      %1347 = vst [vmem:[#allocation4 + $0x1f0] sm:$0xff] %v1331
      %1348 = vst [vmem:[#allocation4 + $0x1f8] sm:$0xff] %v1332
      %v1349 = vld [vmem:[#allocation2] sm:$0xff]
      %v1350 = vld [vmem:[#allocation2 + $0x8] sm:$0xff]
      %v1351 = vld [vmem:[#allocation2 + $0x10] sm:$0xff]
      %v1352 = vld [vmem:[#allocation2 + $0x18] sm:$0xff]
      %v1353 = vld [vmem:[#allocation2 + $0x20] sm:$0xff]
      %v1354 = vld [vmem:[#allocation2 + $0x28] sm:$0xff]
      %v1355 = vld [vmem:[#allocation2 + $0x30] sm:$0xff]
      %v1356 = vld [vmem:[#allocation2 + $0x38] sm:$0xff]
      %v1357 = vld [vmem:[#allocation2 + $0x40] sm:$0xff]
      %v1358 = vld [vmem:[#allocation2 + $0x48] sm:$0xff]
      %v1359 = vld [vmem:[#allocation2 + $0x50] sm:$0xff]
      %v1360 = vld [vmem:[#allocation2 + $0x58] sm:$0xff]
      %v1361 = vld [vmem:[#allocation2 + $0x60] sm:$0xff]
      %v1362 = vld [vmem:[#allocation2 + $0x68] sm:$0xff]
      %v1363 = vld [vmem:[#allocation2 + $0x70] sm:$0xff]
      %v1364 = vld [vmem:[#allocation2 + $0x78] sm:$0xff]
      %v1365 = vld [vmem:[#allocation2 + $0x80] sm:$0xff]
      %v1366 = vld [vmem:[#allocation2 + $0x88] sm:$0xff]
      %v1367 = vld [vmem:[#allocation2 + $0x90] sm:$0xff]
      %v1368 = vld [vmem:[#allocation2 + $0x98] sm:$0xff]
      %v1369 = vld [vmem:[#allocation2 + $0xa0] sm:$0xff]
      %v1370 = vld [vmem:[#allocation2 + $0xa8] sm:$0xff]
      %v1371 = vld [vmem:[#allocation2 + $0xb0] sm:$0xff]
      %v1372 = vld [vmem:[#allocation2 + $0xb8] sm:$0xff]
      %v1373 = vld [vmem:[#allocation2 + $0xc0] sm:$0xff]
      %v1374 = vld [vmem:[#allocation2 + $0xc8] sm:$0xff]
      %v1375 = vld [vmem:[#allocation2 + $0xd0] sm:$0xff]
      %v1376 = vld [vmem:[#allocation2 + $0xd8] sm:$0xff]
      %v1377 = vld [vmem:[#allocation2 + $0xe0] sm:$0xff]
      %v1378 = vld [vmem:[#allocation2 + $0xe8] sm:$0xff]
      %v1379 = vld [vmem:[#allocation2 + $0xf0] sm:$0xff]
      %v1380 = vld [vmem:[#allocation2 + $0xf8] sm:$0xff]
      %s1381 = scalar_lea.vmem %s2, 16
      %v1382 = vld [vmem:[%s1381] sm:$0xf]
      %v1384 = vlaneseq
      %v1385 = vshrl.u32 %v1384, 7
      %v1386 = vsub.s32 0, %v1385
      %v1387 = vrot.slane %v1382, %v1386
      %v1388 = vlaneseq
      %v1389 = vshrl.u32 %v1388, 7
      %v1390 = vsub.s32 1, %v1389
      %v1391 = vrot.slane %v1382, %v1390
      %v1392 = vlaneseq
      %v1393 = vshrl.u32 %v1392, 7
      %v1394 = vsub.s32 2, %v1393
      %v1395 = vrot.slane %v1382, %v1394
      %v1396 = vlaneseq
      %v1397 = vshrl.u32 %v1396, 7
      %v1398 = vsub.s32 3, %v1397
      %v1399 = vrot.slane %v1382, %v1398
      %v1404 = vmul.f32 %v1349, %v1387
      %v1405 = vmul.f32 %v1350, %v1391
      %v1406 = vmul.f32 %v1351, %v1395
      %v1407 = vmul.f32 %v1352, %v1399
      %v1408 = vmul.f32 %v1353, %v1387
      %v1409 = vmul.f32 %v1354, %v1391
      %v1410 = vmul.f32 %v1355, %v1395
      %v1411 = vmul.f32 %v1356, %v1399
      %v1412 = vmul.f32 %v1357, %v1387
      %v1413 = vmul.f32 %v1358, %v1391
      %v1414 = vmul.f32 %v1359, %v1395
      %v1415 = vmul.f32 %v1360, %v1399
      %v1416 = vmul.f32 %v1361, %v1387
      %v1417 = vmul.f32 %v1362, %v1391
      %v1418 = vmul.f32 %v1363, %v1395
      %v1419 = vmul.f32 %v1364, %v1399
      %v1420 = vmul.f32 %v1365, %v1387
      %v1421 = vmul.f32 %v1366, %v1391
      %v1422 = vmul.f32 %v1367, %v1395
      %v1423 = vmul.f32 %v1368, %v1399
      %v1424 = vmul.f32 %v1369, %v1387
      %v1425 = vmul.f32 %v1370, %v1391
      %v1426 = vmul.f32 %v1371, %v1395
      %v1427 = vmul.f32 %v1372, %v1399
      %v1428 = vmul.f32 %v1373, %v1387
      %v1429 = vmul.f32 %v1374, %v1391
      %v1430 = vmul.f32 %v1375, %v1395
      %v1431 = vmul.f32 %v1376, %v1399
      %v1432 = vmul.f32 %v1377, %v1387
      %v1433 = vmul.f32 %v1378, %v1391
      %v1434 = vmul.f32 %v1379, %v1395
      %v1435 = vmul.f32 %v1380, %v1399
      %v1436 = vpack.c.bf16 %v1408, %v1404
      %v1437 = vpack.c.bf16 %v1409, %v1405
      %v1438 = vpack.c.bf16 %v1410, %v1406
      %v1439 = vpack.c.bf16 %v1411, %v1407
      %v1440 = vpack.c.bf16 %v1416, %v1412
      %v1441 = vpack.c.bf16 %v1417, %v1413
      %v1442 = vpack.c.bf16 %v1418, %v1414
      %v1443 = vpack.c.bf16 %v1419, %v1415
      %v1444 = vpack.c.bf16 %v1424, %v1420
      %v1445 = vpack.c.bf16 %v1425, %v1421
      %v1446 = vpack.c.bf16 %v1426, %v1422
      %v1447 = vpack.c.bf16 %v1427, %v1423
      %v1448 = vpack.c.bf16 %v1432, %v1428
      %v1449 = vpack.c.bf16 %v1433, %v1429
      %v1450 = vpack.c.bf16 %v1434, %v1430
      %v1451 = vpack.c.bf16 %v1435, %v1431
      %1452 = vst [vmem:[#allocation4 + $0x200] sm:$0xff] %v1436
      %1453 = vst [vmem:[#allocation4 + $0x208] sm:$0xff] %v1437
      %1454 = vst [vmem:[#allocation4 + $0x210] sm:$0xff] %v1438
      %1455 = vst [vmem:[#allocation4 + $0x218] sm:$0xff] %v1439
      %1456 = vst [vmem:[#allocation4 + $0x220] sm:$0xff] %v1440
      %1457 = vst [vmem:[#allocation4 + $0x228] sm:$0xff] %v1441
      %1458 = vst [vmem:[#allocation4 + $0x230] sm:$0xff] %v1442
      %1459 = vst [vmem:[#allocation4 + $0x238] sm:$0xff] %v1443
      %1460 = vst [vmem:[#allocation4 + $0x240] sm:$0xff] %v1444
      %1461 = vst [vmem:[#allocation4 + $0x248] sm:$0xff] %v1445
      %1462 = vst [vmem:[#allocation4 + $0x250] sm:$0xff] %v1446
      %1463 = vst [vmem:[#allocation4 + $0x258] sm:$0xff] %v1447
      %1464 = vst [vmem:[#allocation4 + $0x260] sm:$0xff] %v1448
      %1465 = vst [vmem:[#allocation4 + $0x268] sm:$0xff] %v1449
      %1466 = vst [vmem:[#allocation4 + $0x270] sm:$0xff] %v1450
      %1467 = vst [vmem:[#allocation4 + $0x278] sm:$0xff] %v1451
      %v1468 = vld [vmem:[#allocation2] sm:$0xff]
      %v1469 = vld [vmem:[#allocation2 + $0x8] sm:$0xff]
      %v1470 = vld [vmem:[#allocation2 + $0x10] sm:$0xff]
      %v1471 = vld [vmem:[#allocation2 + $0x18] sm:$0xff]
      %v1472 = vld [vmem:[#allocation2 + $0x20] sm:$0xff]
      %v1473 = vld [vmem:[#allocation2 + $0x28] sm:$0xff]
      %v1474 = vld [vmem:[#allocation2 + $0x30] sm:$0xff]
      %v1475 = vld [vmem:[#allocation2 + $0x38] sm:$0xff]
      %v1476 = vld [vmem:[#allocation2 + $0x40] sm:$0xff]
      %v1477 = vld [vmem:[#allocation2 + $0x48] sm:$0xff]
      %v1478 = vld [vmem:[#allocation2 + $0x50] sm:$0xff]
      %v1479 = vld [vmem:[#allocation2 + $0x58] sm:$0xff]
      %v1480 = vld [vmem:[#allocation2 + $0x60] sm:$0xff]
      %v1481 = vld [vmem:[#allocation2 + $0x68] sm:$0xff]
      %v1482 = vld [vmem:[#allocation2 + $0x70] sm:$0xff]
      %v1483 = vld [vmem:[#allocation2 + $0x78] sm:$0xff]
      %v1484 = vld [vmem:[#allocation2 + $0x80] sm:$0xff]
      %v1485 = vld [vmem:[#allocation2 + $0x88] sm:$0xff]
      %v1486 = vld [vmem:[#allocation2 + $0x90] sm:$0xff]
      %v1487 = vld [vmem:[#allocation2 + $0x98] sm:$0xff]
      %v1488 = vld [vmem:[#allocation2 + $0xa0] sm:$0xff]
      %v1489 = vld [vmem:[#allocation2 + $0xa8] sm:$0xff]
      %v1490 = vld [vmem:[#allocation2 + $0xb0] sm:$0xff]
      %v1491 = vld [vmem:[#allocation2 + $0xb8] sm:$0xff]
      %v1492 = vld [vmem:[#allocation2 + $0xc0] sm:$0xff]
      %v1493 = vld [vmem:[#allocation2 + $0xc8] sm:$0xff]
      %v1494 = vld [vmem:[#allocation2 + $0xd0] sm:$0xff]
      %v1495 = vld [vmem:[#allocation2 + $0xd8] sm:$0xff]
      %v1496 = vld [vmem:[#allocation2 + $0xe0] sm:$0xff]
      %v1497 = vld [vmem:[#allocation2 + $0xe8] sm:$0xff]
      %v1498 = vld [vmem:[#allocation2 + $0xf0] sm:$0xff]
      %v1499 = vld [vmem:[#allocation2 + $0xf8] sm:$0xff]
      %1500 = vrot.lane.b32.xlu0 %v1468, 127
      %v1501 = vpop.permute.xlu0 %1500
      %1502 = vrot.lane.b32.xlu0 %v1472, 127
      %v1503 = vpop.permute.xlu0 %1502
      %1504 = vrot.lane.b32.xlu0 %v1476, 127
      %v1505 = vpop.permute.xlu0 %1504
      %1506 = vrot.lane.b32.xlu0 %v1480, 127
      %v1507 = vpop.permute.xlu0 %1506
      %1508 = vrot.lane.b32.xlu0 %v1484, 127
      %v1509 = vpop.permute.xlu0 %1508
      %1510 = vrot.lane.b32.xlu0 %v1488, 127
      %v1511 = vpop.permute.xlu0 %1510
      %1512 = vrot.lane.b32.xlu0 %v1492, 127
      %v1513 = vpop.permute.xlu0 %1512
      %1514 = vrot.lane.b32.xlu0 %v1496, 127
      %v1515 = vpop.permute.xlu0 %1514
      %1516 = vrot.lane.b32.xlu0 %v1469, 127
      %v1517 = vpop.permute.xlu0 %1516
      %1518 = vrot.lane.b32.xlu0 %v1473, 127
      %v1519 = vpop.permute.xlu0 %1518
      %1520 = vrot.lane.b32.xlu0 %v1477, 127
      %v1521 = vpop.permute.xlu0 %1520
      %1522 = vrot.lane.b32.xlu0 %v1481, 127
      %v1523 = vpop.permute.xlu0 %1522
      %1524 = vrot.lane.b32.xlu0 %v1485, 127
      %v1525 = vpop.permute.xlu0 %1524
      %1526 = vrot.lane.b32.xlu0 %v1489, 127
      %v1527 = vpop.permute.xlu0 %1526
      %1528 = vrot.lane.b32.xlu0 %v1493, 127
      %v1529 = vpop.permute.xlu0 %1528
      %1530 = vrot.lane.b32.xlu0 %v1497, 127
      %v1531 = vpop.permute.xlu0 %1530
      %1532 = vrot.lane.b32.xlu0 %v1470, 127
      %v1533 = vpop.permute.xlu0 %1532
      %1534 = vrot.lane.b32.xlu0 %v1474, 127
      %v1535 = vpop.permute.xlu0 %1534
      %1536 = vrot.lane.b32.xlu0 %v1478, 127
      %v1537 = vpop.permute.xlu0 %1536
      %1538 = vrot.lane.b32.xlu0 %v1482, 127
      %v1539 = vpop.permute.xlu0 %1538
      %1540 = vrot.lane.b32.xlu0 %v1486, 127
      %v1541 = vpop.permute.xlu0 %1540
      %1542 = vrot.lane.b32.xlu0 %v1490, 127
      %v1543 = vpop.permute.xlu0 %1542
      %1544 = vrot.lane.b32.xlu0 %v1494, 127
      %v1545 = vpop.permute.xlu0 %1544
      %1546 = vrot.lane.b32.xlu0 %v1498, 127
      %v1547 = vpop.permute.xlu0 %1546
      %1548 = vrot.lane.b32.xlu0 %v1471, 127
      %v1549 = vpop.permute.xlu0 %1548
      %1550 = vrot.lane.b32.xlu0 %v1475, 127
      %v1551 = vpop.permute.xlu0 %1550
      %1552 = vrot.lane.b32.xlu0 %v1479, 127
      %v1553 = vpop.permute.xlu0 %1552
      %1554 = vrot.lane.b32.xlu0 %v1483, 127
      %v1555 = vpop.permute.xlu0 %1554
      %1556 = vrot.lane.b32.xlu0 %v1487, 127
      %v1557 = vpop.permute.xlu0 %1556
      %1558 = vrot.lane.b32.xlu0 %v1491, 127
      %v1559 = vpop.permute.xlu0 %1558
      %1560 = vrot.lane.b32.xlu0 %v1495, 127
      %v1561 = vpop.permute.xlu0 %1560
      %1562 = vrot.lane.b32.xlu0 %v1499, 127
      %v1563 = vpop.permute.xlu0 %1562
      %vm1564 = vcmp.lt.s32.totalorder %v581, 127
      %v1565 = vsel %vm1564, %v1533, %v1549
      %v1566 = vsel %vm1564, %v1535, %v1551
      %v1567 = vsel %vm1564, %v1537, %v1553
      %v1568 = vsel %vm1564, %v1539, %v1555
      %v1569 = vsel %vm1564, %v1541, %v1557
      %v1570 = vsel %vm1564, %v1543, %v1559
      %v1571 = vsel %vm1564, %v1545, %v1561
      %v1572 = vsel %vm1564, %v1547, %v1563
      %v1573 = vsel %vm1564, %v1517, %v1533
      %v1574 = vsel %vm1564, %v1519, %v1535
      %v1575 = vsel %vm1564, %v1521, %v1537
      %v1576 = vsel %vm1564, %v1523, %v1539
      %v1577 = vsel %vm1564, %v1525, %v1541
      %v1578 = vsel %vm1564, %v1527, %v1543
      %v1579 = vsel %vm1564, %v1529, %v1545
      %v1580 = vsel %vm1564, %v1531, %v1547
      %v1581 = vsel %vm1564, %v1501, %v1517
      %v1582 = vsel %vm1564, %v1503, %v1519
      %v1583 = vsel %vm1564, %v1505, %v1521
      %v1584 = vsel %vm1564, %v1507, %v1523
      %v1585 = vsel %vm1564, %v1509, %v1525
      %v1586 = vsel %vm1564, %v1511, %v1527
      %v1587 = vsel %vm1564, %v1513, %v1529
      %v1588 = vsel %vm1564, %v1515, %v1531
      %v1589 = vsel %vm1564, %v1549, %v1501
      %v1590 = vsel %vm1564, %v1551, %v1503
      %v1591 = vsel %vm1564, %v1553, %v1505
      %v1592 = vsel %vm1564, %v1555, %v1507
      %v1593 = vsel %vm1564, %v1557, %v1509
      %v1594 = vsel %vm1564, %v1559, %v1511
      %v1595 = vsel %vm1564, %v1561, %v1513
      %v1596 = vsel %vm1564, %v1563, %v1515
      %s1597 = scalar_lea.vmem %s2, 20
      %v1598 = vld [vmem:[%s1597] sm:$0xf]
      %v1600 = vlaneseq
      %v1601 = vshrl.u32 %v1600, 7
      %v1602 = vsub.s32 0, %v1601
      %v1603 = vrot.slane %v1598, %v1602
      %v1604 = vlaneseq
      %v1605 = vshrl.u32 %v1604, 7
      %v1606 = vsub.s32 1, %v1605
      %v1607 = vrot.slane %v1598, %v1606
      %v1608 = vlaneseq
      %v1609 = vshrl.u32 %v1608, 7
      %v1610 = vsub.s32 2, %v1609
      %v1611 = vrot.slane %v1598, %v1610
      %v1612 = vlaneseq
      %v1613 = vshrl.u32 %v1612, 7
      %v1614 = vsub.s32 3, %v1613
      %v1615 = vrot.slane %v1598, %v1614
      %v1620 = vmul.f32 %v1581, %v1603
      %v1621 = vmul.f32 %v1573, %v1607
      %v1622 = vmul.f32 %v1565, %v1611
      %v1623 = vmul.f32 %v1589, %v1615
      %v1624 = vmul.f32 %v1582, %v1603
      %v1625 = vmul.f32 %v1574, %v1607
      %v1626 = vmul.f32 %v1566, %v1611
      %v1627 = vmul.f32 %v1590, %v1615
      %v1628 = vmul.f32 %v1583, %v1603
      %v1629 = vmul.f32 %v1575, %v1607
      %v1630 = vmul.f32 %v1567, %v1611
      %v1631 = vmul.f32 %v1591, %v1615
      %v1632 = vmul.f32 %v1584, %v1603
      %v1633 = vmul.f32 %v1576, %v1607
      %v1634 = vmul.f32 %v1568, %v1611
      %v1635 = vmul.f32 %v1592, %v1615
      %v1636 = vmul.f32 %v1585, %v1603
      %v1637 = vmul.f32 %v1577, %v1607
      %v1638 = vmul.f32 %v1569, %v1611
      %v1639 = vmul.f32 %v1593, %v1615
      %v1640 = vmul.f32 %v1586, %v1603
      %v1641 = vmul.f32 %v1578, %v1607
      %v1642 = vmul.f32 %v1570, %v1611
      %v1643 = vmul.f32 %v1594, %v1615
      %v1644 = vmul.f32 %v1587, %v1603
      %v1645 = vmul.f32 %v1579, %v1607
      %v1646 = vmul.f32 %v1571, %v1611
      %v1647 = vmul.f32 %v1595, %v1615
      %v1648 = vmul.f32 %v1588, %v1603
      %v1649 = vmul.f32 %v1580, %v1607
      %v1650 = vmul.f32 %v1572, %v1611
      %v1651 = vmul.f32 %v1596, %v1615
      %v1652 = vpack.c.bf16 %v1624, %v1620
      %v1653 = vpack.c.bf16 %v1625, %v1621
      %v1654 = vpack.c.bf16 %v1626, %v1622
      %v1655 = vpack.c.bf16 %v1627, %v1623
      %v1656 = vpack.c.bf16 %v1632, %v1628
      %v1657 = vpack.c.bf16 %v1633, %v1629
      %v1658 = vpack.c.bf16 %v1634, %v1630
      %v1659 = vpack.c.bf16 %v1635, %v1631
      %v1660 = vpack.c.bf16 %v1640, %v1636
      %v1661 = vpack.c.bf16 %v1641, %v1637
      %v1662 = vpack.c.bf16 %v1642, %v1638
      %v1663 = vpack.c.bf16 %v1643, %v1639
      %v1664 = vpack.c.bf16 %v1648, %v1644
      %v1665 = vpack.c.bf16 %v1649, %v1645
      %v1666 = vpack.c.bf16 %v1650, %v1646
      %v1667 = vpack.c.bf16 %v1651, %v1647
      %1668 = vst [vmem:[#allocation4 + $0x280] sm:$0xff] %v1652
      %1669 = vst [vmem:[#allocation4 + $0x288] sm:$0xff] %v1653
      %1670 = vst [vmem:[#allocation4 + $0x290] sm:$0xff] %v1654
      %1671 = vst [vmem:[#allocation4 + $0x298] sm:$0xff] %v1655
      %1672 = vst [vmem:[#allocation4 + $0x2a0] sm:$0xff] %v1656
      %1673 = vst [vmem:[#allocation4 + $0x2a8] sm:$0xff] %v1657
      %1674 = vst [vmem:[#allocation4 + $0x2b0] sm:$0xff] %v1658
      %1675 = vst [vmem:[#allocation4 + $0x2b8] sm:$0xff] %v1659
      %1676 = vst [vmem:[#allocation4 + $0x2c0] sm:$0xff] %v1660
      %1677 = vst [vmem:[#allocation4 + $0x2c8] sm:$0xff] %v1661
      %1678 = vst [vmem:[#allocation4 + $0x2d0] sm:$0xff] %v1662
      %1679 = vst [vmem:[#allocation4 + $0x2d8] sm:$0xff] %v1663
      %1680 = vst [vmem:[#allocation4 + $0x2e0] sm:$0xff] %v1664
      %1681 = vst [vmem:[#allocation4 + $0x2e8] sm:$0xff] %v1665
      %1682 = vst [vmem:[#allocation4 + $0x2f0] sm:$0xff] %v1666
      %1683 = vst [vmem:[#allocation4 + $0x2f8] sm:$0xff] %v1667
      %v1684 = vld [vmem:[#allocation2] sm:$0xff]
      %v1685 = vld [vmem:[#allocation2 + $0x8] sm:$0xff]
      %v1686 = vld [vmem:[#allocation2 + $0x10] sm:$0xff]
      %v1687 = vld [vmem:[#allocation2 + $0x18] sm:$0xff]
      %v1688 = vld [vmem:[#allocation2 + $0x20] sm:$0xff]
      %v1689 = vld [vmem:[#allocation2 + $0x28] sm:$0xff]
      %v1690 = vld [vmem:[#allocation2 + $0x30] sm:$0xff]
      %v1691 = vld [vmem:[#allocation2 + $0x38] sm:$0xff]
      %v1692 = vld [vmem:[#allocation2 + $0x40] sm:$0xff]
      %v1693 = vld [vmem:[#allocation2 + $0x48] sm:$0xff]
      %v1694 = vld [vmem:[#allocation2 + $0x50] sm:$0xff]
      %v1695 = vld [vmem:[#allocation2 + $0x58] sm:$0xff]
      %v1696 = vld [vmem:[#allocation2 + $0x60] sm:$0xff]
      %v1697 = vld [vmem:[#allocation2 + $0x68] sm:$0xff]
      %v1698 = vld [vmem:[#allocation2 + $0x70] sm:$0xff]
      %v1699 = vld [vmem:[#allocation2 + $0x78] sm:$0xff]
      %v1700 = vld [vmem:[#allocation2 + $0x80] sm:$0xff]
      %v1701 = vld [vmem:[#allocation2 + $0x88] sm:$0xff]
      %v1702 = vld [vmem:[#allocation2 + $0x90] sm:$0xff]
      %v1703 = vld [vmem:[#allocation2 + $0x98] sm:$0xff]
      %v1704 = vld [vmem:[#allocation2 + $0xa0] sm:$0xff]
      %v1705 = vld [vmem:[#allocation2 + $0xa8] sm:$0xff]
      %v1706 = vld [vmem:[#allocation2 + $0xb0] sm:$0xff]
      %v1707 = vld [vmem:[#allocation2 + $0xb8] sm:$0xff]
      %v1708 = vld [vmem:[#allocation2 + $0xc0] sm:$0xff]
      %v1709 = vld [vmem:[#allocation2 + $0xc8] sm:$0xff]
      %v1710 = vld [vmem:[#allocation2 + $0xd0] sm:$0xff]
      %v1711 = vld [vmem:[#allocation2 + $0xd8] sm:$0xff]
      %v1712 = vld [vmem:[#allocation2 + $0xe0] sm:$0xff]
      %v1713 = vld [vmem:[#allocation2 + $0xe8] sm:$0xff]
      %v1714 = vld [vmem:[#allocation2 + $0xf0] sm:$0xff]
      %v1715 = vld [vmem:[#allocation2 + $0xf8] sm:$0xff]
      %1716 = vrot.lane.b32.xlu0 %v1684, 113
      %v1717 = vpop.permute.xlu0 %1716
      %1718 = vrot.lane.b32.xlu0 %v1688, 113
      %v1719 = vpop.permute.xlu0 %1718
      %1720 = vrot.lane.b32.xlu0 %v1692, 113
      %v1721 = vpop.permute.xlu0 %1720
      %1722 = vrot.lane.b32.xlu0 %v1696, 113
      %v1723 = vpop.permute.xlu0 %1722
      %1724 = vrot.lane.b32.xlu0 %v1700, 113
      %v1725 = vpop.permute.xlu0 %1724
      %1726 = vrot.lane.b32.xlu0 %v1704, 113
      %v1727 = vpop.permute.xlu0 %1726
      %1728 = vrot.lane.b32.xlu0 %v1708, 113
      %v1729 = vpop.permute.xlu0 %1728
      %1730 = vrot.lane.b32.xlu0 %v1712, 113
      %v1731 = vpop.permute.xlu0 %1730
      %1732 = vrot.lane.b32.xlu0 %v1685, 113
      %v1733 = vpop.permute.xlu0 %1732
      %1734 = vrot.lane.b32.xlu0 %v1689, 113
      %v1735 = vpop.permute.xlu0 %1734
      %1736 = vrot.lane.b32.xlu0 %v1693, 113
      %v1737 = vpop.permute.xlu0 %1736
      %1738 = vrot.lane.b32.xlu0 %v1697, 113
      %v1739 = vpop.permute.xlu0 %1738
      %1740 = vrot.lane.b32.xlu0 %v1701, 113
      %v1741 = vpop.permute.xlu0 %1740
      %1742 = vrot.lane.b32.xlu0 %v1705, 113
      %v1743 = vpop.permute.xlu0 %1742
      %1744 = vrot.lane.b32.xlu0 %v1709, 113
      %v1745 = vpop.permute.xlu0 %1744
      %1746 = vrot.lane.b32.xlu0 %v1713, 113
      %v1747 = vpop.permute.xlu0 %1746
      %1748 = vrot.lane.b32.xlu0 %v1686, 113
      %v1749 = vpop.permute.xlu0 %1748
      %1750 = vrot.lane.b32.xlu0 %v1690, 113
      %v1751 = vpop.permute.xlu0 %1750
      %1752 = vrot.lane.b32.xlu0 %v1694, 113
      %v1753 = vpop.permute.xlu0 %1752
      %1754 = vrot.lane.b32.xlu0 %v1698, 113
      %v1755 = vpop.permute.xlu0 %1754
      %1756 = vrot.lane.b32.xlu0 %v1702, 113
      %v1757 = vpop.permute.xlu0 %1756
      %1758 = vrot.lane.b32.xlu0 %v1706, 113
      %v1759 = vpop.permute.xlu0 %1758
      %1760 = vrot.lane.b32.xlu0 %v1710, 113
      %v1761 = vpop.permute.xlu0 %1760
      %1762 = vrot.lane.b32.xlu0 %v1714, 113
      %v1763 = vpop.permute.xlu0 %1762
      %1764 = vrot.lane.b32.xlu0 %v1687, 113
      %v1765 = vpop.permute.xlu0 %1764
      %1766 = vrot.lane.b32.xlu0 %v1691, 113
      %v1767 = vpop.permute.xlu0 %1766
      %1768 = vrot.lane.b32.xlu0 %v1695, 113
      %v1769 = vpop.permute.xlu0 %1768
      %1770 = vrot.lane.b32.xlu0 %v1699, 113
      %v1771 = vpop.permute.xlu0 %1770
      %1772 = vrot.lane.b32.xlu0 %v1703, 113
      %v1773 = vpop.permute.xlu0 %1772
      %1774 = vrot.lane.b32.xlu0 %v1707, 113
      %v1775 = vpop.permute.xlu0 %1774
      %1776 = vrot.lane.b32.xlu0 %v1711, 113
      %v1777 = vpop.permute.xlu0 %1776
      %1778 = vrot.lane.b32.xlu0 %v1715, 113
      %v1779 = vpop.permute.xlu0 %1778
      %vm1780 = vcmp.lt.s32.totalorder %v581, 113
      %v1781 = vsel %vm1780, %v1749, %v1765
      %v1782 = vsel %vm1780, %v1751, %v1767
      %v1783 = vsel %vm1780, %v1753, %v1769
      %v1784 = vsel %vm1780, %v1755, %v1771
      %v1785 = vsel %vm1780, %v1757, %v1773
      %v1786 = vsel %vm1780, %v1759, %v1775
      %v1787 = vsel %vm1780, %v1761, %v1777
      %v1788 = vsel %vm1780, %v1763, %v1779
      %v1789 = vsel %vm1780, %v1733, %v1749
      %v1790 = vsel %vm1780, %v1735, %v1751
      %v1791 = vsel %vm1780, %v1737, %v1753
      %v1792 = vsel %vm1780, %v1739, %v1755
      %v1793 = vsel %vm1780, %v1741, %v1757
      %v1794 = vsel %vm1780, %v1743, %v1759
      %v1795 = vsel %vm1780, %v1745, %v1761
      %v1796 = vsel %vm1780, %v1747, %v1763
      %v1797 = vsel %vm1780, %v1717, %v1733
      %v1798 = vsel %vm1780, %v1719, %v1735
      %v1799 = vsel %vm1780, %v1721, %v1737
      %v1800 = vsel %vm1780, %v1723, %v1739
      %v1801 = vsel %vm1780, %v1725, %v1741
      %v1802 = vsel %vm1780, %v1727, %v1743
      %v1803 = vsel %vm1780, %v1729, %v1745
      %v1804 = vsel %vm1780, %v1731, %v1747
      %v1805 = vsel %vm1780, %v1765, %v1717
      %v1806 = vsel %vm1780, %v1767, %v1719
      %v1807 = vsel %vm1780, %v1769, %v1721
      %v1808 = vsel %vm1780, %v1771, %v1723
      %v1809 = vsel %vm1780, %v1773, %v1725
      %v1810 = vsel %vm1780, %v1775, %v1727
      %v1811 = vsel %vm1780, %v1777, %v1729
      %v1812 = vsel %vm1780, %v1779, %v1731
      %s1813 = scalar_lea.vmem %s2, 24
      %v1814 = vld [vmem:[%s1813] sm:$0xf]
      %v1816 = vlaneseq
      %v1817 = vshrl.u32 %v1816, 7
      %v1818 = vsub.s32 0, %v1817
      %v1819 = vrot.slane %v1814, %v1818
      %v1820 = vlaneseq
      %v1821 = vshrl.u32 %v1820, 7
      %v1822 = vsub.s32 1, %v1821
      %v1823 = vrot.slane %v1814, %v1822
      %v1824 = vlaneseq
      %v1825 = vshrl.u32 %v1824, 7
      %v1826 = vsub.s32 2, %v1825
      %v1827 = vrot.slane %v1814, %v1826
      %v1828 = vlaneseq
      %v1829 = vshrl.u32 %v1828, 7
      %v1830 = vsub.s32 3, %v1829
      %v1831 = vrot.slane %v1814, %v1830
      %v1836 = vmul.f32 %v1797, %v1819
      %v1837 = vmul.f32 %v1789, %v1823
      %v1838 = vmul.f32 %v1781, %v1827
      %v1839 = vmul.f32 %v1805, %v1831
      %v1840 = vmul.f32 %v1798, %v1819
      %v1841 = vmul.f32 %v1790, %v1823
      %v1842 = vmul.f32 %v1782, %v1827
      %v1843 = vmul.f32 %v1806, %v1831
      %v1844 = vmul.f32 %v1799, %v1819
      %v1845 = vmul.f32 %v1791, %v1823
      %v1846 = vmul.f32 %v1783, %v1827
      %v1847 = vmul.f32 %v1807, %v1831
      %v1848 = vmul.f32 %v1800, %v1819
      %v1849 = vmul.f32 %v1792, %v1823
      %v1850 = vmul.f32 %v1784, %v1827
      %v1851 = vmul.f32 %v1808, %v1831
      %v1852 = vmul.f32 %v1801, %v1819
      %v1853 = vmul.f32 %v1793, %v1823
      %v1854 = vmul.f32 %v1785, %v1827
      %v1855 = vmul.f32 %v1809, %v1831
      %v1856 = vmul.f32 %v1802, %v1819
      %v1857 = vmul.f32 %v1794, %v1823
      %v1858 = vmul.f32 %v1786, %v1827
      %v1859 = vmul.f32 %v1810, %v1831
      %v1860 = vmul.f32 %v1803, %v1819
      %v1861 = vmul.f32 %v1795, %v1823
      %v1862 = vmul.f32 %v1787, %v1827
      %v1863 = vmul.f32 %v1811, %v1831
      %v1864 = vmul.f32 %v1804, %v1819
      %v1865 = vmul.f32 %v1796, %v1823
      %v1866 = vmul.f32 %v1788, %v1827
      %v1867 = vmul.f32 %v1812, %v1831
      %v1868 = vpack.c.bf16 %v1840, %v1836
      %v1869 = vpack.c.bf16 %v1841, %v1837
      %v1870 = vpack.c.bf16 %v1842, %v1838
      %v1871 = vpack.c.bf16 %v1843, %v1839
      %v1872 = vpack.c.bf16 %v1848, %v1844
      %v1873 = vpack.c.bf16 %v1849, %v1845
      %v1874 = vpack.c.bf16 %v1850, %v1846
      %v1875 = vpack.c.bf16 %v1851, %v1847
      %v1876 = vpack.c.bf16 %v1856, %v1852
      %v1877 = vpack.c.bf16 %v1857, %v1853
      %v1878 = vpack.c.bf16 %v1858, %v1854
      %v1879 = vpack.c.bf16 %v1859, %v1855
      %v1880 = vpack.c.bf16 %v1864, %v1860
      %v1881 = vpack.c.bf16 %v1865, %v1861
      %v1882 = vpack.c.bf16 %v1866, %v1862
      %v1883 = vpack.c.bf16 %v1867, %v1863
      %1884 = vst [vmem:[#allocation4 + $0x300] sm:$0xff] %v1868
      %1885 = vst [vmem:[#allocation4 + $0x308] sm:$0xff] %v1869
      %1886 = vst [vmem:[#allocation4 + $0x310] sm:$0xff] %v1870
      %1887 = vst [vmem:[#allocation4 + $0x318] sm:$0xff] %v1871
      %1888 = vst [vmem:[#allocation4 + $0x320] sm:$0xff] %v1872
      %1889 = vst [vmem:[#allocation4 + $0x328] sm:$0xff] %v1873
      %1890 = vst [vmem:[#allocation4 + $0x330] sm:$0xff] %v1874
      %1891 = vst [vmem:[#allocation4 + $0x338] sm:$0xff] %v1875
      %1892 = vst [vmem:[#allocation4 + $0x340] sm:$0xff] %v1876
      %1893 = vst [vmem:[#allocation4 + $0x348] sm:$0xff] %v1877
      %1894 = vst [vmem:[#allocation4 + $0x350] sm:$0xff] %v1878
      %1895 = vst [vmem:[#allocation4 + $0x358] sm:$0xff] %v1879
      %1896 = vst [vmem:[#allocation4 + $0x360] sm:$0xff] %v1880
      %1897 = vst [vmem:[#allocation4 + $0x368] sm:$0xff] %v1881
      %1898 = vst [vmem:[#allocation4 + $0x370] sm:$0xff] %v1882
      %1899 = vst [vmem:[#allocation4 + $0x378] sm:$0xff] %v1883
      %v1900 = vld [vmem:[#allocation2] sm:$0xff]
      %v1901 = vld [vmem:[#allocation2 + $0x8] sm:$0xff]
      %v1902 = vld [vmem:[#allocation2 + $0x10] sm:$0xff]
      %v1903 = vld [vmem:[#allocation2 + $0x18] sm:$0xff]
      %v1904 = vld [vmem:[#allocation2 + $0x20] sm:$0xff]
      %v1905 = vld [vmem:[#allocation2 + $0x28] sm:$0xff]
      %v1906 = vld [vmem:[#allocation2 + $0x30] sm:$0xff]
      %v1907 = vld [vmem:[#allocation2 + $0x38] sm:$0xff]
      %v1908 = vld [vmem:[#allocation2 + $0x40] sm:$0xff]
      %v1909 = vld [vmem:[#allocation2 + $0x48] sm:$0xff]
      %v1910 = vld [vmem:[#allocation2 + $0x50] sm:$0xff]
      %v1911 = vld [vmem:[#allocation2 + $0x58] sm:$0xff]
      %v1912 = vld [vmem:[#allocation2 + $0x60] sm:$0xff]
      %v1913 = vld [vmem:[#allocation2 + $0x68] sm:$0xff]
      %v1914 = vld [vmem:[#allocation2 + $0x70] sm:$0xff]
      %v1915 = vld [vmem:[#allocation2 + $0x78] sm:$0xff]
      %v1916 = vld [vmem:[#allocation2 + $0x80] sm:$0xff]
      %v1917 = vld [vmem:[#allocation2 + $0x88] sm:$0xff]
      %v1918 = vld [vmem:[#allocation2 + $0x90] sm:$0xff]
      %v1919 = vld [vmem:[#allocation2 + $0x98] sm:$0xff]
      %v1920 = vld [vmem:[#allocation2 + $0xa0] sm:$0xff]
      %v1921 = vld [vmem:[#allocation2 + $0xa8] sm:$0xff]
      %v1922 = vld [vmem:[#allocation2 + $0xb0] sm:$0xff]
      %v1923 = vld [vmem:[#allocation2 + $0xb8] sm:$0xff]
      %v1924 = vld [vmem:[#allocation2 + $0xc0] sm:$0xff]
      %v1925 = vld [vmem:[#allocation2 + $0xc8] sm:$0xff]
      %v1926 = vld [vmem:[#allocation2 + $0xd0] sm:$0xff]
      %v1927 = vld [vmem:[#allocation2 + $0xd8] sm:$0xff]
      %v1928 = vld [vmem:[#allocation2 + $0xe0] sm:$0xff]
      %v1929 = vld [vmem:[#allocation2 + $0xe8] sm:$0xff]
      %v1930 = vld [vmem:[#allocation2 + $0xf0] sm:$0xff]
      %v1931 = vld [vmem:[#allocation2 + $0xf8] sm:$0xff]
      %1932 = vrot.lane.b32.xlu0 %v1900, 112
      %v1933 = vpop.permute.xlu0 %1932
      %1934 = vrot.lane.b32.xlu0 %v1904, 112
      %v1935 = vpop.permute.xlu0 %1934
      %1936 = vrot.lane.b32.xlu0 %v1908, 112
      %v1937 = vpop.permute.xlu0 %1936
      %1938 = vrot.lane.b32.xlu0 %v1912, 112
      %v1939 = vpop.permute.xlu0 %1938
      %1940 = vrot.lane.b32.xlu0 %v1916, 112
      %v1941 = vpop.permute.xlu0 %1940
      %1942 = vrot.lane.b32.xlu0 %v1920, 112
      %v1943 = vpop.permute.xlu0 %1942
      %1944 = vrot.lane.b32.xlu0 %v1924, 112
      %v1945 = vpop.permute.xlu0 %1944
      %1946 = vrot.lane.b32.xlu0 %v1928, 112
      %v1947 = vpop.permute.xlu0 %1946
      %1948 = vrot.lane.b32.xlu0 %v1901, 112
      %v1949 = vpop.permute.xlu0 %1948
      %1950 = vrot.lane.b32.xlu0 %v1905, 112
      %v1951 = vpop.permute.xlu0 %1950
      %1952 = vrot.lane.b32.xlu0 %v1909, 112
      %v1953 = vpop.permute.xlu0 %1952
      %1954 = vrot.lane.b32.xlu0 %v1913, 112
      %v1955 = vpop.permute.xlu0 %1954
      %1956 = vrot.lane.b32.xlu0 %v1917, 112
      %v1957 = vpop.permute.xlu0 %1956
      %1958 = vrot.lane.b32.xlu0 %v1921, 112
      %v1959 = vpop.permute.xlu0 %1958
      %1960 = vrot.lane.b32.xlu0 %v1925, 112
      %v1961 = vpop.permute.xlu0 %1960
      %1962 = vrot.lane.b32.xlu0 %v1929, 112
      %v1963 = vpop.permute.xlu0 %1962
      %1964 = vrot.lane.b32.xlu0 %v1902, 112
      %v1965 = vpop.permute.xlu0 %1964
      %1966 = vrot.lane.b32.xlu0 %v1906, 112
      %v1967 = vpop.permute.xlu0 %1966
      %1968 = vrot.lane.b32.xlu0 %v1910, 112
      %v1969 = vpop.permute.xlu0 %1968
      %1970 = vrot.lane.b32.xlu0 %v1914, 112
      %v1971 = vpop.permute.xlu0 %1970
      %1972 = vrot.lane.b32.xlu0 %v1918, 112
      %v1973 = vpop.permute.xlu0 %1972
      %1974 = vrot.lane.b32.xlu0 %v1922, 112
      %v1975 = vpop.permute.xlu0 %1974
      %1976 = vrot.lane.b32.xlu0 %v1926, 112
      %v1977 = vpop.permute.xlu0 %1976
      %1978 = vrot.lane.b32.xlu0 %v1930, 112
      %v1979 = vpop.permute.xlu0 %1978
      %1980 = vrot.lane.b32.xlu0 %v1903, 112
      %v1981 = vpop.permute.xlu0 %1980
      %1982 = vrot.lane.b32.xlu0 %v1907, 112
      %v1983 = vpop.permute.xlu0 %1982
      %1984 = vrot.lane.b32.xlu0 %v1911, 112
      %v1985 = vpop.permute.xlu0 %1984
      %1986 = vrot.lane.b32.xlu0 %v1915, 112
      %v1987 = vpop.permute.xlu0 %1986
      %1988 = vrot.lane.b32.xlu0 %v1919, 112
      %v1989 = vpop.permute.xlu0 %1988
      %1990 = vrot.lane.b32.xlu0 %v1923, 112
      %v1991 = vpop.permute.xlu0 %1990
      %1992 = vrot.lane.b32.xlu0 %v1927, 112
      %v1993 = vpop.permute.xlu0 %1992
      %1994 = vrot.lane.b32.xlu0 %v1931, 112
      %v1995 = vpop.permute.xlu0 %1994
      %vm1996 = vcmp.lt.s32.totalorder %v581, 112
      %v1997 = vsel %vm1996, %v1965, %v1981
      %v1998 = vsel %vm1996, %v1967, %v1983
      %v1999 = vsel %vm1996, %v1969, %v1985
      %v2000 = vsel %vm1996, %v1971, %v1987
      %v2001 = vsel %vm1996, %v1973, %v1989
      %v2002 = vsel %vm1996, %v1975, %v1991
      %v2003 = vsel %vm1996, %v1977, %v1993
      %v2004 = vsel %vm1996, %v1979, %v1995
      %v2005 = vsel %vm1996, %v1949, %v1965
      %v2006 = vsel %vm1996, %v1951, %v1967
      %v2007 = vsel %vm1996, %v1953, %v1969
      %v2008 = vsel %vm1996, %v1955, %v1971
      %v2009 = vsel %vm1996, %v1957, %v1973
      %v2010 = vsel %vm1996, %v1959, %v1975
      %v2011 = vsel %vm1996, %v1961, %v1977
      %v2012 = vsel %vm1996, %v1963, %v1979
      %v2013 = vsel %vm1996, %v1933, %v1949
      %v2014 = vsel %vm1996, %v1935, %v1951
      %v2015 = vsel %vm1996, %v1937, %v1953
      %v2016 = vsel %vm1996, %v1939, %v1955
      %v2017 = vsel %vm1996, %v1941, %v1957
      %v2018 = vsel %vm1996, %v1943, %v1959
      %v2019 = vsel %vm1996, %v1945, %v1961
      %v2020 = vsel %vm1996, %v1947, %v1963
      %v2021 = vsel %vm1996, %v1981, %v1933
      %v2022 = vsel %vm1996, %v1983, %v1935
      %v2023 = vsel %vm1996, %v1985, %v1937
      %v2024 = vsel %vm1996, %v1987, %v1939
      %v2025 = vsel %vm1996, %v1989, %v1941
      %v2026 = vsel %vm1996, %v1991, %v1943
      %v2027 = vsel %vm1996, %v1993, %v1945
      %v2028 = vsel %vm1996, %v1995, %v1947
      %s2029 = scalar_lea.vmem %s2, 28
      %v2030 = vld [vmem:[%s2029] sm:$0xf]
      %v2032 = vlaneseq
      %v2033 = vshrl.u32 %v2032, 7
      %v2034 = vsub.s32 0, %v2033
      %v2035 = vrot.slane %v2030, %v2034
      %v2036 = vlaneseq
      %v2037 = vshrl.u32 %v2036, 7
      %v2038 = vsub.s32 1, %v2037
      %v2039 = vrot.slane %v2030, %v2038
      %v2040 = vlaneseq
      %v2041 = vshrl.u32 %v2040, 7
      %v2042 = vsub.s32 2, %v2041
      %v2043 = vrot.slane %v2030, %v2042
      %v2044 = vlaneseq
      %v2045 = vshrl.u32 %v2044, 7
      %v2046 = vsub.s32 3, %v2045
      %v2047 = vrot.slane %v2030, %v2046
      %v2052 = vmul.f32 %v2013, %v2035
      %v2053 = vmul.f32 %v2005, %v2039
      %v2054 = vmul.f32 %v1997, %v2043
      %v2055 = vmul.f32 %v2021, %v2047
      %v2056 = vmul.f32 %v2014, %v2035
      %v2057 = vmul.f32 %v2006, %v2039
      %v2058 = vmul.f32 %v1998, %v2043
      %v2059 = vmul.f32 %v2022, %v2047
      %v2060 = vmul.f32 %v2015, %v2035
      %v2061 = vmul.f32 %v2007, %v2039
      %v2062 = vmul.f32 %v1999, %v2043
      %v2063 = vmul.f32 %v2023, %v2047
      %v2064 = vmul.f32 %v2016, %v2035
      %v2065 = vmul.f32 %v2008, %v2039
      %v2066 = vmul.f32 %v2000, %v2043
      %v2067 = vmul.f32 %v2024, %v2047
      %v2068 = vmul.f32 %v2017, %v2035
      %v2069 = vmul.f32 %v2009, %v2039
      %v2070 = vmul.f32 %v2001, %v2043
      %v2071 = vmul.f32 %v2025, %v2047
      %v2072 = vmul.f32 %v2018, %v2035
      %v2073 = vmul.f32 %v2010, %v2039
      %v2074 = vmul.f32 %v2002, %v2043
      %v2075 = vmul.f32 %v2026, %v2047
      %v2076 = vmul.f32 %v2019, %v2035
      %v2077 = vmul.f32 %v2011, %v2039
      %v2078 = vmul.f32 %v2003, %v2043
      %v2079 = vmul.f32 %v2027, %v2047
      %v2080 = vmul.f32 %v2020, %v2035
      %v2081 = vmul.f32 %v2012, %v2039
      %v2082 = vmul.f32 %v2004, %v2043
      %v2083 = vmul.f32 %v2028, %v2047
      %v2084 = vpack.c.bf16 %v2056, %v2052
      %v2085 = vpack.c.bf16 %v2057, %v2053
      %v2086 = vpack.c.bf16 %v2058, %v2054
      %v2087 = vpack.c.bf16 %v2059, %v2055
      %v2088 = vpack.c.bf16 %v2064, %v2060
      %v2089 = vpack.c.bf16 %v2065, %v2061
      %v2090 = vpack.c.bf16 %v2066, %v2062
      %v2091 = vpack.c.bf16 %v2067, %v2063
      %v2092 = vpack.c.bf16 %v2072, %v2068
      %v2093 = vpack.c.bf16 %v2073, %v2069
      %v2094 = vpack.c.bf16 %v2074, %v2070
      %v2095 = vpack.c.bf16 %v2075, %v2071
      %v2096 = vpack.c.bf16 %v2080, %v2076
      %v2097 = vpack.c.bf16 %v2081, %v2077
      %v2098 = vpack.c.bf16 %v2082, %v2078
      %v2099 = vpack.c.bf16 %v2083, %v2079
      %2100 = vst [vmem:[#allocation4 + $0x380] sm:$0xff] %v2084
      %2101 = vst [vmem:[#allocation4 + $0x388] sm:$0xff] %v2085
      %2102 = vst [vmem:[#allocation4 + $0x390] sm:$0xff] %v2086
      %2103 = vst [vmem:[#allocation4 + $0x398] sm:$0xff] %v2087
      %2104 = vst [vmem:[#allocation4 + $0x3a0] sm:$0xff] %v2088
      %2105 = vst [vmem:[#allocation4 + $0x3a8] sm:$0xff] %v2089
      %2106 = vst [vmem:[#allocation4 + $0x3b0] sm:$0xff] %v2090
      %2107 = vst [vmem:[#allocation4 + $0x3b8] sm:$0xff] %v2091
      %2108 = vst [vmem:[#allocation4 + $0x3c0] sm:$0xff] %v2092
      %2109 = vst [vmem:[#allocation4 + $0x3c8] sm:$0xff] %v2093
      %2110 = vst [vmem:[#allocation4 + $0x3d0] sm:$0xff] %v2094
      %2111 = vst [vmem:[#allocation4 + $0x3d8] sm:$0xff] %v2095
      %2112 = vst [vmem:[#allocation4 + $0x3e0] sm:$0xff] %v2096
      %2113 = vst [vmem:[#allocation4 + $0x3e8] sm:$0xff] %v2097
      %2114 = vst [vmem:[#allocation4 + $0x3f0] sm:$0xff] %v2098
      %2115 = vst [vmem:[#allocation4 + $0x3f8] sm:$0xff] %v2099
      %v2116 = vld [vmem:[#allocation2] sm:$0xff]
      %v2117 = vld [vmem:[#allocation2 + $0x8] sm:$0xff]
      %v2118 = vld [vmem:[#allocation2 + $0x10] sm:$0xff]
      %v2119 = vld [vmem:[#allocation2 + $0x18] sm:$0xff]
      %v2120 = vld [vmem:[#allocation2 + $0x20] sm:$0xff]
      %v2121 = vld [vmem:[#allocation2 + $0x28] sm:$0xff]
      %v2122 = vld [vmem:[#allocation2 + $0x30] sm:$0xff]
      %v2123 = vld [vmem:[#allocation2 + $0x38] sm:$0xff]
      %v2124 = vld [vmem:[#allocation2 + $0x40] sm:$0xff]
      %v2125 = vld [vmem:[#allocation2 + $0x48] sm:$0xff]
      %v2126 = vld [vmem:[#allocation2 + $0x50] sm:$0xff]
      %v2127 = vld [vmem:[#allocation2 + $0x58] sm:$0xff]
      %v2128 = vld [vmem:[#allocation2 + $0x60] sm:$0xff]
      %v2129 = vld [vmem:[#allocation2 + $0x68] sm:$0xff]
      %v2130 = vld [vmem:[#allocation2 + $0x70] sm:$0xff]
      %v2131 = vld [vmem:[#allocation2 + $0x78] sm:$0xff]
      %v2132 = vld [vmem:[#allocation2 + $0x80] sm:$0xff]
      %v2133 = vld [vmem:[#allocation2 + $0x88] sm:$0xff]
      %v2134 = vld [vmem:[#allocation2 + $0x90] sm:$0xff]
      %v2135 = vld [vmem:[#allocation2 + $0x98] sm:$0xff]
      %v2136 = vld [vmem:[#allocation2 + $0xa0] sm:$0xff]
      %v2137 = vld [vmem:[#allocation2 + $0xa8] sm:$0xff]
      %v2138 = vld [vmem:[#allocation2 + $0xb0] sm:$0xff]
      %v2139 = vld [vmem:[#allocation2 + $0xb8] sm:$0xff]
      %v2140 = vld [vmem:[#allocation2 + $0xc0] sm:$0xff]
      %v2141 = vld [vmem:[#allocation2 + $0xc8] sm:$0xff]
      %v2142 = vld [vmem:[#allocation2 + $0xd0] sm:$0xff]
      %v2143 = vld [vmem:[#allocation2 + $0xd8] sm:$0xff]
      %v2144 = vld [vmem:[#allocation2 + $0xe0] sm:$0xff]
      %v2145 = vld [vmem:[#allocation2 + $0xe8] sm:$0xff]
      %v2146 = vld [vmem:[#allocation2 + $0xf0] sm:$0xff]
      %v2147 = vld [vmem:[#allocation2 + $0xf8] sm:$0xff]
      %2148 = vrot.lane.b32.xlu0 %v2116, 111
      %v2149 = vpop.permute.xlu0 %2148
      %2150 = vrot.lane.b32.xlu0 %v2120, 111
      %v2151 = vpop.permute.xlu0 %2150
      %2152 = vrot.lane.b32.xlu0 %v2124, 111
      %v2153 = vpop.permute.xlu0 %2152
      %2154 = vrot.lane.b32.xlu0 %v2128, 111
      %v2155 = vpop.permute.xlu0 %2154
      %2156 = vrot.lane.b32.xlu0 %v2132, 111
      %v2157 = vpop.permute.xlu0 %2156
      %2158 = vrot.lane.b32.xlu0 %v2136, 111
      %v2159 = vpop.permute.xlu0 %2158
      %2160 = vrot.lane.b32.xlu0 %v2140, 111
      %v2161 = vpop.permute.xlu0 %2160
      %2162 = vrot.lane.b32.xlu0 %v2144, 111
      %v2163 = vpop.permute.xlu0 %2162
      %2164 = vrot.lane.b32.xlu0 %v2117, 111
      %v2165 = vpop.permute.xlu0 %2164
      %2166 = vrot.lane.b32.xlu0 %v2121, 111
      %v2167 = vpop.permute.xlu0 %2166
      %2168 = vrot.lane.b32.xlu0 %v2125, 111
      %v2169 = vpop.permute.xlu0 %2168
      %2170 = vrot.lane.b32.xlu0 %v2129, 111
      %v2171 = vpop.permute.xlu0 %2170
      %2172 = vrot.lane.b32.xlu0 %v2133, 111
      %v2173 = vpop.permute.xlu0 %2172
      %2174 = vrot.lane.b32.xlu0 %v2137, 111
      %v2175 = vpop.permute.xlu0 %2174
      %2176 = vrot.lane.b32.xlu0 %v2141, 111
      %v2177 = vpop.permute.xlu0 %2176
      %2178 = vrot.lane.b32.xlu0 %v2145, 111
      %v2179 = vpop.permute.xlu0 %2178
      %2180 = vrot.lane.b32.xlu0 %v2118, 111
      %v2181 = vpop.permute.xlu0 %2180
      %2182 = vrot.lane.b32.xlu0 %v2122, 111
      %v2183 = vpop.permute.xlu0 %2182
      %2184 = vrot.lane.b32.xlu0 %v2126, 111
      %v2185 = vpop.permute.xlu0 %2184
      %2186 = vrot.lane.b32.xlu0 %v2130, 111
      %v2187 = vpop.permute.xlu0 %2186
      %2188 = vrot.lane.b32.xlu0 %v2134, 111
      %v2189 = vpop.permute.xlu0 %2188
      %2190 = vrot.lane.b32.xlu0 %v2138, 111
      %v2191 = vpop.permute.xlu0 %2190
      %2192 = vrot.lane.b32.xlu0 %v2142, 111
      %v2193 = vpop.permute.xlu0 %2192
      %2194 = vrot.lane.b32.xlu0 %v2146, 111
      %v2195 = vpop.permute.xlu0 %2194
      %2196 = vrot.lane.b32.xlu0 %v2119, 111
      %v2197 = vpop.permute.xlu0 %2196
      %2198 = vrot.lane.b32.xlu0 %v2123, 111
      %v2199 = vpop.permute.xlu0 %2198
      %2200 = vrot.lane.b32.xlu0 %v2127, 111
      %v2201 = vpop.permute.xlu0 %2200
      %2202 = vrot.lane.b32.xlu0 %v2131, 111
      %v2203 = vpop.permute.xlu0 %2202
      %2204 = vrot.lane.b32.xlu0 %v2135, 111
      %v2205 = vpop.permute.xlu0 %2204
      %2206 = vrot.lane.b32.xlu0 %v2139, 111
      %v2207 = vpop.permute.xlu0 %2206
      %2208 = vrot.lane.b32.xlu0 %v2143, 111
      %v2209 = vpop.permute.xlu0 %2208
      %2210 = vrot.lane.b32.xlu0 %v2147, 111
      %v2211 = vpop.permute.xlu0 %2210
      %vm2212 = vcmp.lt.s32.totalorder %v581, 111
      %v2213 = vsel %vm2212, %v2181, %v2197
      %v2214 = vsel %vm2212, %v2183, %v2199
      %v2215 = vsel %vm2212, %v2185, %v2201
      %v2216 = vsel %vm2212, %v2187, %v2203
      %v2217 = vsel %vm2212, %v2189, %v2205
      %v2218 = vsel %vm2212, %v2191, %v2207
      %v2219 = vsel %vm2212, %v2193, %v2209
      %v2220 = vsel %vm2212, %v2195, %v2211
      %v2221 = vsel %vm2212, %v2165, %v2181
      %v2222 = vsel %vm2212, %v2167, %v2183
      %v2223 = vsel %vm2212, %v2169, %v2185
      %v2224 = vsel %vm2212, %v2171, %v2187
      %v2225 = vsel %vm2212, %v2173, %v2189
      %v2226 = vsel %vm2212, %v2175, %v2191
      %v2227 = vsel %vm2212, %v2177, %v2193
      %v2228 = vsel %vm2212, %v2179, %v2195
      %v2229 = vsel %vm2212, %v2149, %v2165
      %v2230 = vsel %vm2212, %v2151, %v2167
      %v2231 = vsel %vm2212, %v2153, %v2169
      %v2232 = vsel %vm2212, %v2155, %v2171
      %v2233 = vsel %vm2212, %v2157, %v2173
      %v2234 = vsel %vm2212, %v2159, %v2175
      %v2235 = vsel %vm2212, %v2161, %v2177
      %v2236 = vsel %vm2212, %v2163, %v2179
      %v2237 = vsel %vm2212, %v2197, %v2149
      %v2238 = vsel %vm2212, %v2199, %v2151
      %v2239 = vsel %vm2212, %v2201, %v2153
      %v2240 = vsel %vm2212, %v2203, %v2155
      %v2241 = vsel %vm2212, %v2205, %v2157
      %v2242 = vsel %vm2212, %v2207, %v2159
      %v2243 = vsel %vm2212, %v2209, %v2161
      %v2244 = vsel %vm2212, %v2211, %v2163
      %s2245 = scalar_lea.vmem %s2, 32
      %v2246 = vld [vmem:[%s2245] sm:$0xf]
      %v2248 = vlaneseq
      %v2249 = vshrl.u32 %v2248, 7
      %v2250 = vsub.s32 0, %v2249
      %v2251 = vrot.slane %v2246, %v2250
      %v2252 = vlaneseq
      %v2253 = vshrl.u32 %v2252, 7
      %v2254 = vsub.s32 1, %v2253
      %v2255 = vrot.slane %v2246, %v2254
      %v2256 = vlaneseq
      %v2257 = vshrl.u32 %v2256, 7
      %v2258 = vsub.s32 2, %v2257
      %v2259 = vrot.slane %v2246, %v2258
      %v2260 = vlaneseq
      %v2261 = vshrl.u32 %v2260, 7
      %v2262 = vsub.s32 3, %v2261
      %v2263 = vrot.slane %v2246, %v2262
      %v2268 = vmul.f32 %v2229, %v2251
      %v2269 = vmul.f32 %v2221, %v2255
      %v2270 = vmul.f32 %v2213, %v2259
      %v2271 = vmul.f32 %v2237, %v2263
      %v2272 = vmul.f32 %v2230, %v2251
      %v2273 = vmul.f32 %v2222, %v2255
      %v2274 = vmul.f32 %v2214, %v2259
      %v2275 = vmul.f32 %v2238, %v2263
      %v2276 = vmul.f32 %v2231, %v2251
      %v2277 = vmul.f32 %v2223, %v2255
      %v2278 = vmul.f32 %v2215, %v2259
      %v2279 = vmul.f32 %v2239, %v2263
      %v2280 = vmul.f32 %v2232, %v2251
      %v2281 = vmul.f32 %v2224, %v2255
      %v2282 = vmul.f32 %v2216, %v2259
      %v2283 = vmul.f32 %v2240, %v2263
      %v2284 = vmul.f32 %v2233, %v2251
      %v2285 = vmul.f32 %v2225, %v2255
      %v2286 = vmul.f32 %v2217, %v2259
      %v2287 = vmul.f32 %v2241, %v2263
      %v2288 = vmul.f32 %v2234, %v2251
      %v2289 = vmul.f32 %v2226, %v2255
      %v2290 = vmul.f32 %v2218, %v2259
      %v2291 = vmul.f32 %v2242, %v2263
      %v2292 = vmul.f32 %v2235, %v2251
      %v2293 = vmul.f32 %v2227, %v2255
      %v2294 = vmul.f32 %v2219, %v2259
      %v2295 = vmul.f32 %v2243, %v2263
      %v2296 = vmul.f32 %v2236, %v2251
      %v2297 = vmul.f32 %v2228, %v2255
      %v2298 = vmul.f32 %v2220, %v2259
      %v2299 = vmul.f32 %v2244, %v2263
      %v2300 = vpack.c.bf16 %v2272, %v2268
      %v2301 = vpack.c.bf16 %v2273, %v2269
      %v2302 = vpack.c.bf16 %v2274, %v2270
      %v2303 = vpack.c.bf16 %v2275, %v2271
      %v2304 = vpack.c.bf16 %v2280, %v2276
      %v2305 = vpack.c.bf16 %v2281, %v2277
      %v2306 = vpack.c.bf16 %v2282, %v2278
      %v2307 = vpack.c.bf16 %v2283, %v2279
      %v2308 = vpack.c.bf16 %v2288, %v2284
      %v2309 = vpack.c.bf16 %v2289, %v2285
      %v2310 = vpack.c.bf16 %v2290, %v2286
      %v2311 = vpack.c.bf16 %v2291, %v2287
      %v2312 = vpack.c.bf16 %v2296, %v2292
      %v2313 = vpack.c.bf16 %v2297, %v2293
      %v2314 = vpack.c.bf16 %v2298, %v2294
      %v2315 = vpack.c.bf16 %v2299, %v2295
      %2316 = vst [vmem:[#allocation4 + $0x400] sm:$0xff] %v2300
      %2317 = vst [vmem:[#allocation4 + $0x408] sm:$0xff] %v2301
      %2318 = vst [vmem:[#allocation4 + $0x410] sm:$0xff] %v2302
      %2319 = vst [vmem:[#allocation4 + $0x418] sm:$0xff] %v2303
      %2320 = vst [vmem:[#allocation4 + $0x420] sm:$0xff] %v2304
      %2321 = vst [vmem:[#allocation4 + $0x428] sm:$0xff] %v2305
      %2322 = vst [vmem:[#allocation4 + $0x430] sm:$0xff] %v2306
      %2323 = vst [vmem:[#allocation4 + $0x438] sm:$0xff] %v2307
      %2324 = vst [vmem:[#allocation4 + $0x440] sm:$0xff] %v2308
      %2325 = vst [vmem:[#allocation4 + $0x448] sm:$0xff] %v2309
      %2326 = vst [vmem:[#allocation4 + $0x450] sm:$0xff] %v2310
      %2327 = vst [vmem:[#allocation4 + $0x458] sm:$0xff] %v2311
      %2328 = vst [vmem:[#allocation4 + $0x460] sm:$0xff] %v2312
      %2329 = vst [vmem:[#allocation4 + $0x468] sm:$0xff] %v2313
      %2330 = vst [vmem:[#allocation4 + $0x470] sm:$0xff] %v2314
      %2331 = vst [vmem:[#allocation4 + $0x478] sm:$0xff] %v2315
      %v2332 = vld [vmem:[%s288] sm:$0xff]
      %v2333 = vld [vmem:[%s288 + $0x8] sm:$0xff]
      %v2334 = vld [vmem:[%s288 + $0x10] sm:$0xf]
      %v2335 = vld [vmem:[%s288 + $0x14] sm:$0xff]
      %v2336 = vld [vmem:[%s288 + $0x1c] sm:$0xff]
      %v2337 = vld [vmem:[%s288 + $0x24] sm:$0xf]
      %v2338 = vld [vmem:[%s288 + $0x28] sm:$0xff]
      %v2339 = vld [vmem:[%s288 + $0x30] sm:$0xff]
      %v2340 = vld [vmem:[%s288 + $0x38] sm:$0xf]
      %v2341 = vld [vmem:[%s288 + $0x3c] sm:$0xff]
      %v2342 = vld [vmem:[%s288 + $0x44] sm:$0xff]
      %v2343 = vld [vmem:[%s288 + $0x4c] sm:$0xf]
      %v2344 = vld [vmem:[%s288 + $0x50] sm:$0xff]
      %v2345 = vld [vmem:[%s288 + $0x58] sm:$0xff]
      %v2346 = vld [vmem:[%s288 + $0x60] sm:$0xf]
      %v2347 = vld [vmem:[%s288 + $0x64] sm:$0xff]
      %v2348 = vld [vmem:[%s288 + $0x6c] sm:$0xff]
      %v2349 = vld [vmem:[%s288 + $0x74] sm:$0xf]
      %v2350 = vld [vmem:[%s288 + $0x78] sm:$0xff]
      %v2351 = vld [vmem:[%s288 + $0x80] sm:$0xff]
      %v2352 = vld [vmem:[%s288 + $0x88] sm:$0xf]
      %v2353 = vld [vmem:[%s288 + $0x8c] sm:$0xff]
      %v2354 = vld [vmem:[%s288 + $0x94] sm:$0xff]
      %v2355 = vld [vmem:[%s288 + $0x9c] sm:$0xf]
      %v2356 = vld [vmem:[#allocation4] sm:$0xff]
      %v2357 = vld [vmem:[#allocation4 + $0x8] sm:$0xff]
      %v2358 = vld [vmem:[#allocation4 + $0x10] sm:$0xff]
      %v2359 = vld [vmem:[#allocation4 + $0x18] sm:$0xff]
      %v2360 = vld [vmem:[#allocation4 + $0x20] sm:$0xff]
      %v2361 = vld [vmem:[#allocation4 + $0x28] sm:$0xff]
      %v2362 = vld [vmem:[#allocation4 + $0x30] sm:$0xff]
      %v2363 = vld [vmem:[#allocation4 + $0x38] sm:$0xff]
      %v2364 = vld [vmem:[#allocation4 + $0x40] sm:$0xff]
      %v2365 = vld [vmem:[#allocation4 + $0x48] sm:$0xff]
      %v2366 = vld [vmem:[#allocation4 + $0x50] sm:$0xff]
      %v2367 = vld [vmem:[#allocation4 + $0x58] sm:$0xff]
      %v2368 = vld [vmem:[#allocation4 + $0x60] sm:$0xff]
      %v2369 = vld [vmem:[#allocation4 + $0x68] sm:$0xff]
      %v2370 = vld [vmem:[#allocation4 + $0x70] sm:$0xff]
      %v2371 = vld [vmem:[#allocation4 + $0x78] sm:$0xff]
      %v2372 = vld [vmem:[#allocation4 + $0x80] sm:$0xff]
      %v2373 = vld [vmem:[#allocation4 + $0x88] sm:$0xff]
      %v2374 = vld [vmem:[#allocation4 + $0x90] sm:$0xff]
      %v2375 = vld [vmem:[#allocation4 + $0x98] sm:$0xff]
      %v2376 = vld [vmem:[#allocation4 + $0xa0] sm:$0xff]
      %v2377 = vld [vmem:[#allocation4 + $0xa8] sm:$0xff]
      %v2378 = vld [vmem:[#allocation4 + $0xb0] sm:$0xff]
      %v2379 = vld [vmem:[#allocation4 + $0xb8] sm:$0xff]
      %v2380 = vld [vmem:[#allocation4 + $0xc0] sm:$0xff]
      %v2381 = vld [vmem:[#allocation4 + $0xc8] sm:$0xff]
      %v2382 = vld [vmem:[#allocation4 + $0xd0] sm:$0xff]
      %v2383 = vld [vmem:[#allocation4 + $0xd8] sm:$0xff]
      %v2384 = vld [vmem:[#allocation4 + $0xe0] sm:$0xff]
      %v2385 = vld [vmem:[#allocation4 + $0xe8] sm:$0xff]
      %v2386 = vld [vmem:[#allocation4 + $0xf0] sm:$0xff]
      %v2387 = vld [vmem:[#allocation4 + $0xf8] sm:$0xff]
      %v2388 = vld [vmem:[#allocation4 + $0x100] sm:$0xff]
      %v2389 = vld [vmem:[#allocation4 + $0x108] sm:$0xff]
      %v2390 = vld [vmem:[#allocation4 + $0x110] sm:$0xff]
      %v2391 = vld [vmem:[#allocation4 + $0x118] sm:$0xff]
      %v2392 = vld [vmem:[#allocation4 + $0x120] sm:$0xff]
      %v2393 = vld [vmem:[#allocation4 + $0x128] sm:$0xff]
      %v2394 = vld [vmem:[#allocation4 + $0x130] sm:$0xff]
      %v2395 = vld [vmem:[#allocation4 + $0x138] sm:$0xff]
      %v2396 = vld [vmem:[#allocation4 + $0x140] sm:$0xff]
      %v2397 = vld [vmem:[#allocation4 + $0x148] sm:$0xff]
      %v2398 = vld [vmem:[#allocation4 + $0x150] sm:$0xff]
      %v2399 = vld [vmem:[#allocation4 + $0x158] sm:$0xff]
      %v2400 = vld [vmem:[#allocation4 + $0x160] sm:$0xff]
      %v2401 = vld [vmem:[#allocation4 + $0x168] sm:$0xff]
      %v2402 = vld [vmem:[#allocation4 + $0x170] sm:$0xff]
      %v2403 = vld [vmem:[#allocation4 + $0x178] sm:$0xff]
      %v2404 = vld [vmem:[#allocation4 + $0x180] sm:$0xff]
      %v2405 = vld [vmem:[#allocation4 + $0x188] sm:$0xff]
      %v2406 = vld [vmem:[#allocation4 + $0x190] sm:$0xff]
      %v2407 = vld [vmem:[#allocation4 + $0x198] sm:$0xff]
      %v2408 = vld [vmem:[#allocation4 + $0x1a0] sm:$0xff]
      %v2409 = vld [vmem:[#allocation4 + $0x1a8] sm:$0xff]
      %v2410 = vld [vmem:[#allocation4 + $0x1b0] sm:$0xff]
      %v2411 = vld [vmem:[#allocation4 + $0x1b8] sm:$0xff]
      %v2412 = vld [vmem:[#allocation4 + $0x1c0] sm:$0xff]
      %v2413 = vld [vmem:[#allocation4 + $0x1c8] sm:$0xff]
      %v2414 = vld [vmem:[#allocation4 + $0x1d0] sm:$0xff]
      %v2415 = vld [vmem:[#allocation4 + $0x1d8] sm:$0xff]
      %v2416 = vld [vmem:[#allocation4 + $0x1e0] sm:$0xff]
      %v2417 = vld [vmem:[#allocation4 + $0x1e8] sm:$0xff]
      %v2418 = vld [vmem:[#allocation4 + $0x1f0] sm:$0xff]
      %v2419 = vld [vmem:[#allocation4 + $0x1f8] sm:$0xff]
      %v2420 = vld [vmem:[#allocation4 + $0x200] sm:$0xff]
      %v2421 = vld [vmem:[#allocation4 + $0x208] sm:$0xff]
      %v2422 = vld [vmem:[#allocation4 + $0x210] sm:$0xff]
      %v2423 = vld [vmem:[#allocation4 + $0x218] sm:$0xff]
      %v2424 = vld [vmem:[#allocation4 + $0x220] sm:$0xff]
      %v2425 = vld [vmem:[#allocation4 + $0x228] sm:$0xff]
      %v2426 = vld [vmem:[#allocation4 + $0x230] sm:$0xff]
      %v2427 = vld [vmem:[#allocation4 + $0x238] sm:$0xff]
      %v2428 = vld [vmem:[#allocation4 + $0x240] sm:$0xff]
      %v2429 = vld [vmem:[#allocation4 + $0x248] sm:$0xff]
      %v2430 = vld [vmem:[#allocation4 + $0x250] sm:$0xff]
      %v2431 = vld [vmem:[#allocation4 + $0x258] sm:$0xff]
      %v2432 = vld [vmem:[#allocation4 + $0x260] sm:$0xff]
      %v2433 = vld [vmem:[#allocation4 + $0x268] sm:$0xff]
      %v2434 = vld [vmem:[#allocation4 + $0x270] sm:$0xff]
      %v2435 = vld [vmem:[#allocation4 + $0x278] sm:$0xff]
      %v2436 = vld [vmem:[#allocation4 + $0x280] sm:$0xff]
      %v2437 = vld [vmem:[#allocation4 + $0x288] sm:$0xff]
      %v2438 = vld [vmem:[#allocation4 + $0x290] sm:$0xff]
      %v2439 = vld [vmem:[#allocation4 + $0x298] sm:$0xff]
      %v2440 = vld [vmem:[#allocation4 + $0x2a0] sm:$0xff]
      %v2441 = vld [vmem:[#allocation4 + $0x2a8] sm:$0xff]
      %v2442 = vld [vmem:[#allocation4 + $0x2b0] sm:$0xff]
      %v2443 = vld [vmem:[#allocation4 + $0x2b8] sm:$0xff]
      %v2444 = vld [vmem:[#allocation4 + $0x2c0] sm:$0xff]
      %v2445 = vld [vmem:[#allocation4 + $0x2c8] sm:$0xff]
      %v2446 = vld [vmem:[#allocation4 + $0x2d0] sm:$0xff]
      %v2447 = vld [vmem:[#allocation4 + $0x2d8] sm:$0xff]
      %v2448 = vld [vmem:[#allocation4 + $0x2e0] sm:$0xff]
      %v2449 = vld [vmem:[#allocation4 + $0x2e8] sm:$0xff]
      %v2450 = vld [vmem:[#allocation4 + $0x2f0] sm:$0xff]
      %v2451 = vld [vmem:[#allocation4 + $0x2f8] sm:$0xff]
      %v2452 = vld [vmem:[#allocation4 + $0x300] sm:$0xff]
      %v2453 = vld [vmem:[#allocation4 + $0x308] sm:$0xff]
      %v2454 = vld [vmem:[#allocation4 + $0x310] sm:$0xff]
      %v2455 = vld [vmem:[#allocation4 + $0x318] sm:$0xff]
      %v2456 = vld [vmem:[#allocation4 + $0x320] sm:$0xff]
      %v2457 = vld [vmem:[#allocation4 + $0x328] sm:$0xff]
      %v2458 = vld [vmem:[#allocation4 + $0x330] sm:$0xff]
      %v2459 = vld [vmem:[#allocation4 + $0x338] sm:$0xff]
      %v2460 = vld [vmem:[#allocation4 + $0x340] sm:$0xff]
      %v2461 = vld [vmem:[#allocation4 + $0x348] sm:$0xff]
      %v2462 = vld [vmem:[#allocation4 + $0x350] sm:$0xff]
      %v2463 = vld [vmem:[#allocation4 + $0x358] sm:$0xff]
      %v2464 = vld [vmem:[#allocation4 + $0x360] sm:$0xff]
      %v2465 = vld [vmem:[#allocation4 + $0x368] sm:$0xff]
      %v2466 = vld [vmem:[#allocation4 + $0x370] sm:$0xff]
      %v2467 = vld [vmem:[#allocation4 + $0x378] sm:$0xff]
      %v2468 = vld [vmem:[#allocation4 + $0x380] sm:$0xff]
      %v2469 = vld [vmem:[#allocation4 + $0x388] sm:$0xff]
      %v2470 = vld [vmem:[#allocation4 + $0x390] sm:$0xff]
      %v2471 = vld [vmem:[#allocation4 + $0x398] sm:$0xff]
      %v2472 = vld [vmem:[#allocation4 + $0x3a0] sm:$0xff]
      %v2473 = vld [vmem:[#allocation4 + $0x3a8] sm:$0xff]
      %v2474 = vld [vmem:[#allocation4 + $0x3b0] sm:$0xff]
      %v2475 = vld [vmem:[#allocation4 + $0x3b8] sm:$0xff]
      %v2476 = vld [vmem:[#allocation4 + $0x3c0] sm:$0xff]
      %v2477 = vld [vmem:[#allocation4 + $0x3c8] sm:$0xff]
      %v2478 = vld [vmem:[#allocation4 + $0x3d0] sm:$0xff]
      %v2479 = vld [vmem:[#allocation4 + $0x3d8] sm:$0xff]
      %v2480 = vld [vmem:[#allocation4 + $0x3e0] sm:$0xff]
      %v2481 = vld [vmem:[#allocation4 + $0x3e8] sm:$0xff]
      %v2482 = vld [vmem:[#allocation4 + $0x3f0] sm:$0xff]
      %v2483 = vld [vmem:[#allocation4 + $0x3f8] sm:$0xff]
      %v2484 = vld [vmem:[#allocation4 + $0x400] sm:$0xff]
      %v2485 = vld [vmem:[#allocation4 + $0x408] sm:$0xff]
      %v2486 = vld [vmem:[#allocation4 + $0x410] sm:$0xff]
      %v2487 = vld [vmem:[#allocation4 + $0x418] sm:$0xff]
      %v2488 = vld [vmem:[#allocation4 + $0x420] sm:$0xff]
      %v2489 = vld [vmem:[#allocation4 + $0x428] sm:$0xff]
      %v2490 = vld [vmem:[#allocation4 + $0x430] sm:$0xff]
      %v2491 = vld [vmem:[#allocation4 + $0x438] sm:$0xff]
      %v2492 = vld [vmem:[#allocation4 + $0x440] sm:$0xff]
      %v2493 = vld [vmem:[#allocation4 + $0x448] sm:$0xff]
      %v2494 = vld [vmem:[#allocation4 + $0x450] sm:$0xff]
      %v2495 = vld [vmem:[#allocation4 + $0x458] sm:$0xff]
      %v2496 = vld [vmem:[#allocation4 + $0x460] sm:$0xff]
      %v2497 = vld [vmem:[#allocation4 + $0x468] sm:$0xff]
      %v2498 = vld [vmem:[#allocation4 + $0x470] sm:$0xff]
      %v2499 = vld [vmem:[#allocation4 + $0x478] sm:$0xff]
      %v2500 = vld [vmem:[%s293] sm:$0xff]
      %v2501 = vld [vmem:[%s293 + $0x8] sm:$0xff]
      %v2502 = vld [vmem:[%s293 + $0x10] sm:$0xff]
      %v2503 = vld [vmem:[%s293 + $0x18] sm:$0xff]
      %v2504 = vld [vmem:[%s293 + $0x20] sm:$0xff]
      %v2505 = vld [vmem:[%s293 + $0x28] sm:$0xff]
      %v2506 = vld [vmem:[%s293 + $0x30] sm:$0xff]
      %v2507 = vld [vmem:[%s293 + $0x38] sm:$0xff]
      %2509 = vset.pattern.permute.xlu0 0
      %2510 = vperm.xlu0 %2509, %v2500
      %v2511 = vpop.permute.xlu0 %2510
      %2514 = vset.pattern.permute.xlu0 0
      %2515 = vperm.xlu0 %2514, %v2501
      %v2516 = vpop.permute.xlu0 %2515
      %2519 = vset.pattern.permute.xlu0 0
      %2520 = vperm.xlu0 %2519, %v2502
      %v2521 = vpop.permute.xlu0 %2520
      %2524 = vset.pattern.permute.xlu0 0
      %2525 = vperm.xlu0 %2524, %v2503
      %v2526 = vpop.permute.xlu0 %2525
      %2529 = vset.pattern.permute.xlu0 0
      %2530 = vperm.xlu0 %2529, %v2504
      %v2531 = vpop.permute.xlu0 %2530
      %2534 = vset.pattern.permute.xlu0 0
      %2535 = vperm.xlu0 %2534, %v2505
      %v2536 = vpop.permute.xlu0 %2535
      %2539 = vset.pattern.permute.xlu0 0
      %2540 = vperm.xlu0 %2539, %v2506
      %v2541 = vpop.permute.xlu0 %2540
      %2544 = vset.pattern.permute.xlu0 0
      %2545 = vperm.xlu0 %2544, %v2507
      %v2546 = vpop.permute.xlu0 %2545
      %v2572 = vunpack.c.l.b16 %v2332
      %v2573 = vunpack.c.h.b16 %v2332
      %v2574 = vunpack.c.l.b16 %v2333
      %v2575 = vunpack.c.h.b16 %v2333
      %v2576 = vunpack.c.l.b16 %v2334
      %v2577 = vunpack.c.l.b16 %v2335
      %v2578 = vunpack.c.h.b16 %v2335
      %v2579 = vunpack.c.l.b16 %v2336
      %v2580 = vunpack.c.h.b16 %v2336
      %v2581 = vunpack.c.l.b16 %v2337
      %v2582 = vunpack.c.l.b16 %v2338
      %v2583 = vunpack.c.h.b16 %v2338
      %v2584 = vunpack.c.l.b16 %v2339
      %v2585 = vunpack.c.h.b16 %v2339
      %v2586 = vunpack.c.l.b16 %v2340
      %v2587 = vunpack.c.l.b16 %v2341
      %v2588 = vunpack.c.h.b16 %v2341
      %v2589 = vunpack.c.l.b16 %v2342
      %v2590 = vunpack.c.h.b16 %v2342
      %v2591 = vunpack.c.l.b16 %v2343
      %v2592 = vunpack.c.l.b16 %v2344
      %v2593 = vunpack.c.h.b16 %v2344
      %v2594 = vunpack.c.l.b16 %v2345
      %v2595 = vunpack.c.h.b16 %v2345
      %v2596 = vunpack.c.l.b16 %v2346
      %v2597 = vunpack.c.l.b16 %v2347
      %v2598 = vunpack.c.h.b16 %v2347
      %v2599 = vunpack.c.l.b16 %v2348
      %v2600 = vunpack.c.h.b16 %v2348
      %v2601 = vunpack.c.l.b16 %v2349
      %v2602 = vunpack.c.l.b16 %v2350
      %v2603 = vunpack.c.h.b16 %v2350
      %v2604 = vunpack.c.l.b16 %v2351
      %v2605 = vunpack.c.h.b16 %v2351
      %v2606 = vunpack.c.l.b16 %v2352
      %v2607 = vunpack.c.l.b16 %v2353
      %v2608 = vunpack.c.h.b16 %v2353
      %v2609 = vunpack.c.l.b16 %v2354
      %v2610 = vunpack.c.h.b16 %v2354
      %v2611 = vunpack.c.l.b16 %v2355
      %v2612 = vpack.c.b16 %v2577, %v2572
      %v2613 = vpack.c.b16 %v2578, %v2573
      %v2614 = vpack.c.b16 %v2579, %v2574
      %v2615 = vpack.c.b16 %v2580, %v2575
      %v2616 = vpack.c.b16 %v2581, %v2576
      %v2617 = vpack.c.b16 %v2587, %v2582
      %v2618 = vpack.c.b16 %v2588, %v2583
      %v2619 = vpack.c.b16 %v2589, %v2584
      %v2620 = vpack.c.b16 %v2590, %v2585
      %v2621 = vpack.c.b16 %v2591, %v2586
      %v2622 = vpack.c.b16 %v2597, %v2592
      %v2623 = vpack.c.b16 %v2598, %v2593
      %v2624 = vpack.c.b16 %v2599, %v2594
      %v2625 = vpack.c.b16 %v2600, %v2595
      %v2626 = vpack.c.b16 %v2601, %v2596
      %v2627 = vpack.c.b16 %v2607, %v2602
      %v2628 = vpack.c.b16 %v2608, %v2603
      %v2629 = vpack.c.b16 %v2609, %v2604
      %v2630 = vpack.c.b16 %v2610, %v2605
      %v2631 = vpack.c.b16 %v2611, %v2606
      %vm2648 = vcmask 523264
      %v2650 = vsel %vm2648, %v2616, 0
      %v2653 = vsel %vm2648, %v2621, 0
      %v2656 = vsel %vm2648, %v2626, 0
      %v2659 = vsel %vm2648, %v2631, 0
      %2661 = vmatprep.subr.bf16.mxu0 %v2357
      %2662 = vmatpush1.bf16.msra.mxu0 %v2356
      %2663 = vmatprep.subr.bf16.mxu0 %v2361
      %2664 = vmatpush1.bf16.msra.mxu0 %v2360
      %2665 = vmatprep.subr.bf16.mxu0 %v2365
      %2666 = vmatpush1.bf16.msra.mxu0 %v2364
      %2667 = vmatprep.subr.bf16.mxu0 %v2369
      %2668 = vmatpush1.bf16.msra.mxu0 %v2368
      %2669 = vmatprep.subr.bf16.mxu0 %v2373
      %2670 = vmatpush1.bf16.msra.mxu0 %v2372
      %2671 = vmatprep.subr.bf16.mxu0 %v2377
      %2672 = vmatpush1.bf16.msra.mxu0 %v2376
      %2673 = vmatprep.subr.bf16.mxu0 %v2381
      %2674 = vmatpush1.bf16.msra.mxu0 %v2380
      %2675 = vmatprep.subr.bf16.mxu0 %v2385
      %2676 = vmatpush1.bf16.msra.mxu0 %v2384
      %2677 = vmatprep.subr.bf16.mxu0 %v2389
      %2678 = vmatpush1.bf16.msra.mxu0 %v2388
      %2679 = vmatprep.subr.bf16.mxu0 %v2393
      %2680 = vmatpush1.bf16.msra.mxu0 %v2392
      %2681 = vmatprep.subr.bf16.mxu0 %v2397
      %2682 = vmatpush1.bf16.msra.mxu0 %v2396
      %2683 = vmatprep.subr.bf16.mxu0 %v2401
      %2684 = vmatpush1.bf16.msra.mxu0 %v2400
      %2685 = vmatprep.subr.bf16.mxu0 %v2405
      %2686 = vmatpush1.bf16.msra.mxu0 %v2404
      %2687 = vmatprep.subr.bf16.mxu0 %v2409
      %2688 = vmatpush1.bf16.msra.mxu0 %v2408
      %2689 = vmatprep.subr.bf16.mxu0 %v2413
      %2690 = vmatpush1.bf16.msra.mxu0 %v2412
      %2691 = vmatprep.subr.bf16.mxu0 %v2417
      %2692 = vmatpush1.bf16.msra.mxu0 %v2416
      %2693 = vmatprep.mubr.bf16.mxu0 %v2613
      %2694 = vmatmul.mubr.bf16.gmra.mrb[0].mxu0 %v2612
      %v2695 = vpop.f32.mrb[0].mxu0
      %v2696 = vadd.f32 %v2511, %v2695
      %v2697 = vpop.f32.mrb[0].mxu0
      %v2698 = vadd.f32 %v2511, %v2697
      %v2699 = vpop.f32.mrb[0].mxu0
      %v2700 = vadd.f32 %v2516, %v2699
      %v2701 = vpop.f32.mrb[0].mxu0
      %v2702 = vadd.f32 %v2516, %v2701
      %2703 = vmatprep.mubr.bf16.mxu0 %v2618
      %2704 = vmatmul.mubr.bf16.gmra.mrb[0].mxu0 %v2617
      %v2705 = vpop.f32.mrb[0].mxu0
      %v2706 = vadd.f32 %v2521, %v2705
      %v2707 = vpop.f32.mrb[0].mxu0
      %v2708 = vadd.f32 %v2521, %v2707
      %v2709 = vpop.f32.mrb[0].mxu0
      %v2710 = vadd.f32 %v2526, %v2709
      %v2711 = vpop.f32.mrb[0].mxu0
      %v2712 = vadd.f32 %v2526, %v2711
      %2713 = vmatprep.mubr.bf16.mxu0 %v2623
      %2714 = vmatmul.mubr.bf16.gmra.mrb[0].mxu0 %v2622
      %v2715 = vpop.f32.mrb[0].mxu0
      %v2716 = vadd.f32 %v2531, %v2715
      %v2717 = vpop.f32.mrb[0].mxu0
      %v2718 = vadd.f32 %v2531, %v2717
      %v2719 = vpop.f32.mrb[0].mxu0
      %v2720 = vadd.f32 %v2536, %v2719
      %v2721 = vpop.f32.mrb[0].mxu0
      %v2722 = vadd.f32 %v2536, %v2721
      %2723 = vmatprep.mubr.bf16.mxu0 %v2628
      %2724 = vmatmul.mubr.bf16.gmra.mrb[0].mxu0 %v2627
      %v2725 = vpop.f32.mrb[0].mxu0
      %v2726 = vadd.f32 %v2541, %v2725
      %v2727 = vpop.f32.mrb[0].mxu0
      %v2728 = vadd.f32 %v2541, %v2727
      %v2729 = vpop.f32.mrb[0].mxu0
      %v2730 = vadd.f32 %v2546, %v2729
      %v2731 = vpop.f32.mrb[0].mxu0
      %v2732 = vadd.f32 %v2546, %v2731
      %2733 = vdwg.mxu0
      %2734 = vmatprep.subr.bf16.mxu0 %v2421
      %2735 = vmatpush1.bf16.msra.mxu0 %v2420
      %2736 = vmatprep.subr.bf16.mxu0 %v2425
      %2737 = vmatpush1.bf16.msra.mxu0 %v2424
      %2738 = vmatprep.subr.bf16.mxu0 %v2429
      %2739 = vmatpush1.bf16.msra.mxu0 %v2428
      %2740 = vmatprep.subr.bf16.mxu0 %v2433
      %2741 = vmatpush1.bf16.msra.mxu0 %v2432
      %2742 = vmatprep.subr.bf16.mxu0 %v2437
      %2743 = vmatpush1.bf16.msra.mxu0 %v2436
      %2744 = vmatprep.subr.bf16.mxu0 %v2441
      %2745 = vmatpush1.bf16.msra.mxu0 %v2440
      %2746 = vmatprep.subr.bf16.mxu0 %v2445
      %2747 = vmatpush1.bf16.msra.mxu0 %v2444
      %2748 = vmatprep.subr.bf16.mxu0 %v2449
      %2749 = vmatpush1.bf16.msra.mxu0 %v2448
      %2750 = vmatprep.subr.bf16.mxu0 %v2453
      %2751 = vmatpush1.bf16.msra.mxu0 %v2452
      %2752 = vmatprep.subr.bf16.mxu0 %v2457
      %2753 = vmatpush1.bf16.msra.mxu0 %v2456
      %2754 = vmatprep.subr.bf16.mxu0 %v2461
      %2755 = vmatpush1.bf16.msra.mxu0 %v2460
      %2756 = vmatprep.subr.bf16.mxu0 %v2465
      %2757 = vmatpush1.bf16.msra.mxu0 %v2464
      %2758 = vmatprep.subr.bf16.mxu0 %v2469
      %2759 = vmatpush1.bf16.msra.mxu0 %v2468
      %2760 = vmatprep.subr.bf16.mxu0 %v2473
      %2761 = vmatpush1.bf16.msra.mxu0 %v2472
      %2762 = vmatprep.subr.bf16.mxu0 %v2477
      %2763 = vmatpush1.bf16.msra.mxu0 %v2476
      %2764 = vmatprep.subr.bf16.mxu0 %v2481
      %2765 = vmatpush1.bf16.msra.mxu0 %v2480
      %2766 = vmatprep.mubr.bf16.mxu0 %v2615
      %2767 = vmatmul.mubr.bf16.gmra.mrb[0].mxu0 %v2614
      %v2768 = vpop.f32.mrb[0].mxu0
      %v2769 = vadd.f32 %v2696, %v2768
      %v2770 = vpop.f32.mrb[0].mxu0
      %v2771 = vadd.f32 %v2698, %v2770
      %v2772 = vpop.f32.mrb[0].mxu0
      %v2773 = vadd.f32 %v2700, %v2772
      %v2774 = vpop.f32.mrb[0].mxu0
      %v2775 = vadd.f32 %v2702, %v2774
      %2776 = vmatprep.mubr.bf16.mxu0 %v2620
      %2777 = vmatmul.mubr.bf16.gmra.mrb[0].mxu0 %v2619
      %v2778 = vpop.f32.mrb[0].mxu0
      %v2779 = vadd.f32 %v2706, %v2778
      %v2780 = vpop.f32.mrb[0].mxu0
      %v2781 = vadd.f32 %v2708, %v2780
      %v2782 = vpop.f32.mrb[0].mxu0
      %v2783 = vadd.f32 %v2710, %v2782
      %v2784 = vpop.f32.mrb[0].mxu0
      %v2785 = vadd.f32 %v2712, %v2784
      %2786 = vmatprep.mubr.bf16.mxu0 %v2625
      %2787 = vmatmul.mubr.bf16.gmra.mrb[0].mxu0 %v2624
      %v2788 = vpop.f32.mrb[0].mxu0
      %v2789 = vadd.f32 %v2716, %v2788
      %v2790 = vpop.f32.mrb[0].mxu0
      %v2791 = vadd.f32 %v2718, %v2790
      %v2792 = vpop.f32.mrb[0].mxu0
      %v2793 = vadd.f32 %v2720, %v2792
      %v2794 = vpop.f32.mrb[0].mxu0
      %v2795 = vadd.f32 %v2722, %v2794
      %2796 = vmatprep.mubr.bf16.mxu0 %v2630
      %2797 = vmatmul.mubr.bf16.gmra.mrb[0].mxu0 %v2629
      %v2798 = vpop.f32.mrb[0].mxu0
      %v2799 = vadd.f32 %v2726, %v2798
      %v2800 = vpop.f32.mrb[0].mxu0
      %v2801 = vadd.f32 %v2728, %v2800
      %v2802 = vpop.f32.mrb[0].mxu0
      %v2803 = vadd.f32 %v2730, %v2802
      %v2804 = vpop.f32.mrb[0].mxu0
      %v2805 = vadd.f32 %v2732, %v2804
      %2806 = vdwg.mxu0
      %2807 = vmatprep.subr.bf16.mxu0 %v2485
      %2808 = vmatpush1.bf16.msra.mxu0 %v2484
      %2809 = vmatprep.subr.bf16.mxu0 %v2489
      %2810 = vmatpush1.bf16.msra.mxu0 %v2488
      %2811 = vmatprep.subr.bf16.mxu0 %v2493
      %2812 = vmatpush1.bf16.msra.mxu0 %v2492
      %2813 = vmatprep.subr.bf16.mxu0 %v2497
      %2814 = vmatpush1.bf16.msra.mxu0 %v2496
      %2815 = vmatprep.subr.bf16.mxu0 0
      %2816 = vmatpush1.bf16.msra.mxu0 0
      %2817 = vmatprep.subr.bf16.mxu0 0
      %2818 = vmatpush1.bf16.msra.mxu0 0
      %2819 = vmatprep.subr.bf16.mxu0 0
      %2820 = vmatpush1.bf16.msra.mxu0 0
      %2821 = vmatprep.subr.bf16.mxu0 0
      %2822 = vmatpush1.bf16.msra.mxu0 0
      %2823 = vmatprep.subr.bf16.mxu0 0
      %2824 = vmatpush1.bf16.msra.mxu0 0
      %2825 = vmatprep.subr.bf16.mxu0 0
      %2826 = vmatpush1.bf16.msra.mxu0 0
      %2827 = vmatprep.subr.bf16.mxu0 0
      %2828 = vmatpush1.bf16.msra.mxu0 0
      %2829 = vmatprep.subr.bf16.mxu0 0
      %2830 = vmatpush1.bf16.msra.mxu0 0
      %2831 = vmatprep.subr.bf16.mxu0 0
      %2832 = vmatpush1.bf16.msra.mxu0 0
      %2833 = vmatprep.subr.bf16.mxu0 0
      %2834 = vmatpush1.bf16.msra.mxu0 0
      %2835 = vmatprep.subr.bf16.mxu0 0
      %2836 = vmatpush1.bf16.msra.mxu0 0
      %2837 = vmatprep.subr.bf16.mxu0 0
      %2838 = vmatpush1.bf16.msra.mxu0 0
      %2839 = vmatprep.mubr.bf16.mxu0 0
      %2840 = vmatmul.mubr.bf16.gmra.mrb[0].mxu0 %v2650
      %v2841 = vpop.f32.mrb[0].mxu0
      %v2842 = vadd.f32 %v2769, %v2841
      %v2843 = vpop.f32.mrb[0].mxu0
      %v2844 = vadd.f32 %v2771, %v2843
      %v2845 = vpop.f32.mrb[0].mxu0
      %v2846 = vadd.f32 %v2773, %v2845
      %v2847 = vpop.f32.mrb[0].mxu0
      %v2848 = vadd.f32 %v2775, %v2847
      %2849 = vmatprep.mubr.bf16.mxu0 0
      %2850 = vmatmul.mubr.bf16.gmra.mrb[0].mxu0 %v2653
      %v2851 = vpop.f32.mrb[0].mxu0
      %v2852 = vadd.f32 %v2779, %v2851
      %v2853 = vpop.f32.mrb[0].mxu0
      %v2854 = vadd.f32 %v2781, %v2853
      %v2855 = vpop.f32.mrb[0].mxu0
      %v2856 = vadd.f32 %v2783, %v2855
      %v2857 = vpop.f32.mrb[0].mxu0
      %v2858 = vadd.f32 %v2785, %v2857
      %2859 = vmatprep.mubr.bf16.mxu0 0
      %2860 = vmatmul.mubr.bf16.gmra.mrb[0].mxu0 %v2656
      %v2861 = vpop.f32.mrb[0].mxu0
      %v2862 = vadd.f32 %v2789, %v2861
      %v2863 = vpop.f32.mrb[0].mxu0
      %v2864 = vadd.f32 %v2791, %v2863
      %v2865 = vpop.f32.mrb[0].mxu0
      %v2866 = vadd.f32 %v2793, %v2865
      %v2867 = vpop.f32.mrb[0].mxu0
      %v2868 = vadd.f32 %v2795, %v2867
      %2869 = vmatprep.mubr.bf16.mxu0 0
      %2870 = vmatmul.mubr.bf16.gmra.mrb[0].mxu0 %v2659
      %v2871 = vpop.f32.mrb[0].mxu0
      %v2872 = vadd.f32 %v2799, %v2871
      %v2873 = vpop.f32.mrb[0].mxu0
      %v2874 = vadd.f32 %v2801, %v2873
      %v2875 = vpop.f32.mrb[0].mxu0
      %v2876 = vadd.f32 %v2803, %v2875
      %v2877 = vpop.f32.mrb[0].mxu0
      %v2878 = vadd.f32 %v2805, %v2877
      %2879 = vdwg.mxu0
      %2880 = vmatprep.subr.bf16.mxu0 %v2359
      %2881 = vmatpush1.bf16.msra.mxu0 %v2358
      %2882 = vmatprep.subr.bf16.mxu0 %v2363
      %2883 = vmatpush1.bf16.msra.mxu0 %v2362
      %2884 = vmatprep.subr.bf16.mxu0 %v2367
      %2885 = vmatpush1.bf16.msra.mxu0 %v2366
      %2886 = vmatprep.subr.bf16.mxu0 %v2371
      %2887 = vmatpush1.bf16.msra.mxu0 %v2370
      %2888 = vmatprep.subr.bf16.mxu0 %v2375
      %2889 = vmatpush1.bf16.msra.mxu0 %v2374
      %2890 = vmatprep.subr.bf16.mxu0 %v2379
      %2891 = vmatpush1.bf16.msra.mxu0 %v2378
      %2892 = vmatprep.subr.bf16.mxu0 %v2383
      %2893 = vmatpush1.bf16.msra.mxu0 %v2382
      %2894 = vmatprep.subr.bf16.mxu0 %v2387
      %2895 = vmatpush1.bf16.msra.mxu0 %v2386
      %2896 = vmatprep.subr.bf16.mxu0 %v2391
      %2897 = vmatpush1.bf16.msra.mxu0 %v2390
      %2898 = vmatprep.subr.bf16.mxu0 %v2395
      %2899 = vmatpush1.bf16.msra.mxu0 %v2394
      %2900 = vmatprep.subr.bf16.mxu0 %v2399
      %2901 = vmatpush1.bf16.msra.mxu0 %v2398
      %2902 = vmatprep.subr.bf16.mxu0 %v2403
      %2903 = vmatpush1.bf16.msra.mxu0 %v2402
      %2904 = vmatprep.subr.bf16.mxu0 %v2407
      %2905 = vmatpush1.bf16.msra.mxu0 %v2406
      %2906 = vmatprep.subr.bf16.mxu0 %v2411
      %2907 = vmatpush1.bf16.msra.mxu0 %v2410
      %2908 = vmatprep.subr.bf16.mxu0 %v2415
      %2909 = vmatpush1.bf16.msra.mxu0 %v2414
      %2910 = vmatprep.subr.bf16.mxu0 %v2419
      %2911 = vmatpush1.bf16.msra.mxu0 %v2418
      %2912 = vmatprep.mubr.bf16.mxu0 %v2613
      %2913 = vmatmul.mubr.bf16.gmra.mrb[0].mxu0 %v2612
      %v2914 = vpop.f32.mrb[0].mxu0
      %v2915 = vadd.f32 %v2511, %v2914
      %v2916 = vpop.f32.mrb[0].mxu0
      %v2917 = vadd.f32 %v2511, %v2916
      %v2918 = vpop.f32.mrb[0].mxu0
      %v2919 = vadd.f32 %v2516, %v2918
      %v2920 = vpop.f32.mrb[0].mxu0
      %v2921 = vadd.f32 %v2516, %v2920
      %2922 = vmatprep.mubr.bf16.mxu0 %v2618
      %2923 = vmatmul.mubr.bf16.gmra.mrb[0].mxu0 %v2617
      %v2924 = vpop.f32.mrb[0].mxu0
      %v2925 = vadd.f32 %v2521, %v2924
      %v2926 = vpop.f32.mrb[0].mxu0
      %v2927 = vadd.f32 %v2521, %v2926
      %v2928 = vpop.f32.mrb[0].mxu0
      %v2929 = vadd.f32 %v2526, %v2928
      %v2930 = vpop.f32.mrb[0].mxu0
      %v2931 = vadd.f32 %v2526, %v2930
      %2932 = vmatprep.mubr.bf16.mxu0 %v2623
      %2933 = vmatmul.mubr.bf16.gmra.mrb[0].mxu0 %v2622
      %v2934 = vpop.f32.mrb[0].mxu0
      %v2935 = vadd.f32 %v2531, %v2934
      %v2936 = vpop.f32.mrb[0].mxu0
      %v2937 = vadd.f32 %v2531, %v2936
      %v2938 = vpop.f32.mrb[0].mxu0
      %v2939 = vadd.f32 %v2536, %v2938
      %v2940 = vpop.f32.mrb[0].mxu0
      %v2941 = vadd.f32 %v2536, %v2940
      %2942 = vmatprep.mubr.bf16.mxu0 %v2628
      %2943 = vmatmul.mubr.bf16.gmra.mrb[0].mxu0 %v2627
      %v2944 = vpop.f32.mrb[0].mxu0
      %v2945 = vadd.f32 %v2541, %v2944
      %v2946 = vpop.f32.mrb[0].mxu0
      %v2947 = vadd.f32 %v2541, %v2946
      %v2948 = vpop.f32.mrb[0].mxu0
      %v2949 = vadd.f32 %v2546, %v2948
      %v2950 = vpop.f32.mrb[0].mxu0
      %v2951 = vadd.f32 %v2546, %v2950
      %2952 = vdwg.mxu0
      %2953 = vmatprep.subr.bf16.mxu0 %v2423
      %2954 = vmatpush1.bf16.msra.mxu0 %v2422
      %2955 = vmatprep.subr.bf16.mxu0 %v2427
      %2956 = vmatpush1.bf16.msra.mxu0 %v2426
      %2957 = vmatprep.subr.bf16.mxu0 %v2431
      %2958 = vmatpush1.bf16.msra.mxu0 %v2430
      %2959 = vmatprep.subr.bf16.mxu0 %v2435
      %2960 = vmatpush1.bf16.msra.mxu0 %v2434
      %2961 = vmatprep.subr.bf16.mxu0 %v2439
      %2962 = vmatpush1.bf16.msra.mxu0 %v2438
      %2963 = vmatprep.subr.bf16.mxu0 %v2443
      %2964 = vmatpush1.bf16.msra.mxu0 %v2442
      %2965 = vmatprep.subr.bf16.mxu0 %v2447
      %2966 = vmatpush1.bf16.msra.mxu0 %v2446
      %2967 = vmatprep.subr.bf16.mxu0 %v2451
      %2968 = vmatpush1.bf16.msra.mxu0 %v2450
      %2969 = vmatprep.subr.bf16.mxu0 %v2455
      %2970 = vmatpush1.bf16.msra.mxu0 %v2454
      %2971 = vmatprep.subr.bf16.mxu0 %v2459
      %2972 = vmatpush1.bf16.msra.mxu0 %v2458
      %2973 = vmatprep.subr.bf16.mxu0 %v2463
      %2974 = vmatpush1.bf16.msra.mxu0 %v2462
      %2975 = vmatprep.subr.bf16.mxu0 %v2467
      %2976 = vmatpush1.bf16.msra.mxu0 %v2466
      %2977 = vmatprep.subr.bf16.mxu0 %v2471
      %2978 = vmatpush1.bf16.msra.mxu0 %v2470
      %2979 = vmatprep.subr.bf16.mxu0 %v2475
      %2980 = vmatpush1.bf16.msra.mxu0 %v2474
      %2981 = vmatprep.subr.bf16.mxu0 %v2479
      %2982 = vmatpush1.bf16.msra.mxu0 %v2478
      %2983 = vmatprep.subr.bf16.mxu0 %v2483
      %2984 = vmatpush1.bf16.msra.mxu0 %v2482
      %2985 = vmatprep.mubr.bf16.mxu0 %v2615
      %2986 = vmatmul.mubr.bf16.gmra.mrb[0].mxu0 %v2614
      %v2987 = vpop.f32.mrb[0].mxu0
      %v2988 = vadd.f32 %v2915, %v2987
      %v2989 = vpop.f32.mrb[0].mxu0
      %v2990 = vadd.f32 %v2917, %v2989
      %v2991 = vpop.f32.mrb[0].mxu0
      %v2992 = vadd.f32 %v2919, %v2991
      %v2993 = vpop.f32.mrb[0].mxu0
      %v2994 = vadd.f32 %v2921, %v2993
      %2995 = vmatprep.mubr.bf16.mxu0 %v2620
      %2996 = vmatmul.mubr.bf16.gmra.mrb[0].mxu0 %v2619
      %v2997 = vpop.f32.mrb[0].mxu0
      %v2998 = vadd.f32 %v2925, %v2997
      %v2999 = vpop.f32.mrb[0].mxu0
      %v3000 = vadd.f32 %v2927, %v2999
      %v3001 = vpop.f32.mrb[0].mxu0
      %v3002 = vadd.f32 %v2929, %v3001
      %v3003 = vpop.f32.mrb[0].mxu0
      %v3004 = vadd.f32 %v2931, %v3003
      %3005 = vmatprep.mubr.bf16.mxu0 %v2625
      %3006 = vmatmul.mubr.bf16.gmra.mrb[0].mxu0 %v2624
      %v3007 = vpop.f32.mrb[0].mxu0
      %v3008 = vadd.f32 %v2935, %v3007
      %v3009 = vpop.f32.mrb[0].mxu0
      %v3010 = vadd.f32 %v2937, %v3009
      %v3011 = vpop.f32.mrb[0].mxu0
      %v3012 = vadd.f32 %v2939, %v3011
      %v3013 = vpop.f32.mrb[0].mxu0
      %v3014 = vadd.f32 %v2941, %v3013
      %3015 = vmatprep.mubr.bf16.mxu0 %v2630
      %3016 = vmatmul.mubr.bf16.gmra.mrb[0].mxu0 %v2629
      %v3017 = vpop.f32.mrb[0].mxu0
      %v3018 = vadd.f32 %v2945, %v3017
      %v3019 = vpop.f32.mrb[0].mxu0
      %v3020 = vadd.f32 %v2947, %v3019
      %v3021 = vpop.f32.mrb[0].mxu0
      %v3022 = vadd.f32 %v2949, %v3021
      %v3023 = vpop.f32.mrb[0].mxu0
      %v3024 = vadd.f32 %v2951, %v3023
      %3025 = vdwg.mxu0
      %3026 = vmatprep.subr.bf16.mxu0 %v2487
      %3027 = vmatpush1.bf16.msra.mxu0 %v2486
      %3028 = vmatprep.subr.bf16.mxu0 %v2491
      %3029 = vmatpush1.bf16.msra.mxu0 %v2490
      %3030 = vmatprep.subr.bf16.mxu0 %v2495
      %3031 = vmatpush1.bf16.msra.mxu0 %v2494
      %3032 = vmatprep.subr.bf16.mxu0 %v2499
      %3033 = vmatpush1.bf16.msra.mxu0 %v2498
      %3034 = vmatprep.subr.bf16.mxu0 0
      %3035 = vmatpush1.bf16.msra.mxu0 0
      %3036 = vmatprep.subr.bf16.mxu0 0
      %3037 = vmatpush1.bf16.msra.mxu0 0
      %3038 = vmatprep.subr.bf16.mxu0 0
      %3039 = vmatpush1.bf16.msra.mxu0 0
      %3040 = vmatprep.subr.bf16.mxu0 0
      %3041 = vmatpush1.bf16.msra.mxu0 0
      %3042 = vmatprep.subr.bf16.mxu0 0
      %3043 = vmatpush1.bf16.msra.mxu0 0
      %3044 = vmatprep.subr.bf16.mxu0 0
      %3045 = vmatpush1.bf16.msra.mxu0 0
      %3046 = vmatprep.subr.bf16.mxu0 0
      %3047 = vmatpush1.bf16.msra.mxu0 0
      %3048 = vmatprep.subr.bf16.mxu0 0
      %3049 = vmatpush1.bf16.msra.mxu0 0
      %3050 = vmatprep.subr.bf16.mxu0 0
      %3051 = vmatpush1.bf16.msra.mxu0 0
      %3052 = vmatprep.subr.bf16.mxu0 0
      %3053 = vmatpush1.bf16.msra.mxu0 0
      %3054 = vmatprep.subr.bf16.mxu0 0
      %3055 = vmatpush1.bf16.msra.mxu0 0
      %3056 = vmatprep.subr.bf16.mxu0 0
      %3057 = vmatpush1.bf16.msra.mxu0 0
      %3058 = vmatprep.mubr.bf16.mxu0 0
      %3059 = vmatmul.mubr.bf16.gmra.mrb[0].mxu0 %v2650
      %v3060 = vpop.f32.mrb[0].mxu0
      %v3061 = vadd.f32 %v2988, %v3060
      %v3062 = vpop.f32.mrb[0].mxu0
      %v3063 = vadd.f32 %v2990, %v3062
      %v3064 = vpop.f32.mrb[0].mxu0
      %v3065 = vadd.f32 %v2992, %v3064
      %v3066 = vpop.f32.mrb[0].mxu0
      %v3067 = vadd.f32 %v2994, %v3066
      %3068 = vmatprep.mubr.bf16.mxu0 0
      %3069 = vmatmul.mubr.bf16.gmra.mrb[0].mxu0 %v2653
      %v3070 = vpop.f32.mrb[0].mxu0
      %v3071 = vadd.f32 %v2998, %v3070
      %v3072 = vpop.f32.mrb[0].mxu0
      %v3073 = vadd.f32 %v3000, %v3072
      %v3074 = vpop.f32.mrb[0].mxu0
      %v3075 = vadd.f32 %v3002, %v3074
      %v3076 = vpop.f32.mrb[0].mxu0
      %v3077 = vadd.f32 %v3004, %v3076
      %3078 = vmatprep.mubr.bf16.mxu0 0
      %3079 = vmatmul.mubr.bf16.gmra.mrb[0].mxu0 %v2656
      %v3080 = vpop.f32.mrb[0].mxu0
      %v3081 = vadd.f32 %v3008, %v3080
      %v3082 = vpop.f32.mrb[0].mxu0
      %v3083 = vadd.f32 %v3010, %v3082
      %v3084 = vpop.f32.mrb[0].mxu0
      %v3085 = vadd.f32 %v3012, %v3084
      %v3086 = vpop.f32.mrb[0].mxu0
      %v3087 = vadd.f32 %v3014, %v3086
      %3088 = vmatprep.mubr.bf16.mxu0 0
      %3089 = vmatmul.mubr.bf16.gmra.mrb[0].mxu0 %v2659
      %v3090 = vpop.f32.mrb[0].mxu0
      %v3091 = vadd.f32 %v3018, %v3090
      %v3092 = vpop.f32.mrb[0].mxu0
      %v3093 = vadd.f32 %v3020, %v3092
      %v3094 = vpop.f32.mrb[0].mxu0
      %v3095 = vadd.f32 %v3022, %v3094
      %v3096 = vpop.f32.mrb[0].mxu0
      %v3097 = vadd.f32 %v3024, %v3096
      %3098 = vdwg.mxu0
      %3099 = vst [vmem:[#allocation2] sm:$0xff] %v2842
      %3100 = vst [vmem:[#allocation2 + $0x8] sm:$0xff] %v2844
      %3101 = vst [vmem:[#allocation2 + $0x10] sm:$0xff] %v3061
      %3102 = vst [vmem:[#allocation2 + $0x18] sm:$0xff] %v3063
      %3103 = vst [vmem:[#allocation2 + $0x20] sm:$0xff] %v2846
      %3104 = vst [vmem:[#allocation2 + $0x28] sm:$0xff] %v2848
      %3105 = vst [vmem:[#allocation2 + $0x30] sm:$0xff] %v3065
      %3106 = vst [vmem:[#allocation2 + $0x38] sm:$0xff] %v3067
      %3107 = vst [vmem:[#allocation2 + $0x40] sm:$0xff] %v2852
      %3108 = vst [vmem:[#allocation2 + $0x48] sm:$0xff] %v2854
      %3109 = vst [vmem:[#allocation2 + $0x50] sm:$0xff] %v3071
      %3110 = vst [vmem:[#allocation2 + $0x58] sm:$0xff] %v3073
      %3111 = vst [vmem:[#allocation2 + $0x60] sm:$0xff] %v2856
      %3112 = vst [vmem:[#allocation2 + $0x68] sm:$0xff] %v2858
      %3113 = vst [vmem:[#allocation2 + $0x70] sm:$0xff] %v3075
      %3114 = vst [vmem:[#allocation2 + $0x78] sm:$0xff] %v3077
      %3115 = vst [vmem:[#allocation2 + $0x80] sm:$0xff] %v2862
      %3116 = vst [vmem:[#allocation2 + $0x88] sm:$0xff] %v2864
      %3117 = vst [vmem:[#allocation2 + $0x90] sm:$0xff] %v3081
      %3118 = vst [vmem:[#allocation2 + $0x98] sm:$0xff] %v3083
      %3119 = vst [vmem:[#allocation2 + $0xa0] sm:$0xff] %v2866
      %3120 = vst [vmem:[#allocation2 + $0xa8] sm:$0xff] %v2868
      %3121 = vst [vmem:[#allocation2 + $0xb0] sm:$0xff] %v3085
      %3122 = vst [vmem:[#allocation2 + $0xb8] sm:$0xff] %v3087
      %3123 = vst [vmem:[#allocation2 + $0xc0] sm:$0xff] %v2872
      %3124 = vst [vmem:[#allocation2 + $0xc8] sm:$0xff] %v2874
      %3125 = vst [vmem:[#allocation2 + $0xd0] sm:$0xff] %v3091
      %3126 = vst [vmem:[#allocation2 + $0xd8] sm:$0xff] %v3093
      %3127 = vst [vmem:[#allocation2 + $0xe0] sm:$0xff] %v2876
      %3128 = vst [vmem:[#allocation2 + $0xe8] sm:$0xff] %v2878
      %3129 = vst [vmem:[#allocation2 + $0xf0] sm:$0xff] %v3095
      %3130 = vst [vmem:[#allocation2 + $0xf8] sm:$0xff] %v3097
      %v3131 = vld [vmem:[#allocation2] sm:$0xff]
      %v3132 = vld [vmem:[#allocation2 + $0x8] sm:$0xff]
      %v3133 = vld [vmem:[#allocation2 + $0x10] sm:$0xff]
      %v3134 = vld [vmem:[#allocation2 + $0x18] sm:$0xff]
      %v3135 = vld [vmem:[#allocation2 + $0x20] sm:$0xff]
      %v3136 = vld [vmem:[#allocation2 + $0x28] sm:$0xff]
      %v3137 = vld [vmem:[#allocation2 + $0x30] sm:$0xff]
      %v3138 = vld [vmem:[#allocation2 + $0x38] sm:$0xff]
      %v3139 = vld [vmem:[#allocation2 + $0x40] sm:$0xff]
      %v3140 = vld [vmem:[#allocation2 + $0x48] sm:$0xff]
      %v3141 = vld [vmem:[#allocation2 + $0x50] sm:$0xff]
      %v3142 = vld [vmem:[#allocation2 + $0x58] sm:$0xff]
      %v3143 = vld [vmem:[#allocation2 + $0x60] sm:$0xff]
      %v3144 = vld [vmem:[#allocation2 + $0x68] sm:$0xff]
      %v3145 = vld [vmem:[#allocation2 + $0x70] sm:$0xff]
      %v3146 = vld [vmem:[#allocation2 + $0x78] sm:$0xff]
      %v3147 = vld [vmem:[#allocation2 + $0x80] sm:$0xff]
      %v3148 = vld [vmem:[#allocation2 + $0x88] sm:$0xff]
      %v3149 = vld [vmem:[#allocation2 + $0x90] sm:$0xff]
      %v3150 = vld [vmem:[#allocation2 + $0x98] sm:$0xff]
      %v3151 = vld [vmem:[#allocation2 + $0xa0] sm:$0xff]
      %v3152 = vld [vmem:[#allocation2 + $0xa8] sm:$0xff]
      %v3153 = vld [vmem:[#allocation2 + $0xb0] sm:$0xff]
      %v3154 = vld [vmem:[#allocation2 + $0xb8] sm:$0xff]
      %v3155 = vld [vmem:[#allocation2 + $0xc0] sm:$0xff]
      %v3156 = vld [vmem:[#allocation2 + $0xc8] sm:$0xff]
      %v3157 = vld [vmem:[#allocation2 + $0xd0] sm:$0xff]
      %v3158 = vld [vmem:[#allocation2 + $0xd8] sm:$0xff]
      %v3159 = vld [vmem:[#allocation2 + $0xe0] sm:$0xff]
      %v3160 = vld [vmem:[#allocation2 + $0xe8] sm:$0xff]
      %v3161 = vld [vmem:[#allocation2 + $0xf0] sm:$0xff]
      %v3162 = vld [vmem:[#allocation2 + $0xf8] sm:$0xff]
      %v3163 = vadd.f32 %v3131, %v3132
      %v3164 = vadd.f32 %v3163, %v3133
      %v3165 = vadd.f32 %v3164, %v3134
      %3166 = vadd.xlane.f32.xlu0 %v3165
      %v3167 = vpop.xlane.xlu0 %3166
      %v3168 = vadd.f32 %v3135, %v3136
      %v3169 = vadd.f32 %v3168, %v3137
      %v3170 = vadd.f32 %v3169, %v3138
      %3171 = vadd.xlane.f32.xlu0 %v3170
      %v3172 = vpop.xlane.xlu0 %3171
      %v3173 = vadd.f32 %v3139, %v3140
      %v3174 = vadd.f32 %v3173, %v3141
      %v3175 = vadd.f32 %v3174, %v3142
      %3176 = vadd.xlane.f32.xlu0 %v3175
      %v3177 = vpop.xlane.xlu0 %3176
      %v3178 = vadd.f32 %v3143, %v3144
      %v3179 = vadd.f32 %v3178, %v3145
      %v3180 = vadd.f32 %v3179, %v3146
      %3181 = vadd.xlane.f32.xlu0 %v3180
      %v3182 = vpop.xlane.xlu0 %3181
      %v3183 = vadd.f32 %v3147, %v3148
      %v3184 = vadd.f32 %v3183, %v3149
      %v3185 = vadd.f32 %v3184, %v3150
      %3186 = vadd.xlane.f32.xlu0 %v3185
      %v3187 = vpop.xlane.xlu0 %3186
      %v3188 = vadd.f32 %v3151, %v3152
      %v3189 = vadd.f32 %v3188, %v3153
      %v3190 = vadd.f32 %v3189, %v3154
      %3191 = vadd.xlane.f32.xlu0 %v3190
      %v3192 = vpop.xlane.xlu0 %3191
      %v3193 = vadd.f32 %v3155, %v3156
      %v3194 = vadd.f32 %v3193, %v3157
      %v3195 = vadd.f32 %v3194, %v3158
      %3196 = vadd.xlane.f32.xlu0 %v3195
      %v3197 = vpop.xlane.xlu0 %3196
      %v3198 = vadd.f32 %v3159, %v3160
      %v3199 = vadd.f32 %v3198, %v3161
      %v3200 = vadd.f32 %v3199, %v3162
      %3201 = vadd.xlane.f32.xlu0 %v3200
      %v3202 = vpop.xlane.xlu0 %3201
      %v3203 = vmul.f32 %v3167, 0.001953125
      %v3204 = vmul.f32 %v3172, 0.001953125
      %v3205 = vmul.f32 %v3177, 0.001953125
      %v3206 = vmul.f32 %v3182, 0.001953125
      %v3207 = vmul.f32 %v3187, 0.001953125
      %v3208 = vmul.f32 %v3192, 0.001953125
      %v3209 = vmul.f32 %v3197, 0.001953125
      %v3210 = vmul.f32 %v3202, 0.001953125
      %v3211 = vsub.f32 %v3131, %v3203
      %v3212 = vsub.f32 %v3132, %v3203
      %v3213 = vsub.f32 %v3133, %v3203
      %v3214 = vsub.f32 %v3134, %v3203
      %v3215 = vsub.f32 %v3135, %v3204
      %v3216 = vsub.f32 %v3136, %v3204
      %v3217 = vsub.f32 %v3137, %v3204
      %v3218 = vsub.f32 %v3138, %v3204
      %v3219 = vsub.f32 %v3139, %v3205
      %v3220 = vsub.f32 %v3140, %v3205
      %v3221 = vsub.f32 %v3141, %v3205
      %v3222 = vsub.f32 %v3142, %v3205
      %v3223 = vsub.f32 %v3143, %v3206
      %v3224 = vsub.f32 %v3144, %v3206
      %v3225 = vsub.f32 %v3145, %v3206
      %v3226 = vsub.f32 %v3146, %v3206
      %v3227 = vsub.f32 %v3147, %v3207
      %v3228 = vsub.f32 %v3148, %v3207
      %v3229 = vsub.f32 %v3149, %v3207
      %v3230 = vsub.f32 %v3150, %v3207
      %v3231 = vsub.f32 %v3151, %v3208
      %v3232 = vsub.f32 %v3152, %v3208
      %v3233 = vsub.f32 %v3153, %v3208
      %v3234 = vsub.f32 %v3154, %v3208
      %v3235 = vsub.f32 %v3155, %v3209
      %v3236 = vsub.f32 %v3156, %v3209
      %v3237 = vsub.f32 %v3157, %v3209
      %v3238 = vsub.f32 %v3158, %v3209
      %v3239 = vsub.f32 %v3159, %v3210
      %v3240 = vsub.f32 %v3160, %v3210
      %v3241 = vsub.f32 %v3161, %v3210
      %v3242 = vsub.f32 %v3162, %v3210
      %v3243 = vmul.f32 %v3211, %v3211
      %v3244 = vmul.f32 %v3212, %v3212
      %v3245 = vmul.f32 %v3213, %v3213
      %v3246 = vmul.f32 %v3214, %v3214
      %v3247 = vmul.f32 %v3215, %v3215
      %v3248 = vmul.f32 %v3216, %v3216
      %v3249 = vmul.f32 %v3217, %v3217
      %v3250 = vmul.f32 %v3218, %v3218
      %v3251 = vmul.f32 %v3219, %v3219
      %v3252 = vmul.f32 %v3220, %v3220
      %v3253 = vmul.f32 %v3221, %v3221
      %v3254 = vmul.f32 %v3222, %v3222
      %v3255 = vmul.f32 %v3223, %v3223
      %v3256 = vmul.f32 %v3224, %v3224
      %v3257 = vmul.f32 %v3225, %v3225
      %v3258 = vmul.f32 %v3226, %v3226
      %v3259 = vmul.f32 %v3227, %v3227
      %v3260 = vmul.f32 %v3228, %v3228
      %v3261 = vmul.f32 %v3229, %v3229
      %v3262 = vmul.f32 %v3230, %v3230
      %v3263 = vmul.f32 %v3231, %v3231
      %v3264 = vmul.f32 %v3232, %v3232
      %v3265 = vmul.f32 %v3233, %v3233
      %v3266 = vmul.f32 %v3234, %v3234
      %v3267 = vmul.f32 %v3235, %v3235
      %v3268 = vmul.f32 %v3236, %v3236
      %v3269 = vmul.f32 %v3237, %v3237
      %v3270 = vmul.f32 %v3238, %v3238
      %v3271 = vmul.f32 %v3239, %v3239
      %v3272 = vmul.f32 %v3240, %v3240
      %v3273 = vmul.f32 %v3241, %v3241
      %v3274 = vmul.f32 %v3242, %v3242
      %v3275 = vadd.f32 %v3243, %v3244
      %v3276 = vadd.f32 %v3275, %v3245
      %v3277 = vadd.f32 %v3276, %v3246
      %3278 = vadd.xlane.f32.xlu0 %v3277
      %v3279 = vpop.xlane.xlu0 %3278
      %v3280 = vadd.f32 %v3247, %v3248
      %v3281 = vadd.f32 %v3280, %v3249
      %v3282 = vadd.f32 %v3281, %v3250
      %3283 = vadd.xlane.f32.xlu0 %v3282
      %v3284 = vpop.xlane.xlu0 %3283
      %v3285 = vadd.f32 %v3251, %v3252
      %v3286 = vadd.f32 %v3285, %v3253
      %v3287 = vadd.f32 %v3286, %v3254
      %3288 = vadd.xlane.f32.xlu0 %v3287
      %v3289 = vpop.xlane.xlu0 %3288
      %v3290 = vadd.f32 %v3255, %v3256
      %v3291 = vadd.f32 %v3290, %v3257
      %v3292 = vadd.f32 %v3291, %v3258
      %3293 = vadd.xlane.f32.xlu0 %v3292
      %v3294 = vpop.xlane.xlu0 %3293
      %v3295 = vadd.f32 %v3259, %v3260
      %v3296 = vadd.f32 %v3295, %v3261
      %v3297 = vadd.f32 %v3296, %v3262
      %3298 = vadd.xlane.f32.xlu0 %v3297
      %v3299 = vpop.xlane.xlu0 %3298
      %v3300 = vadd.f32 %v3263, %v3264
      %v3301 = vadd.f32 %v3300, %v3265
      %v3302 = vadd.f32 %v3301, %v3266
      %3303 = vadd.xlane.f32.xlu0 %v3302
      %v3304 = vpop.xlane.xlu0 %3303
      %v3305 = vadd.f32 %v3267, %v3268
      %v3306 = vadd.f32 %v3305, %v3269
      %v3307 = vadd.f32 %v3306, %v3270
      %3308 = vadd.xlane.f32.xlu0 %v3307
      %v3309 = vpop.xlane.xlu0 %3308
      %v3310 = vadd.f32 %v3271, %v3272
      %v3311 = vadd.f32 %v3310, %v3273
      %v3312 = vadd.f32 %v3311, %v3274
      %3313 = vadd.xlane.f32.xlu0 %v3312
      %v3314 = vpop.xlane.xlu0 %3313
      %v3315 = vmul.f32 %v3279, 0.001953125
      %v3316 = vmul.f32 %v3284, 0.001953125
      %v3317 = vmul.f32 %v3289, 0.001953125
      %v3318 = vmul.f32 %v3294, 0.001953125
      %v3319 = vmul.f32 %v3299, 0.001953125
      %v3320 = vmul.f32 %v3304, 0.001953125
      %v3321 = vmul.f32 %v3309, 0.001953125
      %v3322 = vmul.f32 %v3314, 0.001953125
      %v3323 = vld [vmem:[%s298] sm:$0xff]
      %v3324 = vld [vmem:[%s298 + $0x8] sm:$0xff]
      %v3325 = vld [vmem:[%s298 + $0x10] sm:$0xff]
      %v3326 = vld [vmem:[%s298 + $0x18] sm:$0xff]
      %v3327 = vld [vmem:[%s298 + $0x20] sm:$0xff]
      %v3328 = vld [vmem:[%s298 + $0x28] sm:$0xff]
      %v3329 = vld [vmem:[%s298 + $0x30] sm:$0xff]
      %v3330 = vld [vmem:[%s298 + $0x38] sm:$0xff]
      %v3331 = vadd.f32 %v3315, 1e-05
      %v3332 = vadd.f32 %v3316, 1e-05
      %v3333 = vadd.f32 %v3317, 1e-05
      %v3334 = vadd.f32 %v3318, 1e-05
      %v3335 = vadd.f32 %v3319, 1e-05
      %v3336 = vadd.f32 %v3320, 1e-05
      %v3337 = vadd.f32 %v3321, 1e-05
      %v3338 = vadd.f32 %v3322, 1e-05
      %v3339 = vrsqrt.pop %v3331
      %v3340 = vrsqrt.pop %v3332
      %v3341 = vrsqrt.pop %v3333
      %v3342 = vrsqrt.pop %v3334
      %v3343 = vrsqrt.pop %v3335
      %v3344 = vrsqrt.pop %v3336
      %v3345 = vrsqrt.pop %v3337
      %v3346 = vrsqrt.pop %v3338
      %v3347 = vmul.f32 %v3323, %v3339
      %v3348 = vmul.f32 %v3324, %v3340
      %v3349 = vmul.f32 %v3325, %v3341
      %v3350 = vmul.f32 %v3326, %v3342
      %v3351 = vmul.f32 %v3327, %v3343
      %v3352 = vmul.f32 %v3328, %v3344
      %v3353 = vmul.f32 %v3329, %v3345
      %v3354 = vmul.f32 %v3330, %v3346
      %v3355 = vld [vmem:[%s303] sm:$0xff]
      %v3356 = vld [vmem:[%s303 + $0x8] sm:$0xff]
      %v3357 = vld [vmem:[%s303 + $0x10] sm:$0xff]
      %v3358 = vld [vmem:[%s303 + $0x18] sm:$0xff]
      %v3359 = vld [vmem:[%s303 + $0x20] sm:$0xff]
      %v3360 = vld [vmem:[%s303 + $0x28] sm:$0xff]
      %v3361 = vld [vmem:[%s303 + $0x30] sm:$0xff]
      %v3362 = vld [vmem:[%s303 + $0x38] sm:$0xff]
      %v3363 = vmul.f32 %v3203, %v3347
      %v3364 = vmul.f32 %v3204, %v3348
      %v3365 = vmul.f32 %v3205, %v3349
      %v3366 = vmul.f32 %v3206, %v3350
      %v3367 = vmul.f32 %v3207, %v3351
      %v3368 = vmul.f32 %v3208, %v3352
      %v3369 = vmul.f32 %v3209, %v3353
      %v3370 = vmul.f32 %v3210, %v3354
      %v3371 = vsub.f32 %v3355, %v3363
      %v3372 = vsub.f32 %v3356, %v3364
      %v3373 = vsub.f32 %v3357, %v3365
      %v3374 = vsub.f32 %v3358, %v3366
      %v3375 = vsub.f32 %v3359, %v3367
      %v3376 = vsub.f32 %v3360, %v3368
      %v3377 = vsub.f32 %v3361, %v3369
      %v3378 = vsub.f32 %v3362, %v3370
      %s3379 = scalar_select %p407, 1, 0
      %s3380 = scvt.s32.f32 %s3379
      %v3381 = vstv %s3380
      %v3382 = vmul.f32 %v3347, %v3381
      %v3383 = vmul.f32 %v3348, %v3381
      %v3384 = vmul.f32 %v3349, %v3381
      %v3385 = vmul.f32 %v3350, %v3381
      %v3386 = vmul.f32 %v3351, %v3381
      %v3387 = vmul.f32 %v3352, %v3381
      %v3388 = vmul.f32 %v3353, %v3381
      %v3389 = vmul.f32 %v3354, %v3381
      %s3390 = ssub.f32 1.0, %s3380
      %v3391 = vstv %s3390
      %v3392 = vadd.f32 %v3382, %v3391
      %v3393 = vadd.f32 %v3383, %v3391
      %v3394 = vadd.f32 %v3384, %v3391
      %v3395 = vadd.f32 %v3385, %v3391
      %v3396 = vadd.f32 %v3386, %v3391
      %v3397 = vadd.f32 %v3387, %v3391
      %v3398 = vadd.f32 %v3388, %v3391
      %v3399 = vadd.f32 %v3389, %v3391
      %v3400 = vmul.f32 %v3371, %v3381
      %v3401 = vmul.f32 %v3372, %v3381
      %v3402 = vmul.f32 %v3373, %v3381
      %v3403 = vmul.f32 %v3374, %v3381
      %v3404 = vmul.f32 %v3375, %v3381
      %v3405 = vmul.f32 %v3376, %v3381
      %v3406 = vmul.f32 %v3377, %v3381
      %v3407 = vmul.f32 %v3378, %v3381
      %3409 = vset.pattern.permute.xlu0 0
      %3410 = vperm.xlu0 %3409, %v3392
      %v3411 = vpop.permute.xlu0 %3410
      %3414 = vset.pattern.permute.xlu0 0
      %3415 = vperm.xlu0 %3414, %v3393
      %v3416 = vpop.permute.xlu0 %3415
      %3419 = vset.pattern.permute.xlu0 0
      %3420 = vperm.xlu0 %3419, %v3394
      %v3421 = vpop.permute.xlu0 %3420
      %3424 = vset.pattern.permute.xlu0 0
      %3425 = vperm.xlu0 %3424, %v3395
      %v3426 = vpop.permute.xlu0 %3425
      %3429 = vset.pattern.permute.xlu0 0
      %3430 = vperm.xlu0 %3429, %v3396
      %v3431 = vpop.permute.xlu0 %3430
      %3434 = vset.pattern.permute.xlu0 0
      %3435 = vperm.xlu0 %3434, %v3397
      %v3436 = vpop.permute.xlu0 %3435
      %3439 = vset.pattern.permute.xlu0 0
      %3440 = vperm.xlu0 %3439, %v3398
      %v3441 = vpop.permute.xlu0 %3440
      %3444 = vset.pattern.permute.xlu0 0
      %3445 = vperm.xlu0 %3444, %v3399
      %v3446 = vpop.permute.xlu0 %3445
      %v3448 = vmul.f32 %v3131, %v3411
      %v3449 = vmul.f32 %v3132, %v3411
      %v3450 = vmul.f32 %v3133, %v3411
      %v3451 = vmul.f32 %v3134, %v3411
      %v3452 = vmul.f32 %v3135, %v3416
      %v3453 = vmul.f32 %v3136, %v3416
      %v3454 = vmul.f32 %v3137, %v3416
      %v3455 = vmul.f32 %v3138, %v3416
      %v3456 = vmul.f32 %v3139, %v3421
      %v3457 = vmul.f32 %v3140, %v3421
      %v3458 = vmul.f32 %v3141, %v3421
      %v3459 = vmul.f32 %v3142, %v3421
      %v3460 = vmul.f32 %v3143, %v3426
      %v3461 = vmul.f32 %v3144, %v3426
      %v3462 = vmul.f32 %v3145, %v3426
      %v3463 = vmul.f32 %v3146, %v3426
      %v3464 = vmul.f32 %v3147, %v3431
      %v3465 = vmul.f32 %v3148, %v3431
      %v3466 = vmul.f32 %v3149, %v3431
      %v3467 = vmul.f32 %v3150, %v3431
      %v3468 = vmul.f32 %v3151, %v3436
      %v3469 = vmul.f32 %v3152, %v3436
      %v3470 = vmul.f32 %v3153, %v3436
      %v3471 = vmul.f32 %v3154, %v3436
      %v3472 = vmul.f32 %v3155, %v3441
      %v3473 = vmul.f32 %v3156, %v3441
      %v3474 = vmul.f32 %v3157, %v3441
      %v3475 = vmul.f32 %v3158, %v3441
      %v3476 = vmul.f32 %v3159, %v3446
      %v3477 = vmul.f32 %v3160, %v3446
      %v3478 = vmul.f32 %v3161, %v3446
      %v3479 = vmul.f32 %v3162, %v3446
      %3481 = vset.pattern.permute.xlu0 0
      %3482 = vperm.xlu0 %3481, %v3400
      %v3483 = vpop.permute.xlu0 %3482
      %3486 = vset.pattern.permute.xlu0 0
      %3487 = vperm.xlu0 %3486, %v3401
      %v3488 = vpop.permute.xlu0 %3487
      %3491 = vset.pattern.permute.xlu0 0
      %3492 = vperm.xlu0 %3491, %v3402
      %v3493 = vpop.permute.xlu0 %3492
      %3496 = vset.pattern.permute.xlu0 0
      %3497 = vperm.xlu0 %3496, %v3403
      %v3498 = vpop.permute.xlu0 %3497
      %3501 = vset.pattern.permute.xlu0 0
      %3502 = vperm.xlu0 %3501, %v3404
      %v3503 = vpop.permute.xlu0 %3502
      %3506 = vset.pattern.permute.xlu0 0
      %3507 = vperm.xlu0 %3506, %v3405
      %v3508 = vpop.permute.xlu0 %3507
      %3511 = vset.pattern.permute.xlu0 0
      %3512 = vperm.xlu0 %3511, %v3406
      %v3513 = vpop.permute.xlu0 %3512
      %3516 = vset.pattern.permute.xlu0 0
      %3517 = vperm.xlu0 %3516, %v3407
      %v3518 = vpop.permute.xlu0 %3517
      %v3520 = vadd.f32 %v3448, %v3483
      %v3521 = vadd.f32 %v3449, %v3483
      %v3522 = vadd.f32 %v3450, %v3483
      %v3523 = vadd.f32 %v3451, %v3483
      %v3524 = vadd.f32 %v3452, %v3488
      %v3525 = vadd.f32 %v3453, %v3488
      %v3526 = vadd.f32 %v3454, %v3488
      %v3527 = vadd.f32 %v3455, %v3488
      %v3528 = vadd.f32 %v3456, %v3493
      %v3529 = vadd.f32 %v3457, %v3493
      %v3530 = vadd.f32 %v3458, %v3493
      %v3531 = vadd.f32 %v3459, %v3493
      %v3532 = vadd.f32 %v3460, %v3498
      %v3533 = vadd.f32 %v3461, %v3498
      %v3534 = vadd.f32 %v3462, %v3498
      %v3535 = vadd.f32 %v3463, %v3498
      %v3536 = vadd.f32 %v3464, %v3503
      %v3537 = vadd.f32 %v3465, %v3503
      %v3538 = vadd.f32 %v3466, %v3503
      %v3539 = vadd.f32 %v3467, %v3503
      %v3540 = vadd.f32 %v3468, %v3508
      %v3541 = vadd.f32 %v3469, %v3508
      %v3542 = vadd.f32 %v3470, %v3508
      %v3543 = vadd.f32 %v3471, %v3508
      %v3544 = vadd.f32 %v3472, %v3513
      %v3545 = vadd.f32 %v3473, %v3513
      %v3546 = vadd.f32 %v3474, %v3513
      %v3547 = vadd.f32 %v3475, %v3513
      %v3548 = vadd.f32 %v3476, %v3518
      %v3549 = vadd.f32 %v3477, %v3518
      %v3550 = vadd.f32 %v3478, %v3518
      %v3551 = vadd.f32 %v3479, %v3518
      %s3552 = scalar_select %p416, 1, 0
      %s3553 = scvt.s32.f32 %s3552
      %v3554 = vld [vmem:[#allocation3] sm:$0xff]
      %v3555 = vld [vmem:[#allocation3 + $0x8] sm:$0xff]
      %v3556 = vld [vmem:[#allocation3 + $0x10] sm:$0xff]
      %v3557 = vld [vmem:[#allocation3 + $0x18] sm:$0xff]
      %v3558 = vld [vmem:[#allocation3 + $0x20] sm:$0xff]
      %v3559 = vld [vmem:[#allocation3 + $0x28] sm:$0xff]
      %v3560 = vld [vmem:[#allocation3 + $0x30] sm:$0xff]
      %v3561 = vld [vmem:[#allocation3 + $0x38] sm:$0xff]
      %v3562 = vld [vmem:[#allocation3 + $0x40] sm:$0xff]
      %v3563 = vld [vmem:[#allocation3 + $0x48] sm:$0xff]
      %v3564 = vld [vmem:[#allocation3 + $0x50] sm:$0xff]
      %v3565 = vld [vmem:[#allocation3 + $0x58] sm:$0xff]
      %v3566 = vld [vmem:[#allocation3 + $0x60] sm:$0xff]
      %v3567 = vld [vmem:[#allocation3 + $0x68] sm:$0xff]
      %v3568 = vld [vmem:[#allocation3 + $0x70] sm:$0xff]
      %v3569 = vld [vmem:[#allocation3 + $0x78] sm:$0xff]
      %v3570 = vld [vmem:[#allocation3 + $0x80] sm:$0xff]
      %v3571 = vld [vmem:[#allocation3 + $0x88] sm:$0xff]
      %v3572 = vld [vmem:[#allocation3 + $0x90] sm:$0xff]
      %v3573 = vld [vmem:[#allocation3 + $0x98] sm:$0xff]
      %v3574 = vld [vmem:[#allocation3 + $0xa0] sm:$0xff]
      %v3575 = vld [vmem:[#allocation3 + $0xa8] sm:$0xff]
      %v3576 = vld [vmem:[#allocation3 + $0xb0] sm:$0xff]
      %v3577 = vld [vmem:[#allocation3 + $0xb8] sm:$0xff]
      %v3578 = vld [vmem:[#allocation3 + $0xc0] sm:$0xff]
      %v3579 = vld [vmem:[#allocation3 + $0xc8] sm:$0xff]
      %v3580 = vld [vmem:[#allocation3 + $0xd0] sm:$0xff]
      %v3581 = vld [vmem:[#allocation3 + $0xd8] sm:$0xff]
      %v3582 = vld [vmem:[#allocation3 + $0xe0] sm:$0xff]
      %v3583 = vld [vmem:[#allocation3 + $0xe8] sm:$0xff]
      %v3584 = vld [vmem:[#allocation3 + $0xf0] sm:$0xff]
      %v3585 = vld [vmem:[#allocation3 + $0xf8] sm:$0xff]
      %v3586 = vstv %s3553
      %v3587 = vmul.f32 %v3586, %v3554
      %v3588 = vmul.f32 %v3586, %v3555
      %v3589 = vmul.f32 %v3586, %v3556
      %v3590 = vmul.f32 %v3586, %v3557
      %v3591 = vmul.f32 %v3586, %v3558
      %v3592 = vmul.f32 %v3586, %v3559
      %v3593 = vmul.f32 %v3586, %v3560
      %v3594 = vmul.f32 %v3586, %v3561
      %v3595 = vmul.f32 %v3586, %v3562
      %v3596 = vmul.f32 %v3586, %v3563
      %v3597 = vmul.f32 %v3586, %v3564
      %v3598 = vmul.f32 %v3586, %v3565
      %v3599 = vmul.f32 %v3586, %v3566
      %v3600 = vmul.f32 %v3586, %v3567
      %v3601 = vmul.f32 %v3586, %v3568
      %v3602 = vmul.f32 %v3586, %v3569
      %v3603 = vmul.f32 %v3586, %v3570
      %v3604 = vmul.f32 %v3586, %v3571
      %v3605 = vmul.f32 %v3586, %v3572
      %v3606 = vmul.f32 %v3586, %v3573
      %v3607 = vmul.f32 %v3586, %v3574
      %v3608 = vmul.f32 %v3586, %v3575
      %v3609 = vmul.f32 %v3586, %v3576
      %v3610 = vmul.f32 %v3586, %v3577
      %v3611 = vmul.f32 %v3586, %v3578
      %v3612 = vmul.f32 %v3586, %v3579
      %v3613 = vmul.f32 %v3586, %v3580
      %v3614 = vmul.f32 %v3586, %v3581
      %v3615 = vmul.f32 %v3586, %v3582
      %v3616 = vmul.f32 %v3586, %v3583
      %v3617 = vmul.f32 %v3586, %v3584
      %v3618 = vmul.f32 %v3586, %v3585
      %v3619 = vadd.f32 %v3520, %v3587
      %v3620 = vadd.f32 %v3521, %v3588
      %v3621 = vadd.f32 %v3522, %v3589
      %v3622 = vadd.f32 %v3523, %v3590
      %v3623 = vadd.f32 %v3524, %v3591
      %v3624 = vadd.f32 %v3525, %v3592
      %v3625 = vadd.f32 %v3526, %v3593
      %v3626 = vadd.f32 %v3527, %v3594
      %v3627 = vadd.f32 %v3528, %v3595
      %v3628 = vadd.f32 %v3529, %v3596
      %v3629 = vadd.f32 %v3530, %v3597
      %v3630 = vadd.f32 %v3531, %v3598
      %v3631 = vadd.f32 %v3532, %v3599
      %v3632 = vadd.f32 %v3533, %v3600
      %v3633 = vadd.f32 %v3534, %v3601
      %v3634 = vadd.f32 %v3535, %v3602
      %v3635 = vadd.f32 %v3536, %v3603
      %v3636 = vadd.f32 %v3537, %v3604
      %v3637 = vadd.f32 %v3538, %v3605
      %v3638 = vadd.f32 %v3539, %v3606
      %v3639 = vadd.f32 %v3540, %v3607
      %v3640 = vadd.f32 %v3541, %v3608
      %v3641 = vadd.f32 %v3542, %v3609
      %v3642 = vadd.f32 %v3543, %v3610
      %v3643 = vadd.f32 %v3544, %v3611
      %v3644 = vadd.f32 %v3545, %v3612
      %v3645 = vadd.f32 %v3546, %v3613
      %v3646 = vadd.f32 %v3547, %v3614
      %v3647 = vadd.f32 %v3548, %v3615
      %v3648 = vadd.f32 %v3549, %v3616
      %v3649 = vadd.f32 %v3550, %v3617
      %v3650 = vadd.f32 %v3551, %v3618
      %s3651 = scalar_select %p410, 1, 0
      %s3652 = scvt.s32.f32 %s3651
      %v3653 = vmax.f32 %v3619, 0.0
      %v3654 = vmax.f32 %v3620, 0.0
      %v3655 = vmax.f32 %v3621, 0.0
      %v3656 = vmax.f32 %v3622, 0.0
      %v3657 = vmax.f32 %v3623, 0.0
      %v3658 = vmax.f32 %v3624, 0.0
      %v3659 = vmax.f32 %v3625, 0.0
      %v3660 = vmax.f32 %v3626, 0.0
      %v3661 = vmax.f32 %v3627, 0.0
      %v3662 = vmax.f32 %v3628, 0.0
      %v3663 = vmax.f32 %v3629, 0.0
      %v3664 = vmax.f32 %v3630, 0.0
      %v3665 = vmax.f32 %v3631, 0.0
      %v3666 = vmax.f32 %v3632, 0.0
      %v3667 = vmax.f32 %v3633, 0.0
      %v3668 = vmax.f32 %v3634, 0.0
      %v3669 = vmax.f32 %v3635, 0.0
      %v3670 = vmax.f32 %v3636, 0.0
      %v3671 = vmax.f32 %v3637, 0.0
      %v3672 = vmax.f32 %v3638, 0.0
      %v3673 = vmax.f32 %v3639, 0.0
      %v3674 = vmax.f32 %v3640, 0.0
      %v3675 = vmax.f32 %v3641, 0.0
      %v3676 = vmax.f32 %v3642, 0.0
      %v3677 = vmax.f32 %v3643, 0.0
      %v3678 = vmax.f32 %v3644, 0.0
      %v3679 = vmax.f32 %v3645, 0.0
      %v3680 = vmax.f32 %v3646, 0.0
      %v3681 = vmax.f32 %v3647, 0.0
      %v3682 = vmax.f32 %v3648, 0.0
      %v3683 = vmax.f32 %v3649, 0.0
      %v3684 = vmax.f32 %v3650, 0.0
      %v3685 = vstv %s3652
      %v3686 = vmul.f32 %v3653, %v3685
      %v3687 = vmul.f32 %v3654, %v3685
      %v3688 = vmul.f32 %v3655, %v3685
      %v3689 = vmul.f32 %v3656, %v3685
      %v3690 = vmul.f32 %v3657, %v3685
      %v3691 = vmul.f32 %v3658, %v3685
      %v3692 = vmul.f32 %v3659, %v3685
      %v3693 = vmul.f32 %v3660, %v3685
      %v3694 = vmul.f32 %v3661, %v3685
      %v3695 = vmul.f32 %v3662, %v3685
      %v3696 = vmul.f32 %v3663, %v3685
      %v3697 = vmul.f32 %v3664, %v3685
      %v3698 = vmul.f32 %v3665, %v3685
      %v3699 = vmul.f32 %v3666, %v3685
      %v3700 = vmul.f32 %v3667, %v3685
      %v3701 = vmul.f32 %v3668, %v3685
      %v3702 = vmul.f32 %v3669, %v3685
      %v3703 = vmul.f32 %v3670, %v3685
      %v3704 = vmul.f32 %v3671, %v3685
      %v3705 = vmul.f32 %v3672, %v3685
      %v3706 = vmul.f32 %v3673, %v3685
      %v3707 = vmul.f32 %v3674, %v3685
      %v3708 = vmul.f32 %v3675, %v3685
      %v3709 = vmul.f32 %v3676, %v3685
      %v3710 = vmul.f32 %v3677, %v3685
      %v3711 = vmul.f32 %v3678, %v3685
      %v3712 = vmul.f32 %v3679, %v3685
      %v3713 = vmul.f32 %v3680, %v3685
      %v3714 = vmul.f32 %v3681, %v3685
      %v3715 = vmul.f32 %v3682, %v3685
      %v3716 = vmul.f32 %v3683, %v3685
      %v3717 = vmul.f32 %v3684, %v3685
      %s3718 = ssub.f32 1.0, %s3652
      %v3719 = vstv %s3718
      %v3720 = vmul.f32 %v3619, %v3719
      %v3721 = vmul.f32 %v3620, %v3719
      %v3722 = vmul.f32 %v3621, %v3719
      %v3723 = vmul.f32 %v3622, %v3719
      %v3724 = vmul.f32 %v3623, %v3719
      %v3725 = vmul.f32 %v3624, %v3719
      %v3726 = vmul.f32 %v3625, %v3719
      %v3727 = vmul.f32 %v3626, %v3719
      %v3728 = vmul.f32 %v3627, %v3719
      %v3729 = vmul.f32 %v3628, %v3719
      %v3730 = vmul.f32 %v3629, %v3719
      %v3731 = vmul.f32 %v3630, %v3719
      %v3732 = vmul.f32 %v3631, %v3719
      %v3733 = vmul.f32 %v3632, %v3719
      %v3734 = vmul.f32 %v3633, %v3719
      %v3735 = vmul.f32 %v3634, %v3719
      %v3736 = vmul.f32 %v3635, %v3719
      %v3737 = vmul.f32 %v3636, %v3719
      %v3738 = vmul.f32 %v3637, %v3719
      %v3739 = vmul.f32 %v3638, %v3719
      %v3740 = vmul.f32 %v3639, %v3719
      %v3741 = vmul.f32 %v3640, %v3719
      %v3742 = vmul.f32 %v3641, %v3719
      %v3743 = vmul.f32 %v3642, %v3719
      %v3744 = vmul.f32 %v3643, %v3719
      %v3745 = vmul.f32 %v3644, %v3719
      %v3746 = vmul.f32 %v3645, %v3719
      %v3747 = vmul.f32 %v3646, %v3719
      %v3748 = vmul.f32 %v3647, %v3719
      %v3749 = vmul.f32 %v3648, %v3719
      %v3750 = vmul.f32 %v3649, %v3719
      %v3751 = vmul.f32 %v3650, %v3719
      %v3752 = vadd.f32 %v3686, %v3720
      %v3753 = vadd.f32 %v3687, %v3721
      %v3754 = vadd.f32 %v3688, %v3722
      %v3755 = vadd.f32 %v3689, %v3723
      %v3756 = vadd.f32 %v3690, %v3724
      %v3757 = vadd.f32 %v3691, %v3725
      %v3758 = vadd.f32 %v3692, %v3726
      %v3759 = vadd.f32 %v3693, %v3727
      %v3760 = vadd.f32 %v3694, %v3728
      %v3761 = vadd.f32 %v3695, %v3729
      %v3762 = vadd.f32 %v3696, %v3730
      %v3763 = vadd.f32 %v3697, %v3731
      %v3764 = vadd.f32 %v3698, %v3732
      %v3765 = vadd.f32 %v3699, %v3733
      %v3766 = vadd.f32 %v3700, %v3734
      %v3767 = vadd.f32 %v3701, %v3735
      %v3768 = vadd.f32 %v3702, %v3736
      %v3769 = vadd.f32 %v3703, %v3737
      %v3770 = vadd.f32 %v3704, %v3738
      %v3771 = vadd.f32 %v3705, %v3739
      %v3772 = vadd.f32 %v3706, %v3740
      %v3773 = vadd.f32 %v3707, %v3741
      %v3774 = vadd.f32 %v3708, %v3742
      %v3775 = vadd.f32 %v3709, %v3743
      %v3776 = vadd.f32 %v3710, %v3744
      %v3777 = vadd.f32 %v3711, %v3745
      %v3778 = vadd.f32 %v3712, %v3746
      %v3779 = vadd.f32 %v3713, %v3747
      %v3780 = vadd.f32 %v3714, %v3748
      %v3781 = vadd.f32 %v3715, %v3749
      %v3782 = vadd.f32 %v3716, %v3750
      %v3783 = vadd.f32 %v3717, %v3751
      %3784 = vst [vmem:[#allocation2] sm:$0xff] %v3752
      %3785 = vst [vmem:[#allocation2 + $0x8] sm:$0xff] %v3753
      %3786 = vst [vmem:[#allocation2 + $0x10] sm:$0xff] %v3754
      %3787 = vst [vmem:[#allocation2 + $0x18] sm:$0xff] %v3755
      %3788 = vst [vmem:[#allocation2 + $0x20] sm:$0xff] %v3756
      %3789 = vst [vmem:[#allocation2 + $0x28] sm:$0xff] %v3757
      %3790 = vst [vmem:[#allocation2 + $0x30] sm:$0xff] %v3758
      %3791 = vst [vmem:[#allocation2 + $0x38] sm:$0xff] %v3759
      %3792 = vst [vmem:[#allocation2 + $0x40] sm:$0xff] %v3760
      %3793 = vst [vmem:[#allocation2 + $0x48] sm:$0xff] %v3761
      %3794 = vst [vmem:[#allocation2 + $0x50] sm:$0xff] %v3762
      %3795 = vst [vmem:[#allocation2 + $0x58] sm:$0xff] %v3763
      %3796 = vst [vmem:[#allocation2 + $0x60] sm:$0xff] %v3764
      %3797 = vst [vmem:[#allocation2 + $0x68] sm:$0xff] %v3765
      %3798 = vst [vmem:[#allocation2 + $0x70] sm:$0xff] %v3766
      %3799 = vst [vmem:[#allocation2 + $0x78] sm:$0xff] %v3767
      %3800 = vst [vmem:[#allocation2 + $0x80] sm:$0xff] %v3768
      %3801 = vst [vmem:[#allocation2 + $0x88] sm:$0xff] %v3769
      %3802 = vst [vmem:[#allocation2 + $0x90] sm:$0xff] %v3770
      %3803 = vst [vmem:[#allocation2 + $0x98] sm:$0xff] %v3771
      %3804 = vst [vmem:[#allocation2 + $0xa0] sm:$0xff] %v3772
      %3805 = vst [vmem:[#allocation2 + $0xa8] sm:$0xff] %v3773
      %3806 = vst [vmem:[#allocation2 + $0xb0] sm:$0xff] %v3774
      %3807 = vst [vmem:[#allocation2 + $0xb8] sm:$0xff] %v3775
      %3808 = vst [vmem:[#allocation2 + $0xc0] sm:$0xff] %v3776
      %3809 = vst [vmem:[#allocation2 + $0xc8] sm:$0xff] %v3777
      %3810 = vst [vmem:[#allocation2 + $0xd0] sm:$0xff] %v3778
      %3811 = vst [vmem:[#allocation2 + $0xd8] sm:$0xff] %v3779
      %3812 = vst [vmem:[#allocation2 + $0xe0] sm:$0xff] %v3780
      %3813 = vst [vmem:[#allocation2 + $0xe8] sm:$0xff] %v3781
      %3814 = vst [vmem:[#allocation2 + $0xf0] sm:$0xff] %v3782
      %3815 = vst [vmem:[#allocation2 + $0xf8] sm:$0xff] %v3783
      %p3816 = scmp.eq.s32.totalorder %s24, 25
      // Predicated region
      $region53: #{model_forward.1} parent=43 // pred_check
        %p3817 = pneg %p3816
      $region54: #{model_forward.1} parent=43 // pred_check_branch
        %3819 = sbr.rel (%p3817) target = $region56
      $region55: #{model_forward.1} parent=43 // pred_region
        %v3820 = vld [vmem:[%s1] sm:$0xff]
        %v3821 = vld [vmem:[%s1 + $0x8] sm:$0xff]
        %v3822 = vld [vmem:[%s1 + $0x10] sm:$0xff]
        %v3823 = vld [vmem:[%s1 + $0x18] sm:$0xff]
        %v3824 = vld [vmem:[%s1 + $0x20] sm:$0xff]
        %v3825 = vld [vmem:[%s1 + $0x28] sm:$0xff]
        %v3826 = vld [vmem:[%s1 + $0x30] sm:$0xff]
        %v3827 = vld [vmem:[%s1 + $0x38] sm:$0xff]
        %v3828 = vld [vmem:[%s1 + $0x40] sm:$0xff]
        %v3829 = vld [vmem:[%s1 + $0x48] sm:$0xff]
        %v3830 = vld [vmem:[%s1 + $0x50] sm:$0xff]
        %v3831 = vld [vmem:[%s1 + $0x58] sm:$0xff]
        %v3832 = vld [vmem:[%s1 + $0x60] sm:$0xff]
        %v3833 = vld [vmem:[%s1 + $0x68] sm:$0xff]
        %v3834 = vld [vmem:[%s1 + $0x70] sm:$0xff]
        %v3835 = vld [vmem:[%s1 + $0x78] sm:$0xff]
        %v3836 = vld [vmem:[%s1 + $0x80] sm:$0xff]
        %v3837 = vld [vmem:[%s1 + $0x88] sm:$0xff]
        %v3838 = vld [vmem:[%s1 + $0x90] sm:$0xff]
        %v3839 = vld [vmem:[%s1 + $0x98] sm:$0xff]
        %v3840 = vld [vmem:[%s1 + $0xa0] sm:$0xff]
        %v3841 = vld [vmem:[%s1 + $0xa8] sm:$0xff]
        %v3842 = vld [vmem:[%s1 + $0xb0] sm:$0xff]
        %v3843 = vld [vmem:[%s1 + $0xb8] sm:$0xff]
        %v3844 = vld [vmem:[%s1 + $0xc0] sm:$0xff]
        %v3845 = vld [vmem:[%s1 + $0xc8] sm:$0xff]
        %v3846 = vld [vmem:[%s1 + $0xd0] sm:$0xff]
        %v3847 = vld [vmem:[%s1 + $0xd8] sm:$0xff]
        %v3848 = vld [vmem:[%s1 + $0xe0] sm:$0xff]
        %v3849 = vld [vmem:[%s1 + $0xe8] sm:$0xff]
        %v3850 = vld [vmem:[%s1 + $0xf0] sm:$0xff]
        %v3851 = vld [vmem:[%s1 + $0xf8] sm:$0xff]
        %v3852 = vld [vmem:[#allocation2] sm:$0xff]
        %v3853 = vld [vmem:[#allocation2 + $0x8] sm:$0xff]
        %v3854 = vld [vmem:[#allocation2 + $0x10] sm:$0xff]
        %v3855 = vld [vmem:[#allocation2 + $0x18] sm:$0xff]
        %v3856 = vld [vmem:[#allocation2 + $0x20] sm:$0xff]
        %v3857 = vld [vmem:[#allocation2 + $0x28] sm:$0xff]
        %v3858 = vld [vmem:[#allocation2 + $0x30] sm:$0xff]
        %v3859 = vld [vmem:[#allocation2 + $0x38] sm:$0xff]
        %v3860 = vld [vmem:[#allocation2 + $0x40] sm:$0xff]
        %v3861 = vld [vmem:[#allocation2 + $0x48] sm:$0xff]
        %v3862 = vld [vmem:[#allocation2 + $0x50] sm:$0xff]
        %v3863 = vld [vmem:[#allocation2 + $0x58] sm:$0xff]
        %v3864 = vld [vmem:[#allocation2 + $0x60] sm:$0xff]
        %v3865 = vld [vmem:[#allocation2 + $0x68] sm:$0xff]
        %v3866 = vld [vmem:[#allocation2 + $0x70] sm:$0xff]
        %v3867 = vld [vmem:[#allocation2 + $0x78] sm:$0xff]
        %v3868 = vld [vmem:[#allocation2 + $0x80] sm:$0xff]
        %v3869 = vld [vmem:[#allocation2 + $0x88] sm:$0xff]
        %v3870 = vld [vmem:[#allocation2 + $0x90] sm:$0xff]
        %v3871 = vld [vmem:[#allocation2 + $0x98] sm:$0xff]
        %v3872 = vld [vmem:[#allocation2 + $0xa0] sm:$0xff]
        %v3873 = vld [vmem:[#allocation2 + $0xa8] sm:$0xff]
        %v3874 = vld [vmem:[#allocation2 + $0xb0] sm:$0xff]
        %v3875 = vld [vmem:[#allocation2 + $0xb8] sm:$0xff]
        %v3876 = vld [vmem:[#allocation2 + $0xc0] sm:$0xff]
        %v3877 = vld [vmem:[#allocation2 + $0xc8] sm:$0xff]
        %v3878 = vld [vmem:[#allocation2 + $0xd0] sm:$0xff]
        %v3879 = vld [vmem:[#allocation2 + $0xd8] sm:$0xff]
        %v3880 = vld [vmem:[#allocation2 + $0xe0] sm:$0xff]
        %v3881 = vld [vmem:[#allocation2 + $0xe8] sm:$0xff]
        %v3882 = vld [vmem:[#allocation2 + $0xf0] sm:$0xff]
        %v3883 = vld [vmem:[#allocation2 + $0xf8] sm:$0xff]
        %v3884 = vsub.f32 %v3820, %v3852
        %v3885 = vsub.f32 %v3821, %v3853
        %v3886 = vsub.f32 %v3822, %v3854
        %v3887 = vsub.f32 %v3823, %v3855
        %v3888 = vsub.f32 %v3824, %v3856
        %v3889 = vsub.f32 %v3825, %v3857
        %v3890 = vsub.f32 %v3826, %v3858
        %v3891 = vsub.f32 %v3827, %v3859
        %v3892 = vsub.f32 %v3828, %v3860
        %v3893 = vsub.f32 %v3829, %v3861
        %v3894 = vsub.f32 %v3830, %v3862
        %v3895 = vsub.f32 %v3831, %v3863
        %v3896 = vsub.f32 %v3832, %v3864
        %v3897 = vsub.f32 %v3833, %v3865
        %v3898 = vsub.f32 %v3834, %v3866
        %v3899 = vsub.f32 %v3835, %v3867
        %v3900 = vsub.f32 %v3836, %v3868
        %v3901 = vsub.f32 %v3837, %v3869
        %v3902 = vsub.f32 %v3838, %v3870
        %v3903 = vsub.f32 %v3839, %v3871
        %v3904 = vsub.f32 %v3840, %v3872
        %v3905 = vsub.f32 %v3841, %v3873
        %v3906 = vsub.f32 %v3842, %v3874
        %v3907 = vsub.f32 %v3843, %v3875
        %v3908 = vsub.f32 %v3844, %v3876
        %v3909 = vsub.f32 %v3845, %v3877
        %v3910 = vsub.f32 %v3846, %v3878
        %v3911 = vsub.f32 %v3847, %v3879
        %v3912 = vsub.f32 %v3848, %v3880
        %v3913 = vsub.f32 %v3849, %v3881
        %v3914 = vsub.f32 %v3850, %v3882
        %v3915 = vsub.f32 %v3851, %v3883
        %3916 = vst [vmem:[%s7] sm:$0xff] %v3884
        %3917 = vst [vmem:[%s7 + $0x8] sm:$0xff] %v3885
        %3918 = vst [vmem:[%s7 + $0x10] sm:$0xff] %v3886
        %3919 = vst [vmem:[%s7 + $0x18] sm:$0xff] %v3887
        %3920 = vst [vmem:[%s7 + $0x20] sm:$0xff] %v3888
        %3921 = vst [vmem:[%s7 + $0x28] sm:$0xff] %v3889
        %3922 = vst [vmem:[%s7 + $0x30] sm:$0xff] %v3890
        %3923 = vst [vmem:[%s7 + $0x38] sm:$0xff] %v3891
        %3924 = vst [vmem:[%s7 + $0x40] sm:$0xff] %v3892
        %3925 = vst [vmem:[%s7 + $0x48] sm:$0xff] %v3893
        %3926 = vst [vmem:[%s7 + $0x50] sm:$0xff] %v3894
        %3927 = vst [vmem:[%s7 + $0x58] sm:$0xff] %v3895
        %3928 = vst [vmem:[%s7 + $0x60] sm:$0xff] %v3896
        %3929 = vst [vmem:[%s7 + $0x68] sm:$0xff] %v3897
        %3930 = vst [vmem:[%s7 + $0x70] sm:$0xff] %v3898
        %3931 = vst [vmem:[%s7 + $0x78] sm:$0xff] %v3899
        %3932 = vst [vmem:[%s7 + $0x80] sm:$0xff] %v3900
        %3933 = vst [vmem:[%s7 + $0x88] sm:$0xff] %v3901
        %3934 = vst [vmem:[%s7 + $0x90] sm:$0xff] %v3902
        %3935 = vst [vmem:[%s7 + $0x98] sm:$0xff] %v3903
        %3936 = vst [vmem:[%s7 + $0xa0] sm:$0xff] %v3904
        %3937 = vst [vmem:[%s7 + $0xa8] sm:$0xff] %v3905
        %3938 = vst [vmem:[%s7 + $0xb0] sm:$0xff] %v3906
        %3939 = vst [vmem:[%s7 + $0xb8] sm:$0xff] %v3907
        %3940 = vst [vmem:[%s7 + $0xc0] sm:$0xff] %v3908
        %3941 = vst [vmem:[%s7 + $0xc8] sm:$0xff] %v3909
        %3942 = vst [vmem:[%s7 + $0xd0] sm:$0xff] %v3910
        %3943 = vst [vmem:[%s7 + $0xd8] sm:$0xff] %v3911
        %3944 = vst [vmem:[%s7 + $0xe0] sm:$0xff] %v3912
        %3945 = vst [vmem:[%s7 + $0xe8] sm:$0xff] %v3913
        %3946 = vst [vmem:[%s7 + $0xf0] sm:$0xff] %v3914
        %3947 = vst [vmem:[%s7 + $0xf8] sm:$0xff] %v3915
      $region56: #{model_forward.1} parent=43 // pred_fallthru
        _
      // Predicated region
      $region57: #{model_forward.1} parent=43 // pred_check
        %p3948 = pneg %p183
      $region58: #{model_forward.1} parent=43 // pred_check_branch
        %3950 = sbr.rel (%p3948) target = $region60
      $region59: #{model_forward.1} parent=43 // pred_region
        _
      $region60: #{model_forward.1} parent=43 // pred_fallthru
        _
      // Predicated region
      $region61: #{model_forward.1} parent=43 // pred_check
        %p3951 = pneg %p183
      $region62: #{model_forward.1} parent=43 // pred_check_branch
        %3953 = sbr.rel (%p3951) target = $region64
      $region63: #{model_forward.1} parent=43 // pred_region
        _
      $region64: #{model_forward.1} parent=43 // pred_fallthru
        _
    $region44: #{model_forward.1} parent=5 // pred_fallthru
      _
    %p3954 = scmp.le.s32.totalorder 2, %s19
    // Predicated region
    $region65: #{model_forward.1} parent=5 // pred_check
      %p3955 = pneg %p3954
    $region66: #{model_forward.1} parent=5 // pred_check_branch
      %3957 = sbr.rel (%p3955) target = $region68
    $region67: #{model_forward.1} parent=5 // pred_region
      %s3958 = ssub.s32 %s19, 2
    $region68: #{model_forward.1} parent=5 // pred_fallthru
      _
  $region6: #{model_forward.1} parent=0 // loop_footer
    %s23 = sadd.s32 1, %s19
  $region7: #{model_forward.1} parent=0 // loop_footer_branch
    %18 = sbr.rel target = $region3
  $region8: #{model_forward.1} parent=0 // loop_exit
    _

</llo_original>
